<compile_context>
chip_gen: v5e
topology: v5e:2x2
jax: 0.10.0
libtpu: 0.0.40
codegen_flags: <defaults>
</compile_context>

<pallas_src>
import functools

import jax
import jax.numpy as jnp
from jax.experimental import pallas as pl
from jax.experimental.pallas import tpu as pltpu

LANE = 128


# ----------------------------- Pallas kernel -------------------------------

def phi_fc_hybrid_kernel(
    x_ref,        # (T, B, M)        f32  time-major mel-dB features
    w_ih_ref,     # (M, 3*128)       bf16 GRU input weights, gate blocks r|z|n at 0/128/256
    w_hh_ref,     # (128, 3*128)     bf16 GRU hidden weights (rows H: are zero)
    w_combo_ref,  # (128, 128)       bf16 [w_proj | w_proj @ w_qkv] (rows H: are zero)
    tail_ref,     # (H, 2*128)       bf16 [w_o @0 | w_fc2 @128]
    b_ref,        # (1, 8*128)       f32  bias/row slab (128-lane aligned blocks)
    out_ref,      # (B, C)           f32  logits
    gx_ref,       # VMEM scratch (T, B, 3*128) f32
    g_ref,        # VMEM scratch (B, T, 128)   f32
    *, hidden, seq_len, batch, n_mels, num_classes,
):
    f32, bf16 = jnp.float32, jnp.bfloat16
    H, T, B, M, C = hidden, seq_len, batch, n_mels, num_classes
    P = LANE

    x = x_ref[...]                                               # (T, B, M) f32

    # ---- per-sample normalization over (time, mel); torch.std is unbiased,
    #      eps is added to std (matching the PyTorch module) ----
    n_elems = T * M
    mean = jnp.sum(jnp.sum(x, axis=2, keepdims=True), axis=0,
                   keepdims=True) * (1.0 / n_elems)
    diff = x - mean
    var = jnp.sum(jnp.sum(diff * diff, axis=2, keepdims=True), axis=0,
                  keepdims=True) * (1.0 / (n_elems - 1))
    inv_std = pl.reciprocal(jnp.sqrt(var) + 1e-5, approx=True)
    xn = diff * inv_std

    # ---- GRU input-gate pre-activations for all T*B rows in one bf16 matmul.
    #      b_ih (all gates) and b_hh (r,z gates) are pre-folded into b_gx. ----
    b_gx = b_ref[:, 0:3 * P]                                     # (1, 384) aligned
    gx_all = jnp.dot(xn.reshape(T * B, M).astype(bf16), w_ih_ref[...],
                     preferred_element_type=f32) + b_gx          # (T*B, 384) f32
    gx_ref[...] = gx_all.reshape(T, B, 3 * P)

    # hoisted loop invariants
    w_hh = w_hh_ref[...]                                         # (128, 384) bf16
    b_hn = jnp.broadcast_to(b_ref[:, 3 * P:4 * P], (B, P))       # (B, 128) f32

    # ---- GRU recurrence (sequential over T, batched over B).
    #      Gate blocks are 128-lane aligned: r = [0:128), z = [128:256),
    #      n = [256:384). h is kept 128-lane padded; padded lanes stay 0.
    # TODO(synk): w_hh could be pinned in the MXU with matmul_push_rhs /
    #             matmul_acc_lhs / matmul_pop; left to Mosaic (loop-invariant
    #             RHS) for lowering robustness.
    h = jnp.zeros((B, P), f32)
    for t in range(T):                                           # static unroll, T small
        gx = gx_ref[t]                                           # (B, 384) leading-axis read
        gh = jnp.dot(h.astype(bf16), w_hh, preferred_element_type=f32)
        rz = jax.nn.sigmoid(gx[:, 0:2 * P] + gh[:, 0:2 * P])     # fused r|z EUP call
        r = rz[:, 0:P]
        z = rz[:, P:2 * P]
        cand = jnp.tanh(gx[:, 2 * P:3 * P] + r * (gh[:, 2 * P:3 * P] + b_hn))
        h = (1.0 - z) * cand + z * h
        g_ref[:, t, :] = h                                       # store off the critical chain

    g_flat = g_ref[...].reshape(B * T, P)                        # batch-major rows, lanes H: are 0

    # ---- projection folded into QKV: one 128-lane matmul -> [p | q | k | v] ----
    pq = jnp.dot(g_flat.astype(bf16), w_combo_ref[...],
                 preferred_element_type=f32) + b_ref[:, 4 * P:5 * P]
    p = pq[:, 0:H]                                               # residual / projection output
    q = pq[:, H:2 * H].reshape(B, T, H)
    k = pq[:, 2 * H:3 * H].reshape(B, T, H)
    v = pq[:, 3 * H:4 * H].reshape(B, T, H)

    # ---- keyword self-attention (num_heads=1, head_dim == H), softmax in f32 ----
    scale = 1.0 / (float(H) ** 0.5)
    s = jnp.einsum('btd,bsd->bts', q, k, preferred_element_type=f32) * scale
    s = s - jnp.max(s, axis=-1, keepdims=True)
    e = jnp.exp(s)
    p_attn = e * pl.reciprocal(jnp.sum(e, axis=-1, keepdims=True), approx=True)
    attn = jnp.einsum('bts,bsd->btd', p_attn, v, preferred_element_type=f32)   # (B, T, H)

    w_o = tail_ref[:, 0:H]                                       # (H, H) bf16
    o = jnp.dot(attn.reshape(B * T, H).astype(bf16), w_o,
                preferred_element_type=f32) + b_ref[:, 5 * P:5 * P + H]
    hx = (p + o).reshape(B, T, H)                                # residual add

    # consonant_enhancer: identity (see TODO at top)

    # ---- FocusedAttention pooling: VPU multiply + lane reduce, softmax over time.
    #      The pooling bias is softmax-shift-invariant -> dropped. ----
    w_pool = b_ref[:, 7 * P:7 * P + H].reshape(1, 1, H)
    scores = jnp.sum(hx * w_pool, axis=-1, keepdims=True)        # (B, T, 1)
    scores = scores - jnp.max(scores, axis=1, keepdims=True)
    ew = jnp.exp(scores)
    wts = ew * pl.reciprocal(jnp.sum(ew, axis=1, keepdims=True), approx=True)
    pooled = jnp.sum(hx * wts, axis=1)                           # (B, H)

    # dropout(0.3) inactive at inference
    w_fc2 = tail_ref[:, P:P + C]                                 # (H, C) bf16
    logits = jnp.dot(pooled.astype(bf16), w_fc2,
                     preferred_element_type=f32) + b_ref[:, 6 * P:6 * P + C]
    out_ref[...] = logits.astype(out_ref.dtype)


# ----------------------------- wrapper --------------------------------------

def improved_phi_fc_hybrid(x, params):
    """x: (B, n_mels, T) mel-dB features in PyTorch (N, C, L) layout."""
    B, M, T = x.shape
    H = params["w_hh"].shape[0]
    C = params["w_fc2"].shape[1]
    P = LANE
    bf16 = jnp.bfloat16
    assert 4 * H <= P and 3 * H <= 3 * P and C <= P

    def pad_gate_cols(w):
        # (rows, 3H) -> (rows, 3*128) with gate g at lane offset g*128
        out = jnp.zeros((w.shape[0], 3 * P), jnp.float32)
        for g in range(3):
            out = out.at[:, g * P:g * P + H].set(w[:, g * H:(g + 1) * H])
        return out

    def pad_lanes(v, width=P):
        out = jnp.zeros((v.shape[0], width), jnp.float32)
        return out.at[:, :v.shape[1]].set(v)

    # GRU weights: gate blocks r|z|n padded to 128-lane boundaries; hidden
    # weights also row-padded to 128 so h never needs lane slicing in-loop.
    w_ih_pad = pad_gate_cols(params["w_ih"]).astype(bf16)                       # (M, 384)
    w_hh_pad = jnp.zeros((P, 3 * P), jnp.float32)
    w_hh_pad = w_hh_pad.at[:H].set(pad_gate_cols(params["w_hh"])).astype(bf16)  # (128, 384)

    # fold b_ih (all gates) + b_hh (r, z gates) once; b_hn stays separate.
    b_gx = pad_gate_cols(jnp.concatenate(
        [params["b_ih"][:, :2 * H] + params["b_hh"][:, :2 * H],
         params["b_ih"][:, 2 * H:]], axis=1))                                   # (1, 384)
    b_hn = pad_lanes(params["b_hh"][:, 2 * H:])                                 # (1, 128)

    # projection folded into QKV: [p | qkv] = g @ [w_proj | w_proj @ w_qkv] + b
    w_combo = jnp.concatenate(
        [params["w_proj"], params["w_proj"] @ params["w_qkv"]], axis=1)         # (H, 4H)
    w_combo_pad = jnp.zeros((P, P), jnp.float32)
    w_combo_pad = w_combo_pad.at[:H, :4 * H].set(w_combo).astype(bf16)          # (128, 128)
    b_combo = pad_lanes(jnp.concatenate(
        [params["b_proj"],
         params["b_proj"] @ params["w_qkv"] + params["b_qkv"]], axis=1))        # (1, 128)

    tail = jnp.zeros((H, 2 * P), jnp.float32)
    tail = tail.at[:, :H].set(params["w_o"])
    tail = tail.at[:, P:P + C].set(params["w_fc2"]).astype(bf16)                # (H, 256)

    # bias/row slab, 128-lane aligned blocks:
    #   [b_gx_r | b_gx_z | b_gx_n | b_hn | b_combo | b_o | b_fc2 | w_pool]
    b_slab = jnp.concatenate(
        [b_gx, b_hn, b_combo, pad_lanes(params["b_o"]),
         pad_lanes(params["b_fc2"]), pad_lanes(params["w_pool"])], axis=1)      # (1, 1024)

    # time-major, lane-dense input: (T, B, M)
    x_tm = jnp.transpose(x, (2, 0, 1)).astype(jnp.float32)

    kernel = functools.partial(
        phi_fc_hybrid_kernel, hidden=H, seq_len=T, batch=B,
        n_mels=M, num_classes=C)

    vmem = lambda: pl.BlockSpec(memory_space=pltpu.MemorySpace.VMEM)
    out = pl.pallas_call(
        kernel,
        out_shape=jax.ShapeDtypeStruct((B, C), jnp.float32),
        in_specs=[vmem() for _ in range(6)],
        out_specs=vmem(),
        scratch_shapes=[pltpu.VMEM((T, B, 3 * P), jnp.float32),   # gate pre-activations
                        pltpu.VMEM((B, T, P), jnp.float32)],      # GRU outputs (batch-major)
    )(x_tm, w_ih_pad, w_hh_pad, w_combo_pad, tail, b_slab)
    return out


# ------------------------ pure-JAX reference (sanity) ------------------------

def reference_forward(x, params):
    B, n_mels, T = x.shape
    H = params["w_hh"].shape[0]
    xt = jnp.transpose(x, (0, 2, 1)).astype(jnp.float32)          # (B, T, M)
    n = T * n_mels
    mean = jnp.mean(xt, axis=(1, 2), keepdims=True)
    var = jnp.sum((xt - mean) ** 2, axis=(1, 2), keepdims=True) / (n - 1)
    xt = (xt - mean) / (jnp.sqrt(var) + 1e-5)

    gx_all = xt @ params["w_ih"] + params["b_ih"]                 # (B, T, 3H)
    h = jnp.zeros((B, H), jnp.float32)
    outs = []
    for t in range(T):
        gx = gx_all[:, t, :]
        gh = h @ params["w_hh"] + params["b_hh"]
        r = jax.nn.sigmoid(gx[:, :H] + gh[:, :H])
        z = jax.nn.sigmoid(gx[:, H:2 * H] + gh[:, H:2 * H])
        cand = jnp.tanh(gx[:, 2 * H:] + r * gh[:, 2 * H:])
        h = (1.0 - z) * cand + z * h
        outs.append(h)
    g = jnp.stack(outs, axis=1)                                   # (B, T, H)

    p = g @ params["w_proj"] + params["b_proj"]
    q = p @ params["w_qkv"][:, :H] + params["b_qkv"][:, :H]
    k = p @ params["w_qkv"][:, H:2 * H] + params["b_qkv"][:, H:2 * H]
    v = p @ params["w_qkv"][:, 2 * H:] + params["b_qkv"][:, 2 * H:]
    s = jnp.einsum('btd,bsd->bts', q, k) / jnp.sqrt(jnp.float32(H))
    a = jax.nn.softmax(s, axis=-1)
    attn = jnp.einsum('bts,bsd->btd', a, v)
    hx = p + attn @ params["w_o"] + params["b_o"]

    scores = jnp.sum(hx * params["w_pool"][None, :, :], axis=-1, keepdims=True) \
        + params["b_pool"]
    wts = jax.nn.softmax(scores, axis=1)
    pooled = jnp.sum(hx * wts, axis=1)
    return pooled @ params["w_fc2"] + params["b_fc2"]


# ----------------------------- param construction ----------------------------

def make_params(key, n_mels=64, hidden=32, num_classes=10):
    ks = jax.random.split(key, 7)

    def lin(k, fan_in, fan_out):
        scale = 1.0 / jnp.sqrt(jnp.float32(fan_in))
        kw, kb = jax.random.split(k)
        w = jax.random.uniform(kw, (fan_in, fan_out), jnp.float32, -scale, scale)
        b = jax.random.uniform(kb, (1, fan_out), jnp.float32, -scale, scale)
        return w, b

    p = {}
    # GRU weights stored transposed (fan_in, 3H), gate order r, z, n (PyTorch).
    # NB: real nn.Linear / nn.MultiheadAttention weights are (out, in): transpose
    #     at pack time when loading checkpoints.
    p["w_ih"], p["b_ih"] = lin(ks[0], n_mels, 3 * hidden)
    p["w_hh"], p["b_hh"] = lin(ks[1], hidden, 3 * hidden)
    p["w_proj"], p["b_proj"] = lin(ks[2], hidden, hidden)
    # MultiheadAttention(num_heads=1): fused in_proj (q|k|v) + out_proj.
    p["w_qkv"], p["b_qkv"] = lin(ks[3], hidden, 3 * hidden)
    p["w_o"], p["b_o"] = lin(ks[4], hidden, hidden)
    wp, bp = lin(ks[5], hidden, 1)
    p["w_pool"] = wp.T                      # (1, hidden) row for VPU mul + lane reduce
    p["b_pool"] = bp                        # (1, 1); softmax-shift-invariant
    p["w_fc2"], p["b_fc2"] = lin(ks[6], hidden, num_classes)
    return p


# ----------------------------- main ------------------------------------------

if __name__ == "__main__":
    B, n_mels, T = 2, 64, 16
    hidden, num_classes = 32, 10

    key = jax.random.PRNGKey(0)
    kx, kp = jax.random.split(key)
    x = jax.random.normal(kx, (B, n_mels, T), jnp.float32)   # (N, C, L) mel-dB features
    params = make_params(kp, n_mels=n_mels, hidden=hidden, num_classes=num_classes)

    out = jax.block_until_ready(improved_phi_fc_hybrid(x, params))

    ref = reference_forward(x, params)
    assert out.shape == (B, num_classes)
    # bf16 matmul operands + approx reciprocals -> relaxed tolerance vs f32 reference
    assert jnp.allclose(out, ref, atol=4e-2, rtol=4e-2), "mismatch vs reference"

    print("KERNEL_OK")
</pallas_src>

<mosaic_0001>
module attributes {stable_mosaic.version = 11 : i64} {
  func.func @phi_fc_hybrid_kernel(%arg0: memref<16x2x64xf32, #tpu.memory_space<vmem>>, %arg1: memref<64x384xbf16, #tpu.memory_space<vmem>>, %arg2: memref<128x384xbf16, #tpu.memory_space<vmem>>, %arg3: memref<128x128xbf16, #tpu.memory_space<vmem>>, %arg4: memref<32x256xbf16, #tpu.memory_space<vmem>>, %arg5: memref<1x1024xf32, #tpu.memory_space<vmem>>, %arg6: memref<2x10xf32, #tpu.memory_space<vmem>>, %arg7: memref<16x2x384xf32, #tpu.memory_space<vmem>>, %arg8: memref<2x16x128xf32, #tpu.memory_space<vmem>>) attributes {dimension_semantics = [], scalar_prefetch = 0 : i64, scratch_operands = 2 : i64, tpu.core_type = #tpu.core_type<tc>} {
    %c0 = arith.constant 0 : index
    %c0_0 = arith.constant 0 : index
    %c0_1 = arith.constant 0 : index
    %0 = vector.load %arg0[%c0, %c0_0, %c0_1] : memref<16x2x64xf32, #tpu.memory_space<vmem>>, vector<16x2x64xf32>
    %cst = arith.constant dense<0.000000e+00> : vector<16x2xf32>
    %1 = vector.multi_reduction <add>, %0, %cst [2] : vector<16x2x64xf32> to vector<16x2xf32>
    %2 = vector.shape_cast %1 : vector<16x2xf32> to vector<16x2x1xf32>
    %cst_2 = arith.constant dense<0.000000e+00> : vector<2x1xf32>
    %3 = vector.multi_reduction <add>, %2, %cst_2 [0] : vector<16x2x1xf32> to vector<2x1xf32>
    %4 = vector.shape_cast %3 : vector<2x1xf32> to vector<1x2x1xf32>
    %cst_3 = arith.constant 9.765625E-4 : f32
    %5 = vector.broadcast %cst_3 : f32 to vector<1x2x1xf32>
    %6 = arith.mulf %4, %5 : vector<1x2x1xf32>
    %7 = vector.broadcast %6 : vector<1x2x1xf32> to vector<16x2x64xf32>
    %8 = arith.subf %0, %7 : vector<16x2x64xf32>
    %9 = arith.mulf %8, %8 : vector<16x2x64xf32>
    %cst_4 = arith.constant dense<0.000000e+00> : vector<16x2xf32>
    %10 = vector.multi_reduction <add>, %9, %cst_4 [2] : vector<16x2x64xf32> to vector<16x2xf32>
    %11 = vector.shape_cast %10 : vector<16x2xf32> to vector<16x2x1xf32>
    %cst_5 = arith.constant dense<0.000000e+00> : vector<2x1xf32>
    %12 = vector.multi_reduction <add>, %11, %cst_5 [0] : vector<16x2x1xf32> to vector<2x1xf32>
    %13 = vector.shape_cast %12 : vector<2x1xf32> to vector<1x2x1xf32>
    %cst_6 = arith.constant 9.77517105E-4 : f32
    %14 = vector.broadcast %cst_6 : f32 to vector<1x2x1xf32>
    %15 = arith.mulf %13, %14 : vector<1x2x1xf32>
    %16 = math.sqrt %15 : vector<1x2x1xf32>
    %cst_7 = arith.constant 9.99999974E-6 : f32
    %17 = vector.broadcast %cst_7 : f32 to vector<1x2x1xf32>
    %18 = arith.addf %16, %17 : vector<1x2x1xf32>
    %19 = tpu.reciprocal %18 {approx = true} : vector<1x2x1xf32> -> vector<1x2x1xf32>
    %20 = vector.broadcast %19 : vector<1x2x1xf32> to vector<16x2x64xf32>
    %21 = arith.mulf %8, %20 : vector<16x2x64xf32>
    %c0_8 = arith.constant 0 : index
    %c0_9 = arith.constant 0 : index
    %22 = vector.load %arg5[%c0_8, %c0_9] : memref<1x1024xf32, #tpu.memory_space<vmem>>, vector<1x384xf32>
    %23 = vector.shape_cast %21 : vector<16x2x64xf32> to vector<32x64xf32>
    %24 = arith.truncf %23 : vector<32x64xf32> to vector<32x64xbf16>
    %c0_10 = arith.constant 0 : index
    %c0_11 = arith.constant 0 : index
    %25 = vector.load %arg1[%c0_10, %c0_11] : memref<64x384xbf16, #tpu.memory_space<vmem>>, vector<64x384xbf16>
    %cst_12 = arith.constant dense<0.000000e+00> : vector<32x384xf32>
    %26 = tpu.matmul %24, %25, %cst_12 {dimension_numbers = #tpu.dot_dimension_numbers<[1], [0], [0], [1], [0, 0, 1, 1], [], []>} : vector<32x64xbf16>, vector<64x384xbf16>, vector<32x384xf32> -> vector<32x384xf32>
    %27 = vector.broadcast %22 : vector<1x384xf32> to vector<32x384xf32>
    %28 = arith.addf %26, %27 : vector<32x384xf32>
    %29 = vector.shape_cast %28 : vector<32x384xf32> to vector<16x2x384xf32>
    %c0_13 = arith.constant 0 : index
    %c0_14 = arith.constant 0 : index
    %c0_15 = arith.constant 0 : index
    %30 = vector.load %arg7[%c0_13, %c0_14, %c0_15] : memref<16x2x384xf32, #tpu.memory_space<vmem>>, vector<16x2x384xf32>
    tpu.vector_store %arg7[%c0_13, %c0_14, %c0_15], %29 {strides = array<i32>} : memref<16x2x384xf32, #tpu.memory_space<vmem>>, vector<16x2x384xf32>,
    %c0_16 = arith.constant 0 : index
    %c0_17 = arith.constant 0 : index
    %31 = vector.load %arg2[%c0_16, %c0_17] : memref<128x384xbf16, #tpu.memory_space<vmem>>, vector<128x384xbf16>
    %c0_18 = arith.constant 0 : index
    %c384 = arith.constant 384 : index
    %32 = vector.load %arg5[%c0_18, %c384] : memref<1x1024xf32, #tpu.memory_space<vmem>>, vector<1x128xf32>
    %33 = vector.shape_cast %32 : vector<1x128xf32> to vector<1x128xf32>
    %34 = vector.broadcast %33 : vector<1x128xf32> to vector<2x128xf32>
    %cst_19 = arith.constant 0.000000e+00 : f32
    %35 = vector.broadcast %cst_19 : f32 to vector<2x128xf32>
    %c0_20 = arith.constant 0 : index
    %c0_21 = arith.constant 0 : index
    %c0_22 = arith.constant 0 : index
    %36 = vector.load %arg7[%c0_20, %c0_21, %c0_22] : memref<16x2x384xf32, #tpu.memory_space<vmem>>, vector<1x2x384xf32>
    %37 = vector.shape_cast %36 : vector<1x2x384xf32> to vector<2x384xf32>
    %38 = arith.truncf %35 : vector<2x128xf32> to vector<2x128xbf16>
    %cst_23 = arith.constant dense<0.000000e+00> : vector<2x384xf32>
    %39 = tpu.matmul %38, %31, %cst_23 {dimension_numbers = #tpu.dot_dimension_numbers<[1], [0], [0], [1], [0, 0, 1, 1], [], []>} : vector<2x128xbf16>, vector<128x384xbf16>, vector<2x384xf32> -> vector<2x384xf32>
    %40 = vector.extract_strided_slice %37 {offsets = [0, 0], sizes = [2, 256], strides = [1, 1]} : vector<2x384xf32> to vector<2x256xf32>
    %41 = vector.extract_strided_slice %39 {offsets = [0, 0], sizes = [2, 256], strides = [1, 1]} : vector<2x384xf32> to vector<2x256xf32>
    %42 = arith.addf %40, %41 : vector<2x256xf32>
    %43 = arith.negf %42 : vector<2x256xf32>
    %44 = math.exp %43 : vector<2x256xf32>
    %cst_24 = arith.constant 1.000000e+00 : f32
    %45 = vector.broadcast %cst_24 : f32 to vector<2x256xf32>
    %46 = arith.addf %45, %44 : vector<2x256xf32>
    %47 = arith.divf %45, %46 : vector<2x256xf32>
    %48 = vector.extract_strided_slice %47 {offsets = [0, 0], sizes = [2, 128], strides = [1, 1]} : vector<2x256xf32> to vector<2x128xf32>
    %49 = vector.extract_strided_slice %47 {offsets = [0, 128], sizes = [2, 128], strides = [1, 1]} : vector<2x256xf32> to vector<2x128xf32>
    %50 = vector.extract_strided_slice %37 {offsets = [0, 256], sizes = [2, 128], strides = [1, 1]} : vector<2x384xf32> to vector<2x128xf32>
    %51 = vector.extract_strided_slice %39 {offsets = [0, 256], sizes = [2, 128], strides = [1, 1]} : vector<2x384xf32> to vector<2x128xf32>
    %52 = arith.addf %51, %34 : vector<2x128xf32>
    %53 = arith.mulf %48, %52 : vector<2x128xf32>
    %54 = arith.addf %50, %53 : vector<2x128xf32>
    %55 = math.tanh %54 : vector<2x128xf32>
    %cst_25 = arith.constant 1.000000e+00 : f32
    %56 = vector.broadcast %cst_25 : f32 to vector<2x128xf32>
    %57 = arith.subf %56, %49 : vector<2x128xf32>
    %58 = arith.mulf %57, %55 : vector<2x128xf32>
    %59 = arith.mulf %49, %35 : vector<2x128xf32>
    %60 = arith.addf %58, %59 : vector<2x128xf32>
    %c0_26 = arith.constant 0 : index
    %c0_27 = arith.constant 0 : index
    %c0_28 = arith.constant 0 : index
    %61 = vector.load %arg8[%c0_26, %c0_27, %c0_28] : memref<2x16x128xf32, #tpu.memory_space<vmem>>, vector<2x1x128xf32>
    %62 = vector.shape_cast %61 : vector<2x1x128xf32> to vector<2x128xf32>
    %63 = vector.shape_cast %60 : vector<2x128xf32> to vector<2x1x128xf32>
    tpu.vector_store %arg8[%c0_26, %c0_27, %c0_28], %63 {strides = array<i32>} : memref<2x16x128xf32, #tpu.memory_space<vmem>>, vector<2x1x128xf32>,
    %c1 = arith.constant 1 : index
    %c0_29 = arith.constant 0 : index
    %c0_30 = arith.constant 0 : index
    %64 = vector.load %arg7[%c1, %c0_29, %c0_30] : memref<16x2x384xf32, #tpu.memory_space<vmem>>, vector<1x2x384xf32>
    %65 = vector.shape_cast %64 : vector<1x2x384xf32> to vector<2x384xf32>
    %66 = arith.truncf %60 : vector<2x128xf32> to vector<2x128xbf16>
    %cst_31 = arith.constant dense<0.000000e+00> : vector<2x384xf32>
    %67 = tpu.matmul %66, %31, %cst_31 {dimension_numbers = #tpu.dot_dimension_numbers<[1], [0], [0], [1], [0, 0, 1, 1], [], []>} : vector<2x128xbf16>, vector<128x384xbf16>, vector<2x384xf32> -> vector<2x384xf32>
    %68 = vector.extract_strided_slice %65 {offsets = [0, 0], sizes = [2, 256], strides = [1, 1]} : vector<2x384xf32> to vector<2x256xf32>
    %69 = vector.extract_strided_slice %67 {offsets = [0, 0], sizes = [2, 256], strides = [1, 1]} : vector<2x384xf32> to vector<2x256xf32>
    %70 = arith.addf %68, %69 : vector<2x256xf32>
    %71 = arith.negf %70 : vector<2x256xf32>
    %72 = math.exp %71 : vector<2x256xf32>
    %cst_32 = arith.constant 1.000000e+00 : f32
    %73 = vector.broadcast %cst_32 : f32 to vector<2x256xf32>
    %74 = arith.addf %73, %72 : vector<2x256xf32>
    %75 = arith.divf %73, %74 : vector<2x256xf32>
    %76 = vector.extract_strided_slice %75 {offsets = [0, 0], sizes = [2, 128], strides = [1, 1]} : vector<2x256xf32> to vector<2x128xf32>
    %77 = vector.extract_strided_slice %75 {offsets = [0, 128], sizes = [2, 128], strides = [1, 1]} : vector<2x256xf32> to vector<2x128xf32>
    %78 = vector.extract_strided_slice %65 {offsets = [0, 256], sizes = [2, 128], strides = [1, 1]} : vector<2x384xf32> to vector<2x128xf32>
    %79 = vector.extract_strided_slice %67 {offsets = [0, 256], sizes = [2, 128], strides = [1, 1]} : vector<2x384xf32> to vector<2x128xf32>
    %80 = arith.addf %79, %34 : vector<2x128xf32>
    %81 = arith.mulf %76, %80 : vector<2x128xf32>
    %82 = arith.addf %78, %81 : vector<2x128xf32>
    %83 = math.tanh %82 : vector<2x128xf32>
    %cst_33 = arith.constant 1.000000e+00 : f32
    %84 = vector.broadcast %cst_33 : f32 to vector<2x128xf32>
    %85 = arith.subf %84, %77 : vector<2x128xf32>
    %86 = arith.mulf %85, %83 : vector<2x128xf32>
    %87 = arith.mulf %77, %60 : vector<2x128xf32>
    %88 = arith.addf %86, %87 : vector<2x128xf32>
    %c0_34 = arith.constant 0 : index
    %c1_35 = arith.constant 1 : index
    %c0_36 = arith.constant 0 : index
    %89 = vector.load %arg8[%c0_34, %c1_35, %c0_36] : memref<2x16x128xf32, #tpu.memory_space<vmem>>, vector<2x1x128xf32>
    %90 = vector.shape_cast %89 : vector<2x1x128xf32> to vector<2x128xf32>
    %91 = vector.shape_cast %88 : vector<2x128xf32> to vector<2x1x128xf32>
    tpu.vector_store %arg8[%c0_34, %c1_35, %c0_36], %91 {strides = array<i32>} : memref<2x16x128xf32, #tpu.memory_space<vmem>>, vector<2x1x128xf32>,
    %c2 = arith.constant 2 : index
    %c0_37 = arith.constant 0 : index
    %c0_38 = arith.constant 0 : index
    %92 = vector.load %arg7[%c2, %c0_37, %c0_38] : memref<16x2x384xf32, #tpu.memory_space<vmem>>, vector<1x2x384xf32>
    %93 = vector.shape_cast %92 : vector<1x2x384xf32> to vector<2x384xf32>
    %94 = arith.truncf %88 : vector<2x128xf32> to vector<2x128xbf16>
    %cst_39 = arith.constant dense<0.000000e+00> : vector<2x384xf32>
    %95 = tpu.matmul %94, %31, %cst_39 {dimension_numbers = #tpu.dot_dimension_numbers<[1], [0], [0], [1], [0, 0, 1, 1], [], []>} : vector<2x128xbf16>, vector<128x384xbf16>, vector<2x384xf32> -> vector<2x384xf32>
    %96 = vector.extract_strided_slice %93 {offsets = [0, 0], sizes = [2, 256], strides = [1, 1]} : vector<2x384xf32> to vector<2x256xf32>
    %97 = vector.extract_strided_slice %95 {offsets = [0, 0], sizes = [2, 256], strides = [1, 1]} : vector<2x384xf32> to vector<2x256xf32>
    %98 = arith.addf %96, %97 : vector<2x256xf32>
    %99 = arith.negf %98 : vector<2x256xf32>
    %100 = math.exp %99 : vector<2x256xf32>
    %cst_40 = arith.constant 1.000000e+00 : f32
    %101 = vector.broadcast %cst_40 : f32 to vector<2x256xf32>
    %102 = arith.addf %101, %100 : vector<2x256xf32>
    %103 = arith.divf %101, %102 : vector<2x256xf32>
    %104 = vector.extract_strided_slice %103 {offsets = [0, 0], sizes = [2, 128], strides = [1, 1]} : vector<2x256xf32> to vector<2x128xf32>
    %105 = vector.extract_strided_slice %103 {offsets = [0, 128], sizes = [2, 128], strides = [1, 1]} : vector<2x256xf32> to vector<2x128xf32>
    %106 = vector.extract_strided_slice %93 {offsets = [0, 256], sizes = [2, 128], strides = [1, 1]} : vector<2x384xf32> to vector<2x128xf32>
    %107 = vector.extract_strided_slice %95 {offsets = [0, 256], sizes = [2, 128], strides = [1, 1]} : vector<2x384xf32> to vector<2x128xf32>
    %108 = arith.addf %107, %34 : vector<2x128xf32>
    %109 = arith.mulf %104, %108 : vector<2x128xf32>
    %110 = arith.addf %106, %109 : vector<2x128xf32>
    %111 = math.tanh %110 : vector<2x128xf32>
    %cst_41 = arith.constant 1.000000e+00 : f32
    %112 = vector.broadcast %cst_41 : f32 to vector<2x128xf32>
    %113 = arith.subf %112, %105 : vector<2x128xf32>
    %114 = arith.mulf %113, %111 : vector<2x128xf32>
    %115 = arith.mulf %105, %88 : vector<2x128xf32>
    %116 = arith.addf %114, %115 : vector<2x128xf32>
    %c0_42 = arith.constant 0 : index
    %c2_43 = arith.constant 2 : index
    %c0_44 = arith.constant 0 : index
    %117 = vector.load %arg8[%c0_42, %c2_43, %c0_44] : memref<2x16x128xf32, #tpu.memory_space<vmem>>, vector<2x1x128xf32>
    %118 = vector.shape_cast %117 : vector<2x1x128xf32> to vector<2x128xf32>
    %119 = vector.shape_cast %116 : vector<2x128xf32> to vector<2x1x128xf32>
    tpu.vector_store %arg8[%c0_42, %c2_43, %c0_44], %119 {strides = array<i32>} : memref<2x16x128xf32, #tpu.memory_space<vmem>>, vector<2x1x128xf32>,
    %c3 = arith.constant 3 : index
    %c0_45 = arith.constant 0 : index
    %c0_46 = arith.constant 0 : index
    %120 = vector.load %arg7[%c3, %c0_45, %c0_46] : memref<16x2x384xf32, #tpu.memory_space<vmem>>, vector<1x2x384xf32>
    %121 = vector.shape_cast %120 : vector<1x2x384xf32> to vector<2x384xf32>
    %122 = arith.truncf %116 : vector<2x128xf32> to vector<2x128xbf16>
    %cst_47 = arith.constant dense<0.000000e+00> : vector<2x384xf32>
    %123 = tpu.matmul %122, %31, %cst_47 {dimension_numbers = #tpu.dot_dimension_numbers<[1], [0], [0], [1], [0, 0, 1, 1], [], []>} : vector<2x128xbf16>, vector<128x384xbf16>, vector<2x384xf32> -> vector<2x384xf32>
    %124 = vector.extract_strided_slice %121 {offsets = [0, 0], sizes = [2, 256], strides = [1, 1]} : vector<2x384xf32> to vector<2x256xf32>
    %125 = vector.extract_strided_slice %123 {offsets = [0, 0], sizes = [2, 256], strides = [1, 1]} : vector<2x384xf32> to vector<2x256xf32>
    %126 = arith.addf %124, %125 : vector<2x256xf32>
    %127 = arith.negf %126 : vector<2x256xf32>
    %128 = math.exp %127 : vector<2x256xf32>
    %cst_48 = arith.constant 1.000000e+00 : f32
    %129 = vector.broadcast %cst_48 : f32 to vector<2x256xf32>
    %130 = arith.addf %129, %128 : vector<2x256xf32>
    %131 = arith.divf %129, %130 : vector<2x256xf32>
    %132 = vector.extract_strided_slice %131 {offsets = [0, 0], sizes = [2, 128], strides = [1, 1]} : vector<2x256xf32> to vector<2x128xf32>
    %133 = vector.extract_strided_slice %131 {offsets = [0, 128], sizes = [2, 128], strides = [1, 1]} : vector<2x256xf32> to vector<2x128xf32>
    %134 = vector.extract_strided_slice %121 {offsets = [0, 256], sizes = [2, 128], strides = [1, 1]} : vector<2x384xf32> to vector<2x128xf32>
    %135 = vector.extract_strided_slice %123 {offsets = [0, 256], sizes = [2, 128], strides = [1, 1]} : vector<2x384xf32> to vector<2x128xf32>
    %136 = arith.addf %135, %34 : vector<2x128xf32>
    %137 = arith.mulf %132, %136 : vector<2x128xf32>
    %138 = arith.addf %134, %137 : vector<2x128xf32>
    %139 = math.tanh %138 : vector<2x128xf32>
    %cst_49 = arith.constant 1.000000e+00 : f32
    %140 = vector.broadcast %cst_49 : f32 to vector<2x128xf32>
    %141 = arith.subf %140, %133 : vector<2x128xf32>
    %142 = arith.mulf %141, %139 : vector<2x128xf32>
    %143 = arith.mulf %133, %116 : vector<2x128xf32>
    %144 = arith.addf %142, %143 : vector<2x128xf32>
    %c0_50 = arith.constant 0 : index
    %c3_51 = arith.constant 3 : index
    %c0_52 = arith.constant 0 : index
    %145 = vector.load %arg8[%c0_50, %c3_51, %c0_52] : memref<2x16x128xf32, #tpu.memory_space<vmem>>, vector<2x1x128xf32>
    %146 = vector.shape_cast %145 : vector<2x1x128xf32> to vector<2x128xf32>
    %147 = vector.shape_cast %144 : vector<2x128xf32> to vector<2x1x128xf32>
    tpu.vector_store %arg8[%c0_50, %c3_51, %c0_52], %147 {strides = array<i32>} : memref<2x16x128xf32, #tpu.memory_space<vmem>>, vector<2x1x128xf32>,
    %c4 = arith.constant 4 : index
    %c0_53 = arith.constant 0 : index
    %c0_54 = arith.constant 0 : index
    %148 = vector.load %arg7[%c4, %c0_53, %c0_54] : memref<16x2x384xf32, #tpu.memory_space<vmem>>, vector<1x2x384xf32>
    %149 = vector.shape_cast %148 : vector<1x2x384xf32> to vector<2x384xf32>
    %150 = arith.truncf %144 : vector<2x128xf32> to vector<2x128xbf16>
    %cst_55 = arith.constant dense<0.000000e+00> : vector<2x384xf32>
    %151 = tpu.matmul %150, %31, %cst_55 {dimension_numbers = #tpu.dot_dimension_numbers<[1], [0], [0], [1], [0, 0, 1, 1], [], []>} : vector<2x128xbf16>, vector<128x384xbf16>, vector<2x384xf32> -> vector<2x384xf32>
    %152 = vector.extract_strided_slice %149 {offsets = [0, 0], sizes = [2, 256], strides = [1, 1]} : vector<2x384xf32> to vector<2x256xf32>
    %153 = vector.extract_strided_slice %151 {offsets = [0, 0], sizes = [2, 256], strides = [1, 1]} : vector<2x384xf32> to vector<2x256xf32>
    %154 = arith.addf %152, %153 : vector<2x256xf32>
    %155 = arith.negf %154 : vector<2x256xf32>
    %156 = math.exp %155 : vector<2x256xf32>
    %cst_56 = arith.constant 1.000000e+00 : f32
    %157 = vector.broadcast %cst_56 : f32 to vector<2x256xf32>
    %158 = arith.addf %157, %156 : vector<2x256xf32>
    %159 = arith.divf %157, %158 : vector<2x256xf32>
    %160 = vector.extract_strided_slice %159 {offsets = [0, 0], sizes = [2, 128], strides = [1, 1]} : vector<2x256xf32> to vector<2x128xf32>
    %161 = vector.extract_strided_slice %159 {offsets = [0, 128], sizes = [2, 128], strides = [1, 1]} : vector<2x256xf32> to vector<2x128xf32>
    %162 = vector.extract_strided_slice %149 {offsets = [0, 256], sizes = [2, 128], strides = [1, 1]} : vector<2x384xf32> to vector<2x128xf32>
    %163 = vector.extract_strided_slice %151 {offsets = [0, 256], sizes = [2, 128], strides = [1, 1]} : vector<2x384xf32> to vector<2x128xf32>
    %164 = arith.addf %163, %34 : vector<2x128xf32>
    %165 = arith.mulf %160, %164 : vector<2x128xf32>
    %166 = arith.addf %162, %165 : vector<2x128xf32>
    %167 = math.tanh %166 : vector<2x128xf32>
    %cst_57 = arith.constant 1.000000e+00 : f32
    %168 = vector.broadcast %cst_57 : f32 to vector<2x128xf32>
    %169 = arith.subf %168, %161 : vector<2x128xf32>
    %170 = arith.mulf %169, %167 : vector<2x128xf32>
    %171 = arith.mulf %161, %144 : vector<2x128xf32>
    %172 = arith.addf %170, %171 : vector<2x128xf32>
    %c0_58 = arith.constant 0 : index
    %c4_59 = arith.constant 4 : index
    %c0_60 = arith.constant 0 : index
    %173 = vector.load %arg8[%c0_58, %c4_59, %c0_60] : memref<2x16x128xf32, #tpu.memory_space<vmem>>, vector<2x1x128xf32>
    %174 = vector.shape_cast %173 : vector<2x1x128xf32> to vector<2x128xf32>
    %175 = vector.shape_cast %172 : vector<2x128xf32> to vector<2x1x128xf32>
    tpu.vector_store %arg8[%c0_58, %c4_59, %c0_60], %175 {strides = array<i32>} : memref<2x16x128xf32, #tpu.memory_space<vmem>>, vector<2x1x128xf32>,
    %c5 = arith.constant 5 : index
    %c0_61 = arith.constant 0 : index
    %c0_62 = arith.constant 0 : index
    %176 = vector.load %arg7[%c5, %c0_61, %c0_62] : memref<16x2x384xf32, #tpu.memory_space<vmem>>, vector<1x2x384xf32>
    %177 = vector.shape_cast %176 : vector<1x2x384xf32> to vector<2x384xf32>
    %178 = arith.truncf %172 : vector<2x128xf32> to vector<2x128xbf16>
    %cst_63 = arith.constant dense<0.000000e+00> : vector<2x384xf32>
    %179 = tpu.matmul %178, %31, %cst_63 {dimension_numbers = #tpu.dot_dimension_numbers<[1], [0], [0], [1], [0, 0, 1, 1], [], []>} : vector<2x128xbf16>, vector<128x384xbf16>, vector<2x384xf32> -> vector<2x384xf32>
    %180 = vector.extract_strided_slice %177 {offsets = [0, 0], sizes = [2, 256], strides = [1, 1]} : vector<2x384xf32> to vector<2x256xf32>
    %181 = vector.extract_strided_slice %179 {offsets = [0, 0], sizes = [2, 256], strides = [1, 1]} : vector<2x384xf32> to vector<2x256xf32>
    %182 = arith.addf %180, %181 : vector<2x256xf32>
    %183 = arith.negf %182 : vector<2x256xf32>
    %184 = math.exp %183 : vector<2x256xf32>
    %cst_64 = arith.constant 1.000000e+00 : f32
    %185 = vector.broadcast %cst_64 : f32 to vector<2x256xf32>
    %186 = arith.addf %185, %184 : vector<2x256xf32>
    %187 = arith.divf %185, %186 : vector<2x256xf32>
    %188 = vector.extract_strided_slice %187 {offsets = [0, 0], sizes = [2, 128], strides = [1, 1]} : vector<2x256xf32> to vector<2x128xf32>
    %189 = vector.extract_strided_slice %187 {offsets = [0, 128], sizes = [2, 128], strides = [1, 1]} : vector<2x256xf32> to vector<2x128xf32>
    %190 = vector.extract_strided_slice %177 {offsets = [0, 256], sizes = [2, 128], strides = [1, 1]} : vector<2x384xf32> to vector<2x128xf32>
    %191 = vector.extract_strided_slice %179 {offsets = [0, 256], sizes = [2, 128], strides = [1, 1]} : vector<2x384xf32> to vector<2x128xf32>
    %192 = arith.addf %191, %34 : vector<2x128xf32>
    %193 = arith.mulf %188, %192 : vector<2x128xf32>
    %194 = arith.addf %190, %193 : vector<2x128xf32>
    %195 = math.tanh %194 : vector<2x128xf32>
    %cst_65 = arith.constant 1.000000e+00 : f32
    %196 = vector.broadcast %cst_65 : f32 to vector<2x128xf32>
    %197 = arith.subf %196, %189 : vector<2x128xf32>
    %198 = arith.mulf %197, %195 : vector<2x128xf32>
    %199 = arith.mulf %189, %172 : vector<2x128xf32>
    %200 = arith.addf %198, %199 : vector<2x128xf32>
    %c0_66 = arith.constant 0 : index
    %c5_67 = arith.constant 5 : index
    %c0_68 = arith.constant 0 : index
    %201 = vector.load %arg8[%c0_66, %c5_67, %c0_68] : memref<2x16x128xf32, #tpu.memory_space<vmem>>, vector<2x1x128xf32>
    %202 = vector.shape_cast %201 : vector<2x1x128xf32> to vector<2x128xf32>
    %203 = vector.shape_cast %200 : vector<2x128xf32> to vector<2x1x128xf32>
    tpu.vector_store %arg8[%c0_66, %c5_67, %c0_68], %203 {strides = array<i32>} : memref<2x16x128xf32, #tpu.memory_space<vmem>>, vector<2x1x128xf32>,
    %c6 = arith.constant 6 : index
    %c0_69 = arith.constant 0 : index
    %c0_70 = arith.constant 0 : index
    %204 = vector.load %arg7[%c6, %c0_69, %c0_70] : memref<16x2x384xf32, #tpu.memory_space<vmem>>, vector<1x2x384xf32>
    %205 = vector.shape_cast %204 : vector<1x2x384xf32> to vector<2x384xf32>
    %206 = arith.truncf %200 : vector<2x128xf32> to vector<2x128xbf16>
    %cst_71 = arith.constant dense<0.000000e+00> : vector<2x384xf32>
    %207 = tpu.matmul %206, %31, %cst_71 {dimension_numbers = #tpu.dot_dimension_numbers<[1], [0], [0], [1], [0, 0, 1, 1], [], []>} : vector<2x128xbf16>, vector<128x384xbf16>, vector<2x384xf32> -> vector<2x384xf32>
    %208 = vector.extract_strided_slice %205 {offsets = [0, 0], sizes = [2, 256], strides = [1, 1]} : vector<2x384xf32> to vector<2x256xf32>
    %209 = vector.extract_strided_slice %207 {offsets = [0, 0], sizes = [2, 256], strides = [1, 1]} : vector<2x384xf32> to vector<2x256xf32>
    %210 = arith.addf %208, %209 : vector<2x256xf32>
    %211 = arith.negf %210 : vector<2x256xf32>
    %212 = math.exp %211 : vector<2x256xf32>
    %cst_72 = arith.constant 1.000000e+00 : f32
    %213 = vector.broadcast %cst_72 : f32 to vector<2x256xf32>
    %214 = arith.addf %213, %212 : vector<2x256xf32>
    %215 = arith.divf %213, %214 : vector<2x256xf32>
    %216 = vector.extract_strided_slice %215 {offsets = [0, 0], sizes = [2, 128], strides = [1, 1]} : vector<2x256xf32> to vector<2x128xf32>
    %217 = vector.extract_strided_slice %215 {offsets = [0, 128], sizes = [2, 128], strides = [1, 1]} : vector<2x256xf32> to vector<2x128xf32>
    %218 = vector.extract_strided_slice %205 {offsets = [0, 256], sizes = [2, 128], strides = [1, 1]} : vector<2x384xf32> to vector<2x128xf32>
    %219 = vector.extract_strided_slice %207 {offsets = [0, 256], sizes = [2, 128], strides = [1, 1]} : vector<2x384xf32> to vector<2x128xf32>
    %220 = arith.addf %219, %34 : vector<2x128xf32>
    %221 = arith.mulf %216, %220 : vector<2x128xf32>
    %222 = arith.addf %218, %221 : vector<2x128xf32>
    %223 = math.tanh %222 : vector<2x128xf32>
    %cst_73 = arith.constant 1.000000e+00 : f32
    %224 = vector.broadcast %cst_73 : f32 to vector<2x128xf32>
    %225 = arith.subf %224, %217 : vector<2x128xf32>
    %226 = arith.mulf %225, %223 : vector<2x128xf32>
    %227 = arith.mulf %217, %200 : vector<2x128xf32>
    %228 = arith.addf %226, %227 : vector<2x128xf32>
    %c0_74 = arith.constant 0 : index
    %c6_75 = arith.constant 6 : index
    %c0_76 = arith.constant 0 : index
    %229 = vector.load %arg8[%c0_74, %c6_75, %c0_76] : memref<2x16x128xf32, #tpu.memory_space<vmem>>, vector<2x1x128xf32>
    %230 = vector.shape_cast %229 : vector<2x1x128xf32> to vector<2x128xf32>
    %231 = vector.shape_cast %228 : vector<2x128xf32> to vector<2x1x128xf32>
    tpu.vector_store %arg8[%c0_74, %c6_75, %c0_76], %231 {strides = array<i32>} : memref<2x16x128xf32, #tpu.memory_space<vmem>>, vector<2x1x128xf32>,
    %c7 = arith.constant 7 : index
    %c0_77 = arith.constant 0 : index
    %c0_78 = arith.constant 0 : index
    %232 = vector.load %arg7[%c7, %c0_77, %c0_78] : memref<16x2x384xf32, #tpu.memory_space<vmem>>, vector<1x2x384xf32>
    %233 = vector.shape_cast %232 : vector<1x2x384xf32> to vector<2x384xf32>
    %234 = arith.truncf %228 : vector<2x128xf32> to vector<2x128xbf16>
    %cst_79 = arith.constant dense<0.000000e+00> : vector<2x384xf32>
    %235 = tpu.matmul %234, %31, %cst_79 {dimension_numbers = #tpu.dot_dimension_numbers<[1], [0], [0], [1], [0, 0, 1, 1], [], []>} : vector<2x128xbf16>, vector<128x384xbf16>, vector<2x384xf32> -> vector<2x384xf32>
    %236 = vector.extract_strided_slice %233 {offsets = [0, 0], sizes = [2, 256], strides = [1, 1]} : vector<2x384xf32> to vector<2x256xf32>
    %237 = vector.extract_strided_slice %235 {offsets = [0, 0], sizes = [2, 256], strides = [1, 1]} : vector<2x384xf32> to vector<2x256xf32>
    %238 = arith.addf %236, %237 : vector<2x256xf32>
    %239 = arith.negf %238 : vector<2x256xf32>
    %240 = math.exp %239 : vector<2x256xf32>
    %cst_80 = arith.constant 1.000000e+00 : f32
    %241 = vector.broadcast %cst_80 : f32 to vector<2x256xf32>
    %242 = arith.addf %241, %240 : vector<2x256xf32>
    %243 = arith.divf %241, %242 : vector<2x256xf32>
    %244 = vector.extract_strided_slice %243 {offsets = [0, 0], sizes = [2, 128], strides = [1, 1]} : vector<2x256xf32> to vector<2x128xf32>
    %245 = vector.extract_strided_slice %243 {offsets = [0, 128], sizes = [2, 128], strides = [1, 1]} : vector<2x256xf32> to vector<2x128xf32>
    %246 = vector.extract_strided_slice %233 {offsets = [0, 256], sizes = [2, 128], strides = [1, 1]} : vector<2x384xf32> to vector<2x128xf32>
    %247 = vector.extract_strided_slice %235 {offsets = [0, 256], sizes = [2, 128], strides = [1, 1]} : vector<2x384xf32> to vector<2x128xf32>
    %248 = arith.addf %247, %34 : vector<2x128xf32>
    %249 = arith.mulf %244, %248 : vector<2x128xf32>
    %250 = arith.addf %246, %249 : vector<2x128xf32>
    %251 = math.tanh %250 : vector<2x128xf32>
    %cst_81 = arith.constant 1.000000e+00 : f32
    %252 = vector.broadcast %cst_81 : f32 to vector<2x128xf32>
    %253 = arith.subf %252, %245 : vector<2x128xf32>
    %254 = arith.mulf %253, %251 : vector<2x128xf32>
    %255 = arith.mulf %245, %228 : vector<2x128xf32>
    %256 = arith.addf %254, %255 : vector<2x128xf32>
    %c0_82 = arith.constant 0 : index
    %c7_83 = arith.constant 7 : index
    %c0_84 = arith.constant 0 : index
    %257 = vector.load %arg8[%c0_82, %c7_83, %c0_84] : memref<2x16x128xf32, #tpu.memory_space<vmem>>, vector<2x1x128xf32>
    %258 = vector.shape_cast %257 : vector<2x1x128xf32> to vector<2x128xf32>
    %259 = vector.shape_cast %256 : vector<2x128xf32> to vector<2x1x128xf32>
    tpu.vector_store %arg8[%c0_82, %c7_83, %c0_84], %259 {strides = array<i32>} : memref<2x16x128xf32, #tpu.memory_space<vmem>>, vector<2x1x128xf32>,
    %c8 = arith.constant 8 : index
    %c0_85 = arith.constant 0 : index
    %c0_86 = arith.constant 0 : index
    %260 = vector.load %arg7[%c8, %c0_85, %c0_86] : memref<16x2x384xf32, #tpu.memory_space<vmem>>, vector<1x2x384xf32>
    %261 = vector.shape_cast %260 : vector<1x2x384xf32> to vector<2x384xf32>
    %262 = arith.truncf %256 : vector<2x128xf32> to vector<2x128xbf16>
    %cst_87 = arith.constant dense<0.000000e+00> : vector<2x384xf32>
    %263 = tpu.matmul %262, %31, %cst_87 {dimension_numbers = #tpu.dot_dimension_numbers<[1], [0], [0], [1], [0, 0, 1, 1], [], []>} : vector<2x128xbf16>, vector<128x384xbf16>, vector<2x384xf32> -> vector<2x384xf32>
    %264 = vector.extract_strided_slice %261 {offsets = [0, 0], sizes = [2, 256], strides = [1, 1]} : vector<2x384xf32> to vector<2x256xf32>
    %265 = vector.extract_strided_slice %263 {offsets = [0, 0], sizes = [2, 256], strides = [1, 1]} : vector<2x384xf32> to vector<2x256xf32>
    %266 = arith.addf %264, %265 : vector<2x256xf32>
    %267 = arith.negf %266 : vector<2x256xf32>
    %268 = math.exp %267 : vector<2x256xf32>
    %cst_88 = arith.constant 1.000000e+00 : f32
    %269 = vector.broadcast %cst_88 : f32 to vector<2x256xf32>
    %270 = arith.addf %269, %268 : vector<2x256xf32>
    %271 = arith.divf %269, %270 : vector<2x256xf32>
    %272 = vector.extract_strided_slice %271 {offsets = [0, 0], sizes = [2, 128], strides = [1, 1]} : vector<2x256xf32> to vector<2x128xf32>
    %273 = vector.extract_strided_slice %271 {offsets = [0, 128], sizes = [2, 128], strides = [1, 1]} : vector<2x256xf32> to vector<2x128xf32>
    %274 = vector.extract_strided_slice %261 {offsets = [0, 256], sizes = [2, 128], strides = [1, 1]} : vector<2x384xf32> to vector<2x128xf32>
    %275 = vector.extract_strided_slice %263 {offsets = [0, 256], sizes = [2, 128], strides = [1, 1]} : vector<2x384xf32> to vector<2x128xf32>
    %276 = arith.addf %275, %34 : vector<2x128xf32>
    %277 = arith.mulf %272, %276 : vector<2x128xf32>
    %278 = arith.addf %274, %277 : vector<2x128xf32>
    %279 = math.tanh %278 : vector<2x128xf32>
    %cst_89 = arith.constant 1.000000e+00 : f32
    %280 = vector.broadcast %cst_89 : f32 to vector<2x128xf32>
    %281 = arith.subf %280, %273 : vector<2x128xf32>
    %282 = arith.mulf %281, %279 : vector<2x128xf32>
    %283 = arith.mulf %273, %256 : vector<2x128xf32>
    %284 = arith.addf %282, %283 : vector<2x128xf32>
    %c0_90 = arith.constant 0 : index
    %c8_91 = arith.constant 8 : index
    %c0_92 = arith.constant 0 : index
    %285 = vector.load %arg8[%c0_90, %c8_91, %c0_92] : memref<2x16x128xf32, #tpu.memory_space<vmem>>, vector<2x1x128xf32>
    %286 = vector.shape_cast %285 : vector<2x1x128xf32> to vector<2x128xf32>
    %287 = vector.shape_cast %284 : vector<2x128xf32> to vector<2x1x128xf32>
    tpu.vector_store %arg8[%c0_90, %c8_91, %c0_92], %287 {strides = array<i32>} : memref<2x16x128xf32, #tpu.memory_space<vmem>>, vector<2x1x128xf32>,
    %c9 = arith.constant 9 : index
    %c0_93 = arith.constant 0 : index
    %c0_94 = arith.constant 0 : index
    %288 = vector.load %arg7[%c9, %c0_93, %c0_94] : memref<16x2x384xf32, #tpu.memory_space<vmem>>, vector<1x2x384xf32>
    %289 = vector.shape_cast %288 : vector<1x2x384xf32> to vector<2x384xf32>
    %290 = arith.truncf %284 : vector<2x128xf32> to vector<2x128xbf16>
    %cst_95 = arith.constant dense<0.000000e+00> : vector<2x384xf32>
    %291 = tpu.matmul %290, %31, %cst_95 {dimension_numbers = #tpu.dot_dimension_numbers<[1], [0], [0], [1], [0, 0, 1, 1], [], []>} : vector<2x128xbf16>, vector<128x384xbf16>, vector<2x384xf32> -> vector<2x384xf32>
    %292 = vector.extract_strided_slice %289 {offsets = [0, 0], sizes = [2, 256], strides = [1, 1]} : vector<2x384xf32> to vector<2x256xf32>
    %293 = vector.extract_strided_slice %291 {offsets = [0, 0], sizes = [2, 256], strides = [1, 1]} : vector<2x384xf32> to vector<2x256xf32>
    %294 = arith.addf %292, %293 : vector<2x256xf32>
    %295 = arith.negf %294 : vector<2x256xf32>
    %296 = math.exp %295 : vector<2x256xf32>
    %cst_96 = arith.constant 1.000000e+00 : f32
    %297 = vector.broadcast %cst_96 : f32 to vector<2x256xf32>
    %298 = arith.addf %297, %296 : vector<2x256xf32>
    %299 = arith.divf %297, %298 : vector<2x256xf32>
    %300 = vector.extract_strided_slice %299 {offsets = [0, 0], sizes = [2, 128], strides = [1, 1]} : vector<2x256xf32> to vector<2x128xf32>
    %301 = vector.extract_strided_slice %299 {offsets = [0, 128], sizes = [2, 128], strides = [1, 1]} : vector<2x256xf32> to vector<2x128xf32>
    %302 = vector.extract_strided_slice %289 {offsets = [0, 256], sizes = [2, 128], strides = [1, 1]} : vector<2x384xf32> to vector<2x128xf32>
    %303 = vector.extract_strided_slice %291 {offsets = [0, 256], sizes = [2, 128], strides = [1, 1]} : vector<2x384xf32> to vector<2x128xf32>
    %304 = arith.addf %303, %34 : vector<2x128xf32>
    %305 = arith.mulf %300, %304 : vector<2x128xf32>
    %306 = arith.addf %302, %305 : vector<2x128xf32>
    %307 = math.tanh %306 : vector<2x128xf32>
    %cst_97 = arith.constant 1.000000e+00 : f32
    %308 = vector.broadcast %cst_97 : f32 to vector<2x128xf32>
    %309 = arith.subf %308, %301 : vector<2x128xf32>
    %310 = arith.mulf %309, %307 : vector<2x128xf32>
    %311 = arith.mulf %301, %284 : vector<2x128xf32>
    %312 = arith.addf %310, %311 : vector<2x128xf32>
    %c0_98 = arith.constant 0 : index
    %c9_99 = arith.constant 9 : index
    %c0_100 = arith.constant 0 : index
    %313 = vector.load %arg8[%c0_98, %c9_99, %c0_100] : memref<2x16x128xf32, #tpu.memory_space<vmem>>, vector<2x1x128xf32>
    %314 = vector.shape_cast %313 : vector<2x1x128xf32> to vector<2x128xf32>
    %315 = vector.shape_cast %312 : vector<2x128xf32> to vector<2x1x128xf32>
    tpu.vector_store %arg8[%c0_98, %c9_99, %c0_100], %315 {strides = array<i32>} : memref<2x16x128xf32, #tpu.memory_space<vmem>>, vector<2x1x128xf32>,
    %c10 = arith.constant 10 : index
    %c0_101 = arith.constant 0 : index
    %c0_102 = arith.constant 0 : index
    %316 = vector.load %arg7[%c10, %c0_101, %c0_102] : memref<16x2x384xf32, #tpu.memory_space<vmem>>, vector<1x2x384xf32>
    %317 = vector.shape_cast %316 : vector<1x2x384xf32> to vector<2x384xf32>
    %318 = arith.truncf %312 : vector<2x128xf32> to vector<2x128xbf16>
    %cst_103 = arith.constant dense<0.000000e+00> : vector<2x384xf32>
    %319 = tpu.matmul %318, %31, %cst_103 {dimension_numbers = #tpu.dot_dimension_numbers<[1], [0], [0], [1], [0, 0, 1, 1], [], []>} : vector<2x128xbf16>, vector<128x384xbf16>, vector<2x384xf32> -> vector<2x384xf32>
    %320 = vector.extract_strided_slice %317 {offsets = [0, 0], sizes = [2, 256], strides = [1, 1]} : vector<2x384xf32> to vector<2x256xf32>
    %321 = vector.extract_strided_slice %319 {offsets = [0, 0], sizes = [2, 256], strides = [1, 1]} : vector<2x384xf32> to vector<2x256xf32>
    %322 = arith.addf %320, %321 : vector<2x256xf32>
    %323 = arith.negf %322 : vector<2x256xf32>
    %324 = math.exp %323 : vector<2x256xf32>
    %cst_104 = arith.constant 1.000000e+00 : f32
    %325 = vector.broadcast %cst_104 : f32 to vector<2x256xf32>
    %326 = arith.addf %325, %324 : vector<2x256xf32>
    %327 = arith.divf %325, %326 : vector<2x256xf32>
    %328 = vector.extract_strided_slice %327 {offsets = [0, 0], sizes = [2, 128], strides = [1, 1]} : vector<2x256xf32> to vector<2x128xf32>
    %329 = vector.extract_strided_slice %327 {offsets = [0, 128], sizes = [2, 128], strides = [1, 1]} : vector<2x256xf32> to vector<2x128xf32>
    %330 = vector.extract_strided_slice %317 {offsets = [0, 256], sizes = [2, 128], strides = [1, 1]} : vector<2x384xf32> to vector<2x128xf32>
    %331 = vector.extract_strided_slice %319 {offsets = [0, 256], sizes = [2, 128], strides = [1, 1]} : vector<2x384xf32> to vector<2x128xf32>
    %332 = arith.addf %331, %34 : vector<2x128xf32>
    %333 = arith.mulf %328, %332 : vector<2x128xf32>
    %334 = arith.addf %330, %333 : vector<2x128xf32>
    %335 = math.tanh %334 : vector<2x128xf32>
    %cst_105 = arith.constant 1.000000e+00 : f32
    %336 = vector.broadcast %cst_105 : f32 to vector<2x128xf32>
    %337 = arith.subf %336, %329 : vector<2x128xf32>
    %338 = arith.mulf %337, %335 : vector<2x128xf32>
    %339 = arith.mulf %329, %312 : vector<2x128xf32>
    %340 = arith.addf %338, %339 : vector<2x128xf32>
    %c0_106 = arith.constant 0 : index
    %c10_107 = arith.constant 10 : index
    %c0_108 = arith.constant 0 : index
    %341 = vector.load %arg8[%c0_106, %c10_107, %c0_108] : memref<2x16x128xf32, #tpu.memory_space<vmem>>, vector<2x1x128xf32>
    %342 = vector.shape_cast %341 : vector<2x1x128xf32> to vector<2x128xf32>
    %343 = vector.shape_cast %340 : vector<2x128xf32> to vector<2x1x128xf32>
    tpu.vector_store %arg8[%c0_106, %c10_107, %c0_108], %343 {strides = array<i32>} : memref<2x16x128xf32, #tpu.memory_space<vmem>>, vector<2x1x128xf32>,
    %c11 = arith.constant 11 : index
    %c0_109 = arith.constant 0 : index
    %c0_110 = arith.constant 0 : index
    %344 = vector.load %arg7[%c11, %c0_109, %c0_110] : memref<16x2x384xf32, #tpu.memory_space<vmem>>, vector<1x2x384xf32>
    %345 = vector.shape_cast %344 : vector<1x2x384xf32> to vector<2x384xf32>
    %346 = arith.truncf %340 : vector<2x128xf32> to vector<2x128xbf16>
    %cst_111 = arith.constant dense<0.000000e+00> : vector<2x384xf32>
    %347 = tpu.matmul %346, %31, %cst_111 {dimension_numbers = #tpu.dot_dimension_numbers<[1], [0], [0], [1], [0, 0, 1, 1], [], []>} : vector<2x128xbf16>, vector<128x384xbf16>, vector<2x384xf32> -> vector<2x384xf32>
    %348 = vector.extract_strided_slice %345 {offsets = [0, 0], sizes = [2, 256], strides = [1, 1]} : vector<2x384xf32> to vector<2x256xf32>
    %349 = vector.extract_strided_slice %347 {offsets = [0, 0], sizes = [2, 256], strides = [1, 1]} : vector<2x384xf32> to vector<2x256xf32>
    %350 = arith.addf %348, %349 : vector<2x256xf32>
    %351 = arith.negf %350 : vector<2x256xf32>
    %352 = math.exp %351 : vector<2x256xf32>
    %cst_112 = arith.constant 1.000000e+00 : f32
    %353 = vector.broadcast %cst_112 : f32 to vector<2x256xf32>
    %354 = arith.addf %353, %352 : vector<2x256xf32>
    %355 = arith.divf %353, %354 : vector<2x256xf32>
    %356 = vector.extract_strided_slice %355 {offsets = [0, 0], sizes = [2, 128], strides = [1, 1]} : vector<2x256xf32> to vector<2x128xf32>
    %357 = vector.extract_strided_slice %355 {offsets = [0, 128], sizes = [2, 128], strides = [1, 1]} : vector<2x256xf32> to vector<2x128xf32>
    %358 = vector.extract_strided_slice %345 {offsets = [0, 256], sizes = [2, 128], strides = [1, 1]} : vector<2x384xf32> to vector<2x128xf32>
    %359 = vector.extract_strided_slice %347 {offsets = [0, 256], sizes = [2, 128], strides = [1, 1]} : vector<2x384xf32> to vector<2x128xf32>
    %360 = arith.addf %359, %34 : vector<2x128xf32>
    %361 = arith.mulf %356, %360 : vector<2x128xf32>
    %362 = arith.addf %358, %361 : vector<2x128xf32>
    %363 = math.tanh %362 : vector<2x128xf32>
    %cst_113 = arith.constant 1.000000e+00 : f32
    %364 = vector.broadcast %cst_113 : f32 to vector<2x128xf32>
    %365 = arith.subf %364, %357 : vector<2x128xf32>
    %366 = arith.mulf %365, %363 : vector<2x128xf32>
    %367 = arith.mulf %357, %340 : vector<2x128xf32>
    %368 = arith.addf %366, %367 : vector<2x128xf32>
    %c0_114 = arith.constant 0 : index
    %c11_115 = arith.constant 11 : index
    %c0_116 = arith.constant 0 : index
    %369 = vector.load %arg8[%c0_114, %c11_115, %c0_116] : memref<2x16x128xf32, #tpu.memory_space<vmem>>, vector<2x1x128xf32>
    %370 = vector.shape_cast %369 : vector<2x1x128xf32> to vector<2x128xf32>
    %371 = vector.shape_cast %368 : vector<2x128xf32> to vector<2x1x128xf32>
    tpu.vector_store %arg8[%c0_114, %c11_115, %c0_116], %371 {strides = array<i32>} : memref<2x16x128xf32, #tpu.memory_space<vmem>>, vector<2x1x128xf32>,
    %c12 = arith.constant 12 : index
    %c0_117 = arith.constant 0 : index
    %c0_118 = arith.constant 0 : index
    %372 = vector.load %arg7[%c12, %c0_117, %c0_118] : memref<16x2x384xf32, #tpu.memory_space<vmem>>, vector<1x2x384xf32>
    %373 = vector.shape_cast %372 : vector<1x2x384xf32> to vector<2x384xf32>
    %374 = arith.truncf %368 : vector<2x128xf32> to vector<2x128xbf16>
    %cst_119 = arith.constant dense<0.000000e+00> : vector<2x384xf32>
    %375 = tpu.matmul %374, %31, %cst_119 {dimension_numbers = #tpu.dot_dimension_numbers<[1], [0], [0], [1], [0, 0, 1, 1], [], []>} : vector<2x128xbf16>, vector<128x384xbf16>, vector<2x384xf32> -> vector<2x384xf32>
    %376 = vector.extract_strided_slice %373 {offsets = [0, 0], sizes = [2, 256], strides = [1, 1]} : vector<2x384xf32> to vector<2x256xf32>
    %377 = vector.extract_strided_slice %375 {offsets = [0, 0], sizes = [2, 256], strides = [1, 1]} : vector<2x384xf32> to vector<2x256xf32>
    %378 = arith.addf %376, %377 : vector<2x256xf32>
    %379 = arith.negf %378 : vector<2x256xf32>
    %380 = math.exp %379 : vector<2x256xf32>
    %cst_120 = arith.constant 1.000000e+00 : f32
    %381 = vector.broadcast %cst_120 : f32 to vector<2x256xf32>
    %382 = arith.addf %381, %380 : vector<2x256xf32>
    %383 = arith.divf %381, %382 : vector<2x256xf32>
    %384 = vector.extract_strided_slice %383 {offsets = [0, 0], sizes = [2, 128], strides = [1, 1]} : vector<2x256xf32> to vector<2x128xf32>
    %385 = vector.extract_strided_slice %383 {offsets = [0, 128], sizes = [2, 128], strides = [1, 1]} : vector<2x256xf32> to vector<2x128xf32>
    %386 = vector.extract_strided_slice %373 {offsets = [0, 256], sizes = [2, 128], strides = [1, 1]} : vector<2x384xf32> to vector<2x128xf32>
    %387 = vector.extract_strided_slice %375 {offsets = [0, 256], sizes = [2, 128], strides = [1, 1]} : vector<2x384xf32> to vector<2x128xf32>
    %388 = arith.addf %387, %34 : vector<2x128xf32>
    %389 = arith.mulf %384, %388 : vector<2x128xf32>
    %390 = arith.addf %386, %389 : vector<2x128xf32>
    %391 = math.tanh %390 : vector<2x128xf32>
    %cst_121 = arith.constant 1.000000e+00 : f32
    %392 = vector.broadcast %cst_121 : f32 to vector<2x128xf32>
    %393 = arith.subf %392, %385 : vector<2x128xf32>
    %394 = arith.mulf %393, %391 : vector<2x128xf32>
    %395 = arith.mulf %385, %368 : vector<2x128xf32>
    %396 = arith.addf %394, %395 : vector<2x128xf32>
    %c0_122 = arith.constant 0 : index
    %c12_123 = arith.constant 12 : index
    %c0_124 = arith.constant 0 : index
    %397 = vector.load %arg8[%c0_122, %c12_123, %c0_124] : memref<2x16x128xf32, #tpu.memory_space<vmem>>, vector<2x1x128xf32>
    %398 = vector.shape_cast %397 : vector<2x1x128xf32> to vector<2x128xf32>
    %399 = vector.shape_cast %396 : vector<2x128xf32> to vector<2x1x128xf32>
    tpu.vector_store %arg8[%c0_122, %c12_123, %c0_124], %399 {strides = array<i32>} : memref<2x16x128xf32, #tpu.memory_space<vmem>>, vector<2x1x128xf32>,
    %c13 = arith.constant 13 : index
    %c0_125 = arith.constant 0 : index
    %c0_126 = arith.constant 0 : index
    %400 = vector.load %arg7[%c13, %c0_125, %c0_126] : memref<16x2x384xf32, #tpu.memory_space<vmem>>, vector<1x2x384xf32>
    %401 = vector.shape_cast %400 : vector<1x2x384xf32> to vector<2x384xf32>
    %402 = arith.truncf %396 : vector<2x128xf32> to vector<2x128xbf16>
    %cst_127 = arith.constant dense<0.000000e+00> : vector<2x384xf32>
    %403 = tpu.matmul %402, %31, %cst_127 {dimension_numbers = #tpu.dot_dimension_numbers<[1], [0], [0], [1], [0, 0, 1, 1], [], []>} : vector<2x128xbf16>, vector<128x384xbf16>, vector<2x384xf32> -> vector<2x384xf32>
    %404 = vector.extract_strided_slice %401 {offsets = [0, 0], sizes = [2, 256], strides = [1, 1]} : vector<2x384xf32> to vector<2x256xf32>
    %405 = vector.extract_strided_slice %403 {offsets = [0, 0], sizes = [2, 256], strides = [1, 1]} : vector<2x384xf32> to vector<2x256xf32>
    %406 = arith.addf %404, %405 : vector<2x256xf32>
    %407 = arith.negf %406 : vector<2x256xf32>
    %408 = math.exp %407 : vector<2x256xf32>
    %cst_128 = arith.constant 1.000000e+00 : f32
    %409 = vector.broadcast %cst_128 : f32 to vector<2x256xf32>
    %410 = arith.addf %409, %408 : vector<2x256xf32>
    %411 = arith.divf %409, %410 : vector<2x256xf32>
    %412 = vector.extract_strided_slice %411 {offsets = [0, 0], sizes = [2, 128], strides = [1, 1]} : vector<2x256xf32> to vector<2x128xf32>
    %413 = vector.extract_strided_slice %411 {offsets = [0, 128], sizes = [2, 128], strides = [1, 1]} : vector<2x256xf32> to vector<2x128xf32>
    %414 = vector.extract_strided_slice %401 {offsets = [0, 256], sizes = [2, 128], strides = [1, 1]} : vector<2x384xf32> to vector<2x128xf32>
    %415 = vector.extract_strided_slice %403 {offsets = [0, 256], sizes = [2, 128], strides = [1, 1]} : vector<2x384xf32> to vector<2x128xf32>
    %416 = arith.addf %415, %34 : vector<2x128xf32>
    %417 = arith.mulf %412, %416 : vector<2x128xf32>
    %418 = arith.addf %414, %417 : vector<2x128xf32>
    %419 = math.tanh %418 : vector<2x128xf32>
    %cst_129 = arith.constant 1.000000e+00 : f32
    %420 = vector.broadcast %cst_129 : f32 to vector<2x128xf32>
    %421 = arith.subf %420, %413 : vector<2x128xf32>
    %422 = arith.mulf %421, %419 : vector<2x128xf32>
    %423 = arith.mulf %413, %396 : vector<2x128xf32>
    %424 = arith.addf %422, %423 : vector<2x128xf32>
    %c0_130 = arith.constant 0 : index
    %c13_131 = arith.constant 13 : index
    %c0_132 = arith.constant 0 : index
    %425 = vector.load %arg8[%c0_130, %c13_131, %c0_132] : memref<2x16x128xf32, #tpu.memory_space<vmem>>, vector<2x1x128xf32>
    %426 = vector.shape_cast %425 : vector<2x1x128xf32> to vector<2x128xf32>
    %427 = vector.shape_cast %424 : vector<2x128xf32> to vector<2x1x128xf32>
    tpu.vector_store %arg8[%c0_130, %c13_131, %c0_132], %427 {strides = array<i32>} : memref<2x16x128xf32, #tpu.memory_space<vmem>>, vector<2x1x128xf32>,
    %c14 = arith.constant 14 : index
    %c0_133 = arith.constant 0 : index
    %c0_134 = arith.constant 0 : index
    %428 = vector.load %arg7[%c14, %c0_133, %c0_134] : memref<16x2x384xf32, #tpu.memory_space<vmem>>, vector<1x2x384xf32>
    %429 = vector.shape_cast %428 : vector<1x2x384xf32> to vector<2x384xf32>
    %430 = arith.truncf %424 : vector<2x128xf32> to vector<2x128xbf16>
    %cst_135 = arith.constant dense<0.000000e+00> : vector<2x384xf32>
    %431 = tpu.matmul %430, %31, %cst_135 {dimension_numbers = #tpu.dot_dimension_numbers<[1], [0], [0], [1], [0, 0, 1, 1], [], []>} : vector<2x128xbf16>, vector<128x384xbf16>, vector<2x384xf32> -> vector<2x384xf32>
    %432 = vector.extract_strided_slice %429 {offsets = [0, 0], sizes = [2, 256], strides = [1, 1]} : vector<2x384xf32> to vector<2x256xf32>
    %433 = vector.extract_strided_slice %431 {offsets = [0, 0], sizes = [2, 256], strides = [1, 1]} : vector<2x384xf32> to vector<2x256xf32>
    %434 = arith.addf %432, %433 : vector<2x256xf32>
    %435 = arith.negf %434 : vector<2x256xf32>
    %436 = math.exp %435 : vector<2x256xf32>
    %cst_136 = arith.constant 1.000000e+00 : f32
    %437 = vector.broadcast %cst_136 : f32 to vector<2x256xf32>
    %438 = arith.addf %437, %436 : vector<2x256xf32>
    %439 = arith.divf %437, %438 : vector<2x256xf32>
    %440 = vector.extract_strided_slice %439 {offsets = [0, 0], sizes = [2, 128], strides = [1, 1]} : vector<2x256xf32> to vector<2x128xf32>
    %441 = vector.extract_strided_slice %439 {offsets = [0, 128], sizes = [2, 128], strides = [1, 1]} : vector<2x256xf32> to vector<2x128xf32>
    %442 = vector.extract_strided_slice %429 {offsets = [0, 256], sizes = [2, 128], strides = [1, 1]} : vector<2x384xf32> to vector<2x128xf32>
    %443 = vector.extract_strided_slice %431 {offsets = [0, 256], sizes = [2, 128], strides = [1, 1]} : vector<2x384xf32> to vector<2x128xf32>
    %444 = arith.addf %443, %34 : vector<2x128xf32>
    %445 = arith.mulf %440, %444 : vector<2x128xf32>
    %446 = arith.addf %442, %445 : vector<2x128xf32>
    %447 = math.tanh %446 : vector<2x128xf32>
    %cst_137 = arith.constant 1.000000e+00 : f32
    %448 = vector.broadcast %cst_137 : f32 to vector<2x128xf32>
    %449 = arith.subf %448, %441 : vector<2x128xf32>
    %450 = arith.mulf %449, %447 : vector<2x128xf32>
    %451 = arith.mulf %441, %424 : vector<2x128xf32>
    %452 = arith.addf %450, %451 : vector<2x128xf32>
    %c0_138 = arith.constant 0 : index
    %c14_139 = arith.constant 14 : index
    %c0_140 = arith.constant 0 : index
    %453 = vector.load %arg8[%c0_138, %c14_139, %c0_140] : memref<2x16x128xf32, #tpu.memory_space<vmem>>, vector<2x1x128xf32>
    %454 = vector.shape_cast %453 : vector<2x1x128xf32> to vector<2x128xf32>
    %455 = vector.shape_cast %452 : vector<2x128xf32> to vector<2x1x128xf32>
    tpu.vector_store %arg8[%c0_138, %c14_139, %c0_140], %455 {strides = array<i32>} : memref<2x16x128xf32, #tpu.memory_space<vmem>>, vector<2x1x128xf32>,
    %c15 = arith.constant 15 : index
    %c0_141 = arith.constant 0 : index
    %c0_142 = arith.constant 0 : index
    %456 = vector.load %arg7[%c15, %c0_141, %c0_142] : memref<16x2x384xf32, #tpu.memory_space<vmem>>, vector<1x2x384xf32>
    %457 = vector.shape_cast %456 : vector<1x2x384xf32> to vector<2x384xf32>
    %458 = arith.truncf %452 : vector<2x128xf32> to vector<2x128xbf16>
    %cst_143 = arith.constant dense<0.000000e+00> : vector<2x384xf32>
    %459 = tpu.matmul %458, %31, %cst_143 {dimension_numbers = #tpu.dot_dimension_numbers<[1], [0], [0], [1], [0, 0, 1, 1], [], []>} : vector<2x128xbf16>, vector<128x384xbf16>, vector<2x384xf32> -> vector<2x384xf32>
    %460 = vector.extract_strided_slice %457 {offsets = [0, 0], sizes = [2, 256], strides = [1, 1]} : vector<2x384xf32> to vector<2x256xf32>
    %461 = vector.extract_strided_slice %459 {offsets = [0, 0], sizes = [2, 256], strides = [1, 1]} : vector<2x384xf32> to vector<2x256xf32>
    %462 = arith.addf %460, %461 : vector<2x256xf32>
    %463 = arith.negf %462 : vector<2x256xf32>
    %464 = math.exp %463 : vector<2x256xf32>
    %cst_144 = arith.constant 1.000000e+00 : f32
    %465 = vector.broadcast %cst_144 : f32 to vector<2x256xf32>
    %466 = arith.addf %465, %464 : vector<2x256xf32>
    %467 = arith.divf %465, %466 : vector<2x256xf32>
    %468 = vector.extract_strided_slice %467 {offsets = [0, 0], sizes = [2, 128], strides = [1, 1]} : vector<2x256xf32> to vector<2x128xf32>
    %469 = vector.extract_strided_slice %467 {offsets = [0, 128], sizes = [2, 128], strides = [1, 1]} : vector<2x256xf32> to vector<2x128xf32>
    %470 = vector.extract_strided_slice %457 {offsets = [0, 256], sizes = [2, 128], strides = [1, 1]} : vector<2x384xf32> to vector<2x128xf32>
    %471 = vector.extract_strided_slice %459 {offsets = [0, 256], sizes = [2, 128], strides = [1, 1]} : vector<2x384xf32> to vector<2x128xf32>
    %472 = arith.addf %471, %34 : vector<2x128xf32>
    %473 = arith.mulf %468, %472 : vector<2x128xf32>
    %474 = arith.addf %470, %473 : vector<2x128xf32>
    %475 = math.tanh %474 : vector<2x128xf32>
    %cst_145 = arith.constant 1.000000e+00 : f32
    %476 = vector.broadcast %cst_145 : f32 to vector<2x128xf32>
    %477 = arith.subf %476, %469 : vector<2x128xf32>
    %478 = arith.mulf %477, %475 : vector<2x128xf32>
    %479 = arith.mulf %469, %452 : vector<2x128xf32>
    %480 = arith.addf %478, %479 : vector<2x128xf32>
    %c0_146 = arith.constant 0 : index
    %c15_147 = arith.constant 15 : index
    %c0_148 = arith.constant 0 : index
    %481 = vector.load %arg8[%c0_146, %c15_147, %c0_148] : memref<2x16x128xf32, #tpu.memory_space<vmem>>, vector<2x1x128xf32>
    %482 = vector.shape_cast %481 : vector<2x1x128xf32> to vector<2x128xf32>
    %483 = vector.shape_cast %480 : vector<2x128xf32> to vector<2x1x128xf32>
    tpu.vector_store %arg8[%c0_146, %c15_147, %c0_148], %483 {strides = array<i32>} : memref<2x16x128xf32, #tpu.memory_space<vmem>>, vector<2x1x128xf32>,
    %c0_149 = arith.constant 0 : index
    %c0_150 = arith.constant 0 : index
    %c0_151 = arith.constant 0 : index
    %484 = vector.load %arg8[%c0_149, %c0_150, %c0_151] : memref<2x16x128xf32, #tpu.memory_space<vmem>>, vector<2x16x128xf32>
    %485 = vector.shape_cast %484 : vector<2x16x128xf32> to vector<32x128xf32>
    %486 = arith.truncf %485 : vector<32x128xf32> to vector<32x128xbf16>
    %c0_152 = arith.constant 0 : index
    %c0_153 = arith.constant 0 : index
    %487 = vector.load %arg3[%c0_152, %c0_153] : memref<128x128xbf16, #tpu.memory_space<vmem>>, vector<128x128xbf16>
    %cst_154 = arith.constant dense<0.000000e+00> : vector<32x128xf32>
    %488 = tpu.matmul %486, %487, %cst_154 {dimension_numbers = #tpu.dot_dimension_numbers<[1], [0], [0], [1], [0, 0, 1, 1], [], []>} : vector<32x128xbf16>, vector<128x128xbf16>, vector<32x128xf32> -> vector<32x128xf32>
    %c0_155 = arith.constant 0 : index
    %c512 = arith.constant 512 : index
    %489 = vector.load %arg5[%c0_155, %c512] : memref<1x1024xf32, #tpu.memory_space<vmem>>, vector<1x128xf32>
    %490 = vector.broadcast %489 : vector<1x128xf32> to vector<32x128xf32>
    %491 = arith.addf %488, %490 : vector<32x128xf32>
    %492 = vector.extract_strided_slice %491 {offsets = [0, 0], sizes = [32, 32], strides = [1, 1]} : vector<32x128xf32> to vector<32x32xf32>
    %493 = vector.extract_strided_slice %491 {offsets = [0, 32], sizes = [32, 32], strides = [1, 1]} : vector<32x128xf32> to vector<32x32xf32>
    %494 = vector.shape_cast %493 : vector<32x32xf32> to vector<2x16x32xf32>
    %495 = vector.extract_strided_slice %491 {offsets = [0, 64], sizes = [32, 32], strides = [1, 1]} : vector<32x128xf32> to vector<32x32xf32>
    %496 = vector.shape_cast %495 : vector<32x32xf32> to vector<2x16x32xf32>
    %497 = vector.extract_strided_slice %491 {offsets = [0, 96], sizes = [32, 32], strides = [1, 1]} : vector<32x128xf32> to vector<32x32xf32>
    %498 = vector.shape_cast %497 : vector<32x32xf32> to vector<2x16x32xf32>
    "tpu.trace_start"() <{level = 10 : i32, message = "btd,bsd->bts"}> : () -> ()
    %cst_156 = arith.constant dense<0.000000e+00> : vector<2x16x16xf32>
    %499 = tpu.matmul %494, %496, %cst_156 {dimension_numbers = #tpu.dot_dimension_numbers<[2], [2], [1], [1], [0, 0, 0, 1, 1, 1], [0], [0]>} : vector<2x16x32xf32>, vector<2x16x32xf32>, vector<2x16x16xf32> -> vector<2x16x16xf32>
    "tpu.trace_stop"() : () -> ()
    %cst_157 = arith.constant 0.176776692 : f32
    %500 = vector.broadcast %cst_157 : f32 to vector<2x16x16xf32>
    %501 = arith.mulf %499, %500 : vector<2x16x16xf32>
    %cst_158 = arith.constant dense<0xFF800000> : vector<2x16xf32>
    %502 = vector.multi_reduction <maximumf>, %501, %cst_158 [2] : vector<2x16x16xf32> to vector<2x16xf32>
    %503 = vector.shape_cast %502 : vector<2x16xf32> to vector<2x16x1xf32>
    %504 = vector.broadcast %503 : vector<2x16x1xf32> to vector<2x16x16xf32>
    %505 = arith.subf %501, %504 : vector<2x16x16xf32>
    %506 = math.exp %505 : vector<2x16x16xf32>
    %cst_159 = arith.constant dense<0.000000e+00> : vector<2x16xf32>
    %507 = vector.multi_reduction <add>, %506, %cst_159 [2] : vector<2x16x16xf32> to vector<2x16xf32>
    %508 = vector.shape_cast %507 : vector<2x16xf32> to vector<2x16x1xf32>
    %509 = tpu.reciprocal %508 {approx = true} : vector<2x16x1xf32> -> vector<2x16x1xf32>
    %510 = vector.broadcast %509 : vector<2x16x1xf32> to vector<2x16x16xf32>
    %511 = arith.mulf %506, %510 : vector<2x16x16xf32>
    "tpu.trace_start"() <{level = 10 : i32, message = "bts,bsd->btd"}> : () -> ()
    %cst_160 = arith.constant dense<0.000000e+00> : vector<2x16x32xf32>
    %512 = tpu.matmul %511, %498, %cst_160 {dimension_numbers = #tpu.dot_dimension_numbers<[2], [1], [1], [2], [0, 0, 0, 1, 1, 2], [0], [0]>} : vector<2x16x16xf32>, vector<2x16x32xf32>, vector<2x16x32xf32> -> vector<2x16x32xf32>
    "tpu.trace_stop"() : () -> ()
    %c0_161 = arith.constant 0 : index
    %c0_162 = arith.constant 0 : index
    %513 = vector.load %arg4[%c0_161, %c0_162] : memref<32x256xbf16, #tpu.memory_space<vmem>>, vector<32x32xbf16>
    %514 = vector.shape_cast %512 : vector<2x16x32xf32> to vector<32x32xf32>
    %515 = arith.truncf %514 : vector<32x32xf32> to vector<32x32xbf16>
    %cst_163 = arith.constant dense<0.000000e+00> : vector<32x32xf32>
    %516 = tpu.matmul %515, %513, %cst_163 {dimension_numbers = #tpu.dot_dimension_numbers<[1], [0], [0], [1], [0, 0, 1, 1], [], []>} : vector<32x32xbf16>, vector<32x32xbf16>, vector<32x32xf32> -> vector<32x32xf32>
    %c0_164 = arith.constant 0 : index
    %c640 = arith.constant 640 : index
    %517 = vector.load %arg5[%c0_164, %c640] : memref<1x1024xf32, #tpu.memory_space<vmem>>, vector<1x32xf32>
    %518 = vector.broadcast %517 : vector<1x32xf32> to vector<32x32xf32>
    %519 = arith.addf %516, %518 : vector<32x32xf32>
    %520 = arith.addf %492, %519 : vector<32x32xf32>
    %521 = vector.shape_cast %520 : vector<32x32xf32> to vector<2x16x32xf32>
    %c0_165 = arith.constant 0 : index
    %c896 = arith.constant 896 : index
    %522 = vector.load %arg5[%c0_165, %c896] : memref<1x1024xf32, #tpu.memory_space<vmem>>, vector<1x32xf32>
    %523 = vector.shape_cast %522 : vector<1x32xf32> to vector<1x1x32xf32>
    %524 = vector.broadcast %523 : vector<1x1x32xf32> to vector<2x16x32xf32>
    %525 = arith.mulf %521, %524 : vector<2x16x32xf32>
    %cst_166 = arith.constant dense<0.000000e+00> : vector<2x16xf32>
    %526 = vector.multi_reduction <add>, %525, %cst_166 [2] : vector<2x16x32xf32> to vector<2x16xf32>
    %527 = vector.shape_cast %526 : vector<2x16xf32> to vector<2x16x1xf32>
    %cst_167 = arith.constant dense<0xFF800000> : vector<2x1xf32>
    %528 = vector.multi_reduction <maximumf>, %527, %cst_167 [1] : vector<2x16x1xf32> to vector<2x1xf32>
    %529 = vector.shape_cast %528 : vector<2x1xf32> to vector<2x1x1xf32>
    %530 = vector.broadcast %529 : vector<2x1x1xf32> to vector<2x16x1xf32>
    %531 = arith.subf %527, %530 : vector<2x16x1xf32>
    %532 = math.exp %531 : vector<2x16x1xf32>
    %cst_168 = arith.constant dense<0.000000e+00> : vector<2x1xf32>
    %533 = vector.multi_reduction <add>, %532, %cst_168 [1] : vector<2x16x1xf32> to vector<2x1xf32>
    %534 = vector.shape_cast %533 : vector<2x1xf32> to vector<2x1x1xf32>
    %535 = tpu.reciprocal %534 {approx = true} : vector<2x1x1xf32> -> vector<2x1x1xf32>
    %536 = vector.broadcast %535 : vector<2x1x1xf32> to vector<2x16x1xf32>
    %537 = arith.mulf %532, %536 : vector<2x16x1xf32>
    %538 = vector.broadcast %537 : vector<2x16x1xf32> to vector<2x16x32xf32>
    %539 = arith.mulf %521, %538 : vector<2x16x32xf32>
    %cst_169 = arith.constant dense<0.000000e+00> : vector<2x32xf32>
    %540 = vector.multi_reduction <add>, %539, %cst_169 [1] : vector<2x16x32xf32> to vector<2x32xf32>
    %c0_170 = arith.constant 0 : index
    %c128 = arith.constant 128 : index
    %541 = vector.load %arg4[%c0_170, %c128] : memref<32x256xbf16, #tpu.memory_space<vmem>>, vector<32x10xbf16>
    %542 = arith.truncf %540 : vector<2x32xf32> to vector<2x32xbf16>
    %cst_171 = arith.constant dense<0.000000e+00> : vector<2x10xf32>
    %543 = tpu.matmul %542, %541, %cst_171 {dimension_numbers = #tpu.dot_dimension_numbers<[1], [0], [0], [1], [0, 0, 1, 1], [], []>} : vector<2x32xbf16>, vector<32x10xbf16>, vector<2x10xf32> -> vector<2x10xf32>
    %c0_172 = arith.constant 0 : index
    %c768 = arith.constant 768 : index
    %544 = vector.load %arg5[%c0_172, %c768] : memref<1x1024xf32, #tpu.memory_space<vmem>>, vector<1x10xf32>
    %545 = vector.broadcast %544 : vector<1x10xf32> to vector<2x10xf32>
    %546 = arith.addf %543, %545 : vector<2x10xf32>
    %c0_173 = arith.constant 0 : index
    %c0_174 = arith.constant 0 : index
    %547 = vector.load %arg6[%c0_173, %c0_174] : memref<2x10xf32, #tpu.memory_space<vmem>>, vector<2x10xf32>
    tpu.vector_store %arg6[%c0_173, %c0_174], %546 {strides = array<i32>} : memref<2x10xf32, #tpu.memory_space<vmem>>, vector<2x10xf32>,
    return
  }
}

</mosaic_0001>

<llo_original>
// kernel: tpu_custom_call.1
$region0: #{tpu_custom_call.1}
  #allocation0 [shape = 'u32[]', space=smem, size = 0x4, offset = 0x4, fixed_abs, tag = 'smem constant byte address 0x4 - core index']
  #allocation1 [shape = 'u32[72,128]{1,0:T(1,128)}', space=vmem, size = 0x9000, scoped, tag = 'internal scratch']
  #allocation2 [shape = 'f32[16,2,384]{2,1,0:T(2,128)}', space=vmem, size = 0xc000, scoped, tag = 'scratch operand']
  #allocation3 [shape = 'f32[2,16,128]{2,1,0:T(8,128)}', space=vmem, size = 0x4000, scoped, tag = 'scratch operand']
  %s0 = inlined_call_operand.hbm [shape: f32[16,2,64], index: 0, kind: input, shape index: {}]
  %s1 = inlined_call_operand.hbm [shape: bf16[64,384], index: 1, kind: input, shape index: {}]
  %s2 = inlined_call_operand.hbm [shape: bf16[128,384], index: 2, kind: input, shape index: {}]
  %s3 = inlined_call_operand.hbm [shape: bf16[128,128], index: 3, kind: input, shape index: {}]
  %s4 = inlined_call_operand.hbm [shape: bf16[32,256], index: 4, kind: input, shape index: {}]
  %s5 = inlined_call_operand.hbm [shape: f32[1,1024], index: 5, kind: input, shape index: {}]
  %s6 = inlined_call_operand.hbm [shape: f32[2,10], index: 6, kind: output, shape index: {}]
  %s7 = sld [smem:[#allocation0]]
  $region58: #{tpu_custom_call.1} parent=0
    _
  %s9 = ssub.s32 1, %s7
  %s10 = scalar_select 0, %s9, %s7
  $region1: #{tpu_custom_call.1} parent=0
    #allocation4 [shape = 'u8[16384]{0}', space=vmem, size = 0x4000, scoped, tag = 'input window, operand 0, single buffered']
    #allocation5 [shape = 's32[1]{0}', space=sflag, size = 0x4, scoped, tag = 'scoped memory for tpu_custom_call.1']
    #allocation6 [shape = 's32[1]{0}', space=sflag, size = 0x4, scoped, tag = 'scoped memory for tpu_custom_call.1']
    #allocation7 [shape = 'u8[49152]{0}', space=vmem, size = 0xc000, scoped, tag = 'input window, operand 1, single buffered']
    #allocation8 [shape = 's32[1]{0}', space=sflag, size = 0x4, scoped, tag = 'scoped memory for tpu_custom_call.1']
    #allocation9 [shape = 'u8[98304]{0}', space=vmem, size = 0x18000, scoped, tag = 'input window, operand 2, single buffered']
    #allocation10 [shape = 'u8[32768]{0}', space=vmem, size = 0x8000, scoped, tag = 'input window, operand 3, single buffered']
    #allocation11 [shape = 's32[1]{0}', space=sflag, size = 0x4, scoped, tag = 'scoped memory for tpu_custom_call.1']
    #allocation12 [shape = 'u8[16384]{0}', space=vmem, size = 0x4000, scoped, tag = 'input window, operand 4, single buffered']
    #allocation13 [shape = 'u8[4096]{0}', space=vmem, size = 0x1000, scoped, tag = 'input window, operand 5, single buffered']
    #allocation14 [shape = 's32[1]{0}', space=sflag, size = 0x4, scoped, tag = 'scoped memory for tpu_custom_call.1']
    #allocation15 [shape = 'u8[1024]{0}', space=vmem, size = 0x400, scoped, tag = 'output window, operand 0, single buffered']
    %11 = vsyncpa [#allocation5], 0
    %12 = vsyncpa [#allocation8], 0
    %13 = vsyncpa [#allocation11], 0
    %14 = vsyncpa [#allocation14], 0
    %15 = vsyncpa [#allocation6], 0
    // Predicated region
    $region2: #{tpu_custom_call.1} parent=1 // pred_check
      _
    $region3: #{tpu_custom_call.1} parent=1 // pred_check_branch
      %17 = sbr.rel (0) target = $region5
    $region4: #{tpu_custom_call.1} parent=1 // pred_region
      %19 = vsyncadd [#allocation5], 0
      %s20 = sshll.u32 %s0, 4
      %s21 = int_to_ptr.hbm [resolvable:$true] %s20
      %s22 = sshll.u32 [#allocation4], 4
      %s23 = int_to_ptr.vmem [resolvable:$true] %s22
      %28 = dma.hbm_to_vmem [thread:$0]  %s21, 512, %s23, [#allocation5], 32, 32, 2
    $region5: #{tpu_custom_call.1} parent=1 // pred_fallthru
      _
    // Predicated region
    $region6: #{tpu_custom_call.1} parent=1 // pred_check
      _
    $region7: #{tpu_custom_call.1} parent=1 // pred_check_branch
      %30 = sbr.rel (0) target = $region9
    $region8: #{tpu_custom_call.1} parent=1 // pred_region
      %32 = vsyncadd [#allocation8], 0
      %s33 = sshll.u32 %s1, 4
      %s34 = int_to_ptr.hbm [resolvable:$true] %s33
      %s35 = sshll.u32 [#allocation7], 4
      %s36 = int_to_ptr.vmem [resolvable:$true] %s35
      %41 = dma.hbm_to_vmem [thread:$0]  %s34, 1536, %s36, [#allocation8], 192, 192, 12
    $region9: #{tpu_custom_call.1} parent=1 // pred_fallthru
      _
    // Predicated region
    $region10: #{tpu_custom_call.1} parent=1 // pred_check
      _
    $region11: #{tpu_custom_call.1} parent=1 // pred_check_branch
      %43 = sbr.rel (0) target = $region13
    $region12: #{tpu_custom_call.1} parent=1 // pred_region
      %45 = vsyncadd [#allocation8], 0
      %s46 = sshll.u32 %s2, 4
      %s47 = int_to_ptr.hbm [resolvable:$true] %s46
      %s48 = sshll.u32 [#allocation9], 4
      %s49 = int_to_ptr.vmem [resolvable:$true] %s48
      %54 = dma.hbm_to_vmem [thread:$0]  %s47, 3072, %s49, [#allocation8], 192, 192, 12
    $region13: #{tpu_custom_call.1} parent=1 // pred_fallthru
      _
    // Predicated region
    $region14: #{tpu_custom_call.1} parent=1 // pred_check
      _
    $region15: #{tpu_custom_call.1} parent=1 // pred_check_branch
      %56 = sbr.rel (0) target = $region17
    $region16: #{tpu_custom_call.1} parent=1 // pred_region
      %58 = vsyncadd [#allocation11], 0
      %s59 = sshll.u32 %s3, 4
      %s60 = int_to_ptr.hbm [resolvable:$true] %s59
      %s61 = sshll.u32 [#allocation10], 4
      %s62 = int_to_ptr.vmem [resolvable:$true] %s61
      %67 = dma.hbm_to_vmem [thread:$0]  %s60, 1024, %s62, [#allocation11], 64, 64, 4
    $region17: #{tpu_custom_call.1} parent=1 // pred_fallthru
      _
    // Predicated region
    $region18: #{tpu_custom_call.1} parent=1 // pred_check
      _
    $region19: #{tpu_custom_call.1} parent=1 // pred_check_branch
      %69 = sbr.rel (0) target = $region21
    $region20: #{tpu_custom_call.1} parent=1 // pred_region
      %71 = vsyncadd [#allocation11], 0
      %s72 = sshll.u32 %s4, 4
      %s73 = int_to_ptr.hbm [resolvable:$true] %s72
      %s74 = sshll.u32 [#allocation12], 4
      %s75 = int_to_ptr.vmem [resolvable:$true] %s74
      %80 = dma.hbm_to_vmem [thread:$0]  %s73, 512, %s75, [#allocation11], 128, 128, 8
    $region21: #{tpu_custom_call.1} parent=1 // pred_fallthru
      _
    // Predicated region
    $region22: #{tpu_custom_call.1} parent=1 // pred_check
      _
    $region23: #{tpu_custom_call.1} parent=1 // pred_check_branch
      %82 = sbr.rel (0) target = $region25
    $region24: #{tpu_custom_call.1} parent=1 // pred_region
      %84 = vsyncadd [#allocation14], 0
      %s86 = sshll.u32 %s5, 4
      %s87 = int_to_ptr.hbm [resolvable:$true] %s86
      %s88 = sshll.u32 [#allocation13], 4
      %s89 = int_to_ptr.vmem [resolvable:$true] %s88
      %91 = dma.hbm_to_vmem [thread:$0]  %s87, 128, %s89, [#allocation14]
    $region25: #{tpu_custom_call.1} parent=1 // pred_fallthru
      _
    // Predicated region
    $region26: #{tpu_custom_call.1} parent=1 // pred_check
      _
    $region27: #{tpu_custom_call.1} parent=1 // pred_check_branch
      %93 = sbr.rel (0) target = $region29
    $region28: #{tpu_custom_call.1} parent=1 // pred_region
      %95 = dma.done [#allocation5], 512
    $region29: #{tpu_custom_call.1} parent=1 // pred_fallthru
      _
    // Predicated region
    $region30: #{tpu_custom_call.1} parent=1 // pred_check
      _
    $region31: #{tpu_custom_call.1} parent=1 // pred_check_branch
      %97 = sbr.rel (0) target = $region33
    $region32: #{tpu_custom_call.1} parent=1 // pred_region
      %99 = dma.done [#allocation8], 1536
    $region33: #{tpu_custom_call.1} parent=1 // pred_fallthru
      _
    // Predicated region
    $region34: #{tpu_custom_call.1} parent=1 // pred_check
      _
    $region35: #{tpu_custom_call.1} parent=1 // pred_check_branch
      %101 = sbr.rel (0) target = $region37
    $region36: #{tpu_custom_call.1} parent=1 // pred_region
      %103 = dma.done [#allocation8], 3072
    $region37: #{tpu_custom_call.1} parent=1 // pred_fallthru
      _
    // Predicated region
    $region38: #{tpu_custom_call.1} parent=1 // pred_check
      _
    $region39: #{tpu_custom_call.1} parent=1 // pred_check_branch
      %105 = sbr.rel (0) target = $region41
    $region40: #{tpu_custom_call.1} parent=1 // pred_region
      %107 = dma.done [#allocation11], 1024
    $region41: #{tpu_custom_call.1} parent=1 // pred_fallthru
      _
    // Predicated region
    $region42: #{tpu_custom_call.1} parent=1 // pred_check
      _
    $region43: #{tpu_custom_call.1} parent=1 // pred_check_branch
      %109 = sbr.rel (0) target = $region45
    $region44: #{tpu_custom_call.1} parent=1 // pred_region
      %111 = dma.done [#allocation11], 512
    $region45: #{tpu_custom_call.1} parent=1 // pred_fallthru
      _
    // Predicated region
    $region46: #{tpu_custom_call.1} parent=1 // pred_check
      _
    $region47: #{tpu_custom_call.1} parent=1 // pred_check_branch
      %113 = sbr.rel (0) target = $region49
    $region48: #{tpu_custom_call.1} parent=1 // pred_region
      %115 = dma.done [#allocation14], 128
    $region49: #{tpu_custom_call.1} parent=1 // pred_fallthru
      _
    %v117 = vld [vmem:[#allocation4] sm:$0x3]
    %v118 = vld [vmem:[#allocation4 + $0x2] sm:$0x3]
    %v119 = vld [vmem:[#allocation4 + $0x4] sm:$0x3]
    %v120 = vld [vmem:[#allocation4 + $0x6] sm:$0x3]
    %v121 = vld [vmem:[#allocation4 + $0x8] sm:$0x3]
    %v122 = vld [vmem:[#allocation4 + $0xa] sm:$0x3]
    %v123 = vld [vmem:[#allocation4 + $0xc] sm:$0x3]
    %v124 = vld [vmem:[#allocation4 + $0xe] sm:$0x3]
    %v125 = vld [vmem:[#allocation4 + $0x10] sm:$0x3]
    %v126 = vld [vmem:[#allocation4 + $0x12] sm:$0x3]
    %v127 = vld [vmem:[#allocation4 + $0x14] sm:$0x3]
    %v128 = vld [vmem:[#allocation4 + $0x16] sm:$0x3]
    %v129 = vld [vmem:[#allocation4 + $0x18] sm:$0x3]
    %v130 = vld [vmem:[#allocation4 + $0x1a] sm:$0x3]
    %v131 = vld [vmem:[#allocation4 + $0x1c] sm:$0x3]
    %v132 = vld [vmem:[#allocation4 + $0x1e] sm:$0x3]
    %vm133 = vcmask 517120
    %v134 = vsel %vm133, %v117, 0.0
    %135 = vadd.xlane.f32.xlu0 %v134
    %v136 = vpop.xlane.xlu0 %135
    %v137 = vsel %vm133, %v118, 0.0
    %138 = vadd.xlane.f32.xlu0 %v137
    %v139 = vpop.xlane.xlu0 %138
    %v140 = vsel %vm133, %v119, 0.0
    %141 = vadd.xlane.f32.xlu0 %v140
    %v142 = vpop.xlane.xlu0 %141
    %v143 = vsel %vm133, %v120, 0.0
    %144 = vadd.xlane.f32.xlu0 %v143
    %v145 = vpop.xlane.xlu0 %144
    %v146 = vsel %vm133, %v121, 0.0
    %147 = vadd.xlane.f32.xlu0 %v146
    %v148 = vpop.xlane.xlu0 %147
    %v149 = vsel %vm133, %v122, 0.0
    %150 = vadd.xlane.f32.xlu0 %v149
    %v151 = vpop.xlane.xlu0 %150
    %v152 = vsel %vm133, %v123, 0.0
    %153 = vadd.xlane.f32.xlu0 %v152
    %v154 = vpop.xlane.xlu0 %153
    %v155 = vsel %vm133, %v124, 0.0
    %156 = vadd.xlane.f32.xlu0 %v155
    %v157 = vpop.xlane.xlu0 %156
    %v158 = vsel %vm133, %v125, 0.0
    %159 = vadd.xlane.f32.xlu0 %v158
    %v160 = vpop.xlane.xlu0 %159
    %v161 = vsel %vm133, %v126, 0.0
    %162 = vadd.xlane.f32.xlu0 %v161
    %v163 = vpop.xlane.xlu0 %162
    %v164 = vsel %vm133, %v127, 0.0
    %165 = vadd.xlane.f32.xlu0 %v164
    %v166 = vpop.xlane.xlu0 %165
    %v167 = vsel %vm133, %v128, 0.0
    %168 = vadd.xlane.f32.xlu0 %v167
    %v169 = vpop.xlane.xlu0 %168
    %v170 = vsel %vm133, %v129, 0.0
    %171 = vadd.xlane.f32.xlu0 %v170
    %v172 = vpop.xlane.xlu0 %171
    %v173 = vsel %vm133, %v130, 0.0
    %174 = vadd.xlane.f32.xlu0 %v173
    %v175 = vpop.xlane.xlu0 %174
    %v176 = vsel %vm133, %v131, 0.0
    %177 = vadd.xlane.f32.xlu0 %v176
    %v178 = vpop.xlane.xlu0 %177
    %v179 = vsel %vm133, %v132, 0.0
    %180 = vadd.xlane.f32.xlu0 %v179
    %v181 = vpop.xlane.xlu0 %180
    %vm182 = vcmask 1041408
    %v183 = vsel %vm182, %v136, 0.0
    %v184 = vsel %vm182, %v139, 0.0
    %v185 = vadd.f32 %v183, %v184
    %v186 = vsel %vm182, %v142, 0.0
    %v187 = vadd.f32 %v185, %v186
    %v188 = vsel %vm182, %v145, 0.0
    %v189 = vadd.f32 %v187, %v188
    %v190 = vsel %vm182, %v148, 0.0
    %v191 = vadd.f32 %v189, %v190
    %v192 = vsel %vm182, %v151, 0.0
    %v193 = vadd.f32 %v191, %v192
    %v194 = vsel %vm182, %v154, 0.0
    %v195 = vadd.f32 %v193, %v194
    %v196 = vsel %vm182, %v157, 0.0
    %v197 = vadd.f32 %v195, %v196
    %v198 = vsel %vm182, %v160, 0.0
    %v199 = vadd.f32 %v197, %v198
    %v200 = vsel %vm182, %v163, 0.0
    %v201 = vadd.f32 %v199, %v200
    %v202 = vsel %vm182, %v166, 0.0
    %v203 = vadd.f32 %v201, %v202
    %v204 = vsel %vm182, %v169, 0.0
    %v205 = vadd.f32 %v203, %v204
    %v206 = vsel %vm182, %v172, 0.0
    %v207 = vadd.f32 %v205, %v206
    %v208 = vsel %vm182, %v175, 0.0
    %v209 = vadd.f32 %v207, %v208
    %v210 = vsel %vm182, %v178, 0.0
    %v211 = vadd.f32 %v209, %v210
    %v212 = vsel %vm182, %v181, 0.0
    %v213 = vadd.f32 %v211, %v212
    %v214 = vmul.f32 %v213, 0.0009765625
    %v215 = vsub.f32 %v117, %v214
    %v216 = vsub.f32 %v118, %v214
    %v217 = vsub.f32 %v119, %v214
    %v218 = vsub.f32 %v120, %v214
    %v219 = vsub.f32 %v121, %v214
    %v220 = vsub.f32 %v122, %v214
    %v221 = vsub.f32 %v123, %v214
    %v222 = vsub.f32 %v124, %v214
    %v223 = vsub.f32 %v125, %v214
    %v224 = vsub.f32 %v126, %v214
    %v225 = vsub.f32 %v127, %v214
    %v226 = vsub.f32 %v128, %v214
    %v227 = vsub.f32 %v129, %v214
    %v228 = vsub.f32 %v130, %v214
    %v229 = vsub.f32 %v131, %v214
    %v230 = vsub.f32 %v132, %v214
    %v231 = vmul.f32 %v215, %v215
    %v232 = vmul.f32 %v216, %v216
    %v233 = vmul.f32 %v217, %v217
    %v234 = vmul.f32 %v218, %v218
    %v235 = vmul.f32 %v219, %v219
    %v236 = vmul.f32 %v220, %v220
    %v237 = vmul.f32 %v221, %v221
    %v238 = vmul.f32 %v222, %v222
    %v239 = vmul.f32 %v223, %v223
    %v240 = vmul.f32 %v224, %v224
    %v241 = vmul.f32 %v225, %v225
    %v242 = vmul.f32 %v226, %v226
    %v243 = vmul.f32 %v227, %v227
    %v244 = vmul.f32 %v228, %v228
    %v245 = vmul.f32 %v229, %v229
    %v246 = vmul.f32 %v230, %v230
    %v247 = vsel %vm133, %v231, 0.0
    %248 = vadd.xlane.f32.xlu0 %v247
    %v249 = vpop.xlane.xlu0 %248
    %v250 = vsel %vm133, %v232, 0.0
    %251 = vadd.xlane.f32.xlu0 %v250
    %v252 = vpop.xlane.xlu0 %251
    %v253 = vsel %vm133, %v233, 0.0
    %254 = vadd.xlane.f32.xlu0 %v253
    %v255 = vpop.xlane.xlu0 %254
    %v256 = vsel %vm133, %v234, 0.0
    %257 = vadd.xlane.f32.xlu0 %v256
    %v258 = vpop.xlane.xlu0 %257
    %v259 = vsel %vm133, %v235, 0.0
    %260 = vadd.xlane.f32.xlu0 %v259
    %v261 = vpop.xlane.xlu0 %260
    %v262 = vsel %vm133, %v236, 0.0
    %263 = vadd.xlane.f32.xlu0 %v262
    %v264 = vpop.xlane.xlu0 %263
    %v265 = vsel %vm133, %v237, 0.0
    %266 = vadd.xlane.f32.xlu0 %v265
    %v267 = vpop.xlane.xlu0 %266
    %v268 = vsel %vm133, %v238, 0.0
    %269 = vadd.xlane.f32.xlu0 %v268
    %v270 = vpop.xlane.xlu0 %269
    %v271 = vsel %vm133, %v239, 0.0
    %272 = vadd.xlane.f32.xlu0 %v271
    %v273 = vpop.xlane.xlu0 %272
    %v274 = vsel %vm133, %v240, 0.0
    %275 = vadd.xlane.f32.xlu0 %v274
    %v276 = vpop.xlane.xlu0 %275
    %v277 = vsel %vm133, %v241, 0.0
    %278 = vadd.xlane.f32.xlu0 %v277
    %v279 = vpop.xlane.xlu0 %278
    %v280 = vsel %vm133, %v242, 0.0
    %281 = vadd.xlane.f32.xlu0 %v280
    %v282 = vpop.xlane.xlu0 %281
    %v283 = vsel %vm133, %v243, 0.0
    %284 = vadd.xlane.f32.xlu0 %v283
    %v285 = vpop.xlane.xlu0 %284
    %v286 = vsel %vm133, %v244, 0.0
    %287 = vadd.xlane.f32.xlu0 %v286
    %v288 = vpop.xlane.xlu0 %287
    %v289 = vsel %vm133, %v245, 0.0
    %290 = vadd.xlane.f32.xlu0 %v289
    %v291 = vpop.xlane.xlu0 %290
    %v292 = vsel %vm133, %v246, 0.0
    %293 = vadd.xlane.f32.xlu0 %v292
    %v294 = vpop.xlane.xlu0 %293
    %v295 = vsel %vm182, %v249, 0.0
    %v296 = vsel %vm182, %v252, 0.0
    %v297 = vadd.f32 %v295, %v296
    %v298 = vsel %vm182, %v255, 0.0
    %v299 = vadd.f32 %v297, %v298
    %v300 = vsel %vm182, %v258, 0.0
    %v301 = vadd.f32 %v299, %v300
    %v302 = vsel %vm182, %v261, 0.0
    %v303 = vadd.f32 %v301, %v302
    %v304 = vsel %vm182, %v264, 0.0
    %v305 = vadd.f32 %v303, %v304
    %v306 = vsel %vm182, %v267, 0.0
    %v307 = vadd.f32 %v305, %v306
    %v308 = vsel %vm182, %v270, 0.0
    %v309 = vadd.f32 %v307, %v308
    %v310 = vsel %vm182, %v273, 0.0
    %v311 = vadd.f32 %v309, %v310
    %v312 = vsel %vm182, %v276, 0.0
    %v313 = vadd.f32 %v311, %v312
    %v314 = vsel %vm182, %v279, 0.0
    %v315 = vadd.f32 %v313, %v314
    %v316 = vsel %vm182, %v282, 0.0
    %v317 = vadd.f32 %v315, %v316
    %v318 = vsel %vm182, %v285, 0.0
    %v319 = vadd.f32 %v317, %v318
    %v320 = vsel %vm182, %v288, 0.0
    %v321 = vadd.f32 %v319, %v320
    %v322 = vsel %vm182, %v291, 0.0
    %v323 = vadd.f32 %v321, %v322
    %v324 = vsel %vm182, %v294, 0.0
    %v325 = vadd.f32 %v323, %v324
    %v326 = vmul.f32 %v325, 0.0009775171
    %v327 = vrsqrt.pop %v326
    %v328 = vmul.f32 %v327, %v326
    %v329 = vmul.f32 %v328, %v327
    %v330 = vmul.f32 0.5, %v329
    %v331 = vsub.f32 1.5, %v330
    %v332 = vmul.f32 %v327, %v331
    %v333 = vmul.f32 %v326, %v332
    %vm334 = vcmp.eq.f32.partialorder %v326, inf
    %v335 = vsel %vm334, %v326, %v333
    %vm336 = vcmp.eq.f32.partialorder %v326, 0.0
    %v337 = vand.u32 %v326, 2147483648
    %v338 = vsel %vm336, %v337, %v335
    %v339 = vadd.f32 %v338, 1e-05
    %v340 = vrcp.pop %v339
    %v341 = vmul.f32 %v215, %v340
    %v342 = vmul.f32 %v216, %v340
    %v343 = vmul.f32 %v217, %v340
    %v344 = vmul.f32 %v218, %v340
    %v345 = vmul.f32 %v219, %v340
    %v346 = vmul.f32 %v220, %v340
    %v347 = vmul.f32 %v221, %v340
    %v348 = vmul.f32 %v222, %v340
    %v349 = vmul.f32 %v223, %v340
    %v350 = vmul.f32 %v224, %v340
    %v351 = vmul.f32 %v225, %v340
    %v352 = vmul.f32 %v226, %v340
    %v353 = vmul.f32 %v227, %v340
    %v354 = vmul.f32 %v228, %v340
    %v355 = vmul.f32 %v229, %v340
    %v356 = vmul.f32 %v230, %v340
    %v357 = vld [vmem:[#allocation13] sm:$0x7]
    %374 = vst [vmem:[#allocation1] ss:$4 sm:$0xff] %v341
    %s375 = scalar_lea.vmem [#allocation1], 1
    %376 = vst [vmem:[%s375] ss:$4 sm:$0xff] %v342
    %s377 = scalar_lea.vmem [#allocation1], 2
    %378 = vst [vmem:[%s377] ss:$4 sm:$0xff] %v343
    %s379 = scalar_lea.vmem [#allocation1], 3
    %380 = vst [vmem:[%s379] ss:$4 sm:$0xff] %v344
    %s381 = scalar_lea.vmem [#allocation1], 32
    %382 = vst [vmem:[%s381] ss:$4 sm:$0xff] %v345
    %s383 = scalar_lea.vmem [#allocation1], 33
    %384 = vst [vmem:[%s383] ss:$4 sm:$0xff] %v346
    %s385 = scalar_lea.vmem [#allocation1], 34
    %386 = vst [vmem:[%s385] ss:$4 sm:$0xff] %v347
    %s387 = scalar_lea.vmem [#allocation1], 35
    %388 = vst [vmem:[%s387] ss:$4 sm:$0xff] %v348
    %v389 = vld.sshfl [vmem:[#allocation1] sm:$0xff pattern:$0x73625140]
    %v390 = vld.sshfl [vmem:[#allocation1 + $0x20] sm:$0xff pattern:$0x73625140]
    %391 = vst [vmem:[#allocation1] ss:$4 sm:$0xff] %v349
    %392 = vst [vmem:[%s375] ss:$4 sm:$0xff] %v350
    %393 = vst [vmem:[%s377] ss:$4 sm:$0xff] %v351
    %394 = vst [vmem:[%s379] ss:$4 sm:$0xff] %v352
    %395 = vst [vmem:[%s381] ss:$4 sm:$0xff] %v353
    %396 = vst [vmem:[%s383] ss:$4 sm:$0xff] %v354
    %397 = vst [vmem:[%s385] ss:$4 sm:$0xff] %v355
    %398 = vst [vmem:[%s387] ss:$4 sm:$0xff] %v356
    %v399 = vld.sshfl [vmem:[#allocation1] sm:$0xff pattern:$0x73625140]
    %v400 = vld.sshfl [vmem:[#allocation1 + $0x20] sm:$0xff pattern:$0x73625140]
    %v405 = vpack.c.bf16 %v390, %v389
    %v406 = vpack.c.bf16 %v400, %v399
    %v407 = vld [vmem:[#allocation7] sm:$0xff]
    %v408 = vld [vmem:[#allocation7 + $0x8] sm:$0xf]
    %v409 = vld [vmem:[#allocation7 + $0xc] sm:$0xff]
    %v410 = vld [vmem:[#allocation7 + $0x14] sm:$0xf]
    %v411 = vld [vmem:[#allocation7 + $0x18] sm:$0xff]
    %v412 = vld [vmem:[#allocation7 + $0x20] sm:$0xf]
    %v413 = vld [vmem:[#allocation7 + $0x24] sm:$0xff]
    %v414 = vld [vmem:[#allocation7 + $0x2c] sm:$0xf]
    %v415 = vld [vmem:[#allocation7 + $0x30] sm:$0xff]
    %v416 = vld [vmem:[#allocation7 + $0x38] sm:$0xf]
    %v417 = vld [vmem:[#allocation7 + $0x3c] sm:$0xff]
    %v418 = vld [vmem:[#allocation7 + $0x44] sm:$0xf]
    %v419 = vld [vmem:[#allocation7 + $0x48] sm:$0xff]
    %v420 = vld [vmem:[#allocation7 + $0x50] sm:$0xf]
    %v421 = vld [vmem:[#allocation7 + $0x54] sm:$0xff]
    %v422 = vld [vmem:[#allocation7 + $0x5c] sm:$0xf]
    %v424 = vperm.slane %v357, 0
    %v425 = vperm.slane %v357, 1
    %v426 = vperm.slane %v357, 2
    %v446 = vunpack.c.l.b16 %v407
    %v447 = vunpack.c.h.b16 %v407
    %v448 = vunpack.c.l.b16 %v408
    %v449 = vunpack.c.l.b16 %v409
    %v450 = vunpack.c.h.b16 %v409
    %v451 = vunpack.c.l.b16 %v410
    %v452 = vunpack.c.l.b16 %v411
    %v453 = vunpack.c.h.b16 %v411
    %v454 = vunpack.c.l.b16 %v412
    %v455 = vunpack.c.l.b16 %v413
    %v456 = vunpack.c.h.b16 %v413
    %v457 = vunpack.c.l.b16 %v414
    %v458 = vunpack.c.l.b16 %v415
    %v459 = vunpack.c.h.b16 %v415
    %v460 = vunpack.c.l.b16 %v416
    %v461 = vunpack.c.l.b16 %v417
    %v462 = vunpack.c.h.b16 %v417
    %v463 = vunpack.c.l.b16 %v418
    %v464 = vunpack.c.l.b16 %v419
    %v465 = vunpack.c.h.b16 %v419
    %v466 = vunpack.c.l.b16 %v420
    %v467 = vunpack.c.l.b16 %v421
    %v468 = vunpack.c.h.b16 %v421
    %v469 = vunpack.c.l.b16 %v422
    %v470 = vpack.c.b16 %v449, %v446
    %v471 = vpack.c.b16 %v450, %v447
    %v472 = vpack.c.b16 %v451, %v448
    %v473 = vpack.c.b16 %v455, %v452
    %v474 = vpack.c.b16 %v456, %v453
    %v475 = vpack.c.b16 %v457, %v454
    %v476 = vpack.c.b16 %v461, %v458
    %v477 = vpack.c.b16 %v462, %v459
    %v478 = vpack.c.b16 %v463, %v460
    %v479 = vpack.c.b16 %v467, %v464
    %v480 = vpack.c.b16 %v468, %v465
    %v481 = vpack.c.b16 %v469, %v466
    %vm494 = vcmask 523264
    %v496 = vsel %vm494, %v405, 0
    %v499 = vsel %vm494, %v406, 0
    %501 = vmatpush.bf16.msra.mxu0 0
    %502 = vmatpush.bf16.msra.mxu0 0
    %503 = vmatpush.bf16.msra.mxu0 0
    %504 = vmatpush.bf16.msra.mxu0 0
    %505 = vmatpush.bf16.msra.mxu0 %v479
    %506 = vmatpush.bf16.msra.mxu0 %v476
    %507 = vmatpush.bf16.msra.mxu0 %v473
    %508 = vmatpush.bf16.msra.mxu0 %v470
    %509 = vmatmul.bf16.gmra.mxu0 %v496
    %v510 = vpop.f32.mrf.mxu0
    %v511 = vadd.f32 %v424, %v510
    %v512 = vpop.f32.mrf.mxu0
    %v513 = vadd.f32 %v424, %v512
    %514 = vmatmul.bf16.gmra.mxu0 %v499
    %v515 = vpop.f32.mrf.mxu0
    %v516 = vadd.f32 %v424, %v515
    %v517 = vpop.f32.mrf.mxu0
    %v518 = vadd.f32 %v424, %v517
    %519 = vdwg.mxu0
    %520 = vmatpush.bf16.msra.mxu0 0
    %521 = vmatpush.bf16.msra.mxu0 0
    %522 = vmatpush.bf16.msra.mxu0 0
    %523 = vmatpush.bf16.msra.mxu0 0
    %524 = vmatpush.bf16.msra.mxu0 %v480
    %525 = vmatpush.bf16.msra.mxu0 %v477
    %526 = vmatpush.bf16.msra.mxu0 %v474
    %527 = vmatpush.bf16.msra.mxu0 %v471
    %528 = vmatmul.bf16.gmra.mxu0 %v496
    %v529 = vpop.f32.mrf.mxu0
    %v530 = vadd.f32 %v425, %v529
    %v531 = vpop.f32.mrf.mxu0
    %v532 = vadd.f32 %v425, %v531
    %533 = vmatmul.bf16.gmra.mxu0 %v499
    %v534 = vpop.f32.mrf.mxu0
    %v535 = vadd.f32 %v425, %v534
    %v536 = vpop.f32.mrf.mxu0
    %v537 = vadd.f32 %v425, %v536
    %538 = vdwg.mxu0
    %539 = vmatpush.bf16.msra.mxu0 0
    %540 = vmatpush.bf16.msra.mxu0 0
    %541 = vmatpush.bf16.msra.mxu0 0
    %542 = vmatpush.bf16.msra.mxu0 0
    %543 = vmatpush.bf16.msra.mxu0 %v481
    %544 = vmatpush.bf16.msra.mxu0 %v478
    %545 = vmatpush.bf16.msra.mxu0 %v475
    %546 = vmatpush.bf16.msra.mxu0 %v472
    %547 = vmatmul.bf16.gmra.mxu0 %v496
    %v548 = vpop.f32.mrf.mxu0
    %v549 = vadd.f32 %v426, %v548
    %v550 = vpop.f32.mrf.mxu0
    %v551 = vadd.f32 %v426, %v550
    %552 = vmatmul.bf16.gmra.mxu0 %v499
    %v553 = vpop.f32.mrf.mxu0
    %v554 = vadd.f32 %v426, %v553
    %v555 = vpop.f32.mrf.mxu0
    %v556 = vadd.f32 %v426, %v555
    %557 = vdwg.mxu0
    %v570 = vrot.slane %v530, 6
    %v571 = vrot.slane %v549, 4
    %v572 = vrot.slane %v532, 6
    %v573 = vrot.slane %v551, 4
    %v574 = vrot.slane %v535, 6
    %v575 = vrot.slane %v554, 4
    %v576 = vrot.slane %v537, 6
    %v577 = vrot.slane %v556, 4
    %v578 = vsel %vm182, %v511, %v570
    %vm579 = vcmask 1043456
    %v580 = vsel %vm579, %v578, %v571
    %vm581 = vcmask 1043458
    %v582 = vsel %vm581, %v511, %v570
    %vm583 = vcmask 1045506
    %v584 = vsel %vm583, %v582, %v571
    %v585 = vrot.slane %v584, 2
    %vm586 = vcmask 1045508
    %v587 = vsel %vm586, %v511, %v570
    %v588 = vsel %vm579, %v571, %v587
    %v589 = vrot.slane %v588, 4
    %vm590 = vcmask 1045504
    %v591 = vsel %vm590, %v570, %v511
    %v592 = vsel %vm583, %v571, %v591
    %v593 = vrot.slane %v592, 6
    %v594 = vsel %vm182, %v513, %v572
    %v595 = vsel %vm579, %v594, %v573
    %v596 = vsel %vm581, %v513, %v572
    %v597 = vsel %vm583, %v596, %v573
    %v598 = vrot.slane %v597, 2
    %v599 = vsel %vm586, %v513, %v572
    %v600 = vsel %vm579, %v573, %v599
    %v601 = vrot.slane %v600, 4
    %v602 = vsel %vm590, %v572, %v513
    %v603 = vsel %vm583, %v573, %v602
    %v604 = vrot.slane %v603, 6
    %v605 = vsel %vm182, %v516, %v574
    %v606 = vsel %vm579, %v605, %v575
    %v607 = vsel %vm581, %v516, %v574
    %v608 = vsel %vm583, %v607, %v575
    %v609 = vrot.slane %v608, 2
    %v610 = vsel %vm586, %v516, %v574
    %v611 = vsel %vm579, %v575, %v610
    %v612 = vrot.slane %v611, 4
    %v613 = vsel %vm590, %v574, %v516
    %v614 = vsel %vm583, %v575, %v613
    %v615 = vrot.slane %v614, 6
    %v616 = vsel %vm182, %v518, %v576
    %v617 = vsel %vm579, %v616, %v577
    %v618 = vsel %vm581, %v518, %v576
    %v619 = vsel %vm583, %v618, %v577
    %v620 = vrot.slane %v619, 2
    %v621 = vsel %vm586, %v518, %v576
    %v622 = vsel %vm579, %v577, %v621
    %v623 = vrot.slane %v622, 4
    %v624 = vsel %vm590, %v576, %v518
    %v625 = vsel %vm583, %v577, %v624
    %v626 = vrot.slane %v625, 6
    %643 = vst [vmem:[#allocation2] sm:$0x3f] %v580
    %644 = vst [vmem:[#allocation2 + $0x6] sm:$0x3f] %v585
    %645 = vst [vmem:[#allocation2 + $0xc] sm:$0x3f] %v589
    %646 = vst [vmem:[#allocation2 + $0x12] sm:$0x3f] %v593
    %647 = vst [vmem:[#allocation2 + $0x18] sm:$0x3f] %v595
    %648 = vst [vmem:[#allocation2 + $0x1e] sm:$0x3f] %v598
    %649 = vst [vmem:[#allocation2 + $0x24] sm:$0x3f] %v601
    %650 = vst [vmem:[#allocation2 + $0x2a] sm:$0x3f] %v604
    %651 = vst [vmem:[#allocation2 + $0x30] sm:$0x3f] %v606
    %652 = vst [vmem:[#allocation2 + $0x36] sm:$0x3f] %v609
    %653 = vst [vmem:[#allocation2 + $0x3c] sm:$0x3f] %v612
    %654 = vst [vmem:[#allocation2 + $0x42] sm:$0x3f] %v615
    %655 = vst [vmem:[#allocation2 + $0x48] sm:$0x3f] %v617
    %656 = vst [vmem:[#allocation2 + $0x4e] sm:$0x3f] %v620
    %657 = vst [vmem:[#allocation2 + $0x54] sm:$0x3f] %v623
    %658 = vst [vmem:[#allocation2 + $0x5a] sm:$0x3f] %v626
    %v659 = vld [vmem:[#allocation9] sm:$0xff]
    %v660 = vld [vmem:[#allocation9 + $0x8] sm:$0xf]
    %v661 = vld [vmem:[#allocation9 + $0xc] sm:$0xff]
    %v662 = vld [vmem:[#allocation9 + $0x14] sm:$0xf]
    %v663 = vld [vmem:[#allocation9 + $0x18] sm:$0xff]
    %v664 = vld [vmem:[#allocation9 + $0x20] sm:$0xf]
    %v665 = vld [vmem:[#allocation9 + $0x24] sm:$0xff]
    %v666 = vld [vmem:[#allocation9 + $0x2c] sm:$0xf]
    %v667 = vld [vmem:[#allocation9 + $0x30] sm:$0xff]
    %v668 = vld [vmem:[#allocation9 + $0x38] sm:$0xf]
    %v669 = vld [vmem:[#allocation9 + $0x3c] sm:$0xff]
    %v670 = vld [vmem:[#allocation9 + $0x44] sm:$0xf]
    %v671 = vld [vmem:[#allocation9 + $0x48] sm:$0xff]
    %v672 = vld [vmem:[#allocation9 + $0x50] sm:$0xf]
    %v673 = vld [vmem:[#allocation9 + $0x54] sm:$0xff]
    %v674 = vld [vmem:[#allocation9 + $0x5c] sm:$0xf]
    %v675 = vld [vmem:[#allocation9 + $0x60] sm:$0xff]
    %v676 = vld [vmem:[#allocation9 + $0x68] sm:$0xf]
    %v677 = vld [vmem:[#allocation9 + $0x6c] sm:$0xff]
    %v678 = vld [vmem:[#allocation9 + $0x74] sm:$0xf]
    %v679 = vld [vmem:[#allocation9 + $0x78] sm:$0xff]
    %v680 = vld [vmem:[#allocation9 + $0x80] sm:$0xf]
    %v681 = vld [vmem:[#allocation9 + $0x84] sm:$0xff]
    %v682 = vld [vmem:[#allocation9 + $0x8c] sm:$0xf]
    %v683 = vld [vmem:[#allocation9 + $0x90] sm:$0xff]
    %v684 = vld [vmem:[#allocation9 + $0x98] sm:$0xf]
    %v685 = vld [vmem:[#allocation9 + $0x9c] sm:$0xff]
    %v686 = vld [vmem:[#allocation9 + $0xa4] sm:$0xf]
    %v687 = vld [vmem:[#allocation9 + $0xa8] sm:$0xff]
    %v688 = vld [vmem:[#allocation9 + $0xb0] sm:$0xf]
    %v689 = vld [vmem:[#allocation9 + $0xb4] sm:$0xff]
    %v690 = vld [vmem:[#allocation9 + $0xbc] sm:$0xf]
    %v691 = vld [vmem:[#allocation13 + $0x3] sm:$0x1]
    %v693 = vperm.slane %v691, 0
    %v695 = vld [vmem:[#allocation2] sm:$0x3f]
    %v728 = vunpack.c.l.b16 %v659
    %v729 = vunpack.c.h.b16 %v659
    %v730 = vunpack.c.l.b16 %v660
    %v731 = vunpack.c.l.b16 %v661
    %v732 = vunpack.c.h.b16 %v661
    %v733 = vunpack.c.l.b16 %v662
    %v734 = vunpack.c.l.b16 %v663
    %v735 = vunpack.c.h.b16 %v663
    %v736 = vunpack.c.l.b16 %v664
    %v737 = vunpack.c.l.b16 %v665
    %v738 = vunpack.c.h.b16 %v665
    %v739 = vunpack.c.l.b16 %v666
    %v740 = vunpack.c.l.b16 %v667
    %v741 = vunpack.c.h.b16 %v667
    %v742 = vunpack.c.l.b16 %v668
    %v743 = vunpack.c.l.b16 %v669
    %v744 = vunpack.c.h.b16 %v669
    %v745 = vunpack.c.l.b16 %v670
    %v746 = vunpack.c.l.b16 %v671
    %v747 = vunpack.c.h.b16 %v671
    %v748 = vunpack.c.l.b16 %v672
    %v749 = vunpack.c.l.b16 %v673
    %v750 = vunpack.c.h.b16 %v673
    %v751 = vunpack.c.l.b16 %v674
    %v752 = vunpack.c.l.b16 %v675
    %v753 = vunpack.c.h.b16 %v675
    %v754 = vunpack.c.l.b16 %v676
    %v755 = vunpack.c.l.b16 %v677
    %v756 = vunpack.c.h.b16 %v677
    %v757 = vunpack.c.l.b16 %v678
    %v758 = vunpack.c.l.b16 %v679
    %v759 = vunpack.c.h.b16 %v679
    %v760 = vunpack.c.l.b16 %v680
    %v761 = vunpack.c.l.b16 %v681
    %v762 = vunpack.c.h.b16 %v681
    %v763 = vunpack.c.l.b16 %v682
    %v764 = vunpack.c.l.b16 %v683
    %v765 = vunpack.c.h.b16 %v683
    %v766 = vunpack.c.l.b16 %v684
    %v767 = vunpack.c.l.b16 %v685
    %v768 = vunpack.c.h.b16 %v685
    %v769 = vunpack.c.l.b16 %v686
    %v770 = vunpack.c.l.b16 %v687
    %v771 = vunpack.c.h.b16 %v687
    %v772 = vunpack.c.l.b16 %v688
    %v773 = vunpack.c.l.b16 %v689
    %v774 = vunpack.c.h.b16 %v689
    %v775 = vunpack.c.l.b16 %v690
    %v776 = vpack.c.b16 %v731, %v728
    %v777 = vpack.c.b16 %v732, %v729
    %v778 = vpack.c.b16 %v733, %v730
    %v779 = vpack.c.b16 %v737, %v734
    %v780 = vpack.c.b16 %v738, %v735
    %v781 = vpack.c.b16 %v739, %v736
    %v782 = vpack.c.b16 %v743, %v740
    %v783 = vpack.c.b16 %v744, %v741
    %v784 = vpack.c.b16 %v745, %v742
    %v785 = vpack.c.b16 %v749, %v746
    %v786 = vpack.c.b16 %v750, %v747
    %v787 = vpack.c.b16 %v751, %v748
    %v788 = vpack.c.b16 %v755, %v752
    %v789 = vpack.c.b16 %v756, %v753
    %v790 = vpack.c.b16 %v757, %v754
    %v791 = vpack.c.b16 %v761, %v758
    %v792 = vpack.c.b16 %v762, %v759
    %v793 = vpack.c.b16 %v763, %v760
    %v794 = vpack.c.b16 %v767, %v764
    %v795 = vpack.c.b16 %v768, %v765
    %v796 = vpack.c.b16 %v769, %v766
    %v797 = vpack.c.b16 %v773, %v770
    %v798 = vpack.c.b16 %v774, %v771
    %v799 = vpack.c.b16 %v775, %v772
    %824 = vmatpush.bf16.msra.mxu0 %v797
    %825 = vmatpush.bf16.msra.mxu0 %v794
    %826 = vmatpush.bf16.msra.mxu0 %v791
    %827 = vmatpush.bf16.msra.mxu0 %v788
    %828 = vmatpush.bf16.msra.mxu0 %v785
    %829 = vmatpush.bf16.msra.mxu0 %v782
    %830 = vmatpush.bf16.msra.mxu0 %v779
    %831 = vmatpush.bf16.msra.mxu0 %v776
    %832 = vmatmul.bf16.gmra.mxu0 0
    %v833 = vpop.f32.mrf.mxu0
    %v834 = vadd.f32 0.0, %v833
    %v835 = vpop.f32.mrf.mxu0
    %836 = vdwg.mxu0
    %837 = vmatpush.bf16.msra.mxu0 %v798
    %838 = vmatpush.bf16.msra.mxu0 %v795
    %839 = vmatpush.bf16.msra.mxu0 %v792
    %840 = vmatpush.bf16.msra.mxu0 %v789
    %841 = vmatpush.bf16.msra.mxu0 %v786
    %842 = vmatpush.bf16.msra.mxu0 %v783
    %843 = vmatpush.bf16.msra.mxu0 %v780
    %844 = vmatpush.bf16.msra.mxu0 %v777
    %845 = vmatmul.bf16.gmra.mxu0 0
    %v846 = vpop.f32.mrf.mxu0
    %v847 = vadd.f32 0.0, %v846
    %v848 = vpop.f32.mrf.mxu0
    %849 = vdwg.mxu0
    %850 = vmatpush.bf16.msra.mxu0 %v799
    %851 = vmatpush.bf16.msra.mxu0 %v796
    %852 = vmatpush.bf16.msra.mxu0 %v793
    %853 = vmatpush.bf16.msra.mxu0 %v790
    %854 = vmatpush.bf16.msra.mxu0 %v787
    %855 = vmatpush.bf16.msra.mxu0 %v784
    %856 = vmatpush.bf16.msra.mxu0 %v781
    %857 = vmatpush.bf16.msra.mxu0 %v778
    %858 = vmatmul.bf16.gmra.mxu0 0
    %v859 = vpop.f32.mrf.mxu0
    %v860 = vadd.f32 0.0, %v859
    %v861 = vpop.f32.mrf.mxu0
    %862 = vdwg.mxu0
    %v865 = vrot.slane %v847, 6
    %v866 = vsel %vm182, %v834, %v865
    %v868 = vadd.f32 %v695, %v866
    %v869 = vxor.u32 %v868, 2147483648
    %v870 = vmul.f32 %v869, 1.442695
    %v871 = vpow.pop %v870
    %v872 = vadd.f32 %v871, 1.0
    %v873 = vrcp.pop %v872
    %v874 = vmul.f32 %v872, %v873
    %v875 = vsub.f32 1.0, %v874
    %v876 = vmul.f32 %v873, %v875
    %v877 = vadd.f32 %v873, %v876
    %vm878 = vweird.f32 %v872
    %vm879 = vweird.f32 %v873
    %vm880 = vmor %vm878, %vm879
    %v881 = vsel %vm880, %v873, %v877
    %v882 = vand.u32 2147483647, %v872
    %vm883 = vcmp.eq.f32.partialorder %v882, 8.507059e+37
    %v884 = vand.u32 %v872, 2147483648
    %v885 = vor.u32 1.1754944e-38, %v884
    %v886 = vsel %vm883, %v885, %v881
    %v887 = vmul.f32 1.0, %v886
    %v888 = vadd.f32 %v860, %v693
    %v889 = vmul.f32 %v887, %v888
    %v891 = vrot.slane %v695, 4
    %v893 = vadd.f32 %v891, %v889
    %v894 = vtanh.pop %v893
    %v896 = vrot.slane %v887, 2
    %v898 = vsub.f32 1.0, %v896
    %v899 = vmul.f32 %v898, %v894
    %v900 = vmul.f32 %v896, 0.0
    %v901 = vadd.f32 %v899, %v900
    %v903 = vrot.slane %v901, 1
    %v904 = vrot.slane %v901, 2
    %v905 = vrot.slane %v901, 3
    %vm906 = vcmask 1040384
    %v907 = vsel %vm906, %v901, %v903
    %vm908 = vcmask 1042434
    %v909 = vsel %vm908, %v904, %v905
    %v910 = vsel %vm182, %v907, %v909
    %vm911 = vcmask 1041409
    %v912 = vsel %vm911, %v901, %v903
    %vm913 = vcmask 1043459
    %v914 = vsel %vm913, %v904, %v905
    %vm915 = vcmask 1042433
    %v916 = vsel %vm915, %v912, %v914
    %v917 = vrot.slane %v916, 1
    %920 = vst [vmem:[#allocation3] sm:$0x1] %v910
    %921 = vst [vmem:[#allocation3 + $0x10] sm:$0x1] %v917
    %s922 = scalar_lea.vmem [#allocation2], 6
    %v923 = vld [vmem:[%s922] sm:$0x3f]
    %v924 = vpack.c.bf16 %v901, %v901
    %925 = vmatpush.bf16.msra.mxu0 %v797
    %926 = vmatpush.bf16.msra.mxu0 %v794
    %927 = vmatpush.bf16.msra.mxu0 %v791
    %928 = vmatpush.bf16.msra.mxu0 %v788
    %929 = vmatpush.bf16.msra.mxu0 %v785
    %930 = vmatpush.bf16.msra.mxu0 %v782
    %931 = vmatpush.bf16.msra.mxu0 %v779
    %932 = vmatpush.bf16.msra.mxu0 %v776
    %933 = vmatmul.bf16.gmra.mxu0 %v924
    %v934 = vpop.f32.mrf.mxu0
    %v935 = vadd.f32 0.0, %v934
    %v936 = vpop.f32.mrf.mxu0
    %937 = vdwg.mxu0
    %938 = vmatpush.bf16.msra.mxu0 %v798
    %939 = vmatpush.bf16.msra.mxu0 %v795
    %940 = vmatpush.bf16.msra.mxu0 %v792
    %941 = vmatpush.bf16.msra.mxu0 %v789
    %942 = vmatpush.bf16.msra.mxu0 %v786
    %943 = vmatpush.bf16.msra.mxu0 %v783
    %944 = vmatpush.bf16.msra.mxu0 %v780
    %945 = vmatpush.bf16.msra.mxu0 %v777
    %946 = vmatmul.bf16.gmra.mxu0 %v924
    %v947 = vpop.f32.mrf.mxu0
    %v948 = vadd.f32 0.0, %v947
    %v949 = vpop.f32.mrf.mxu0
    %950 = vdwg.mxu0
    %951 = vmatpush.bf16.msra.mxu0 %v799
    %952 = vmatpush.bf16.msra.mxu0 %v796
    %953 = vmatpush.bf16.msra.mxu0 %v793
    %954 = vmatpush.bf16.msra.mxu0 %v790
    %955 = vmatpush.bf16.msra.mxu0 %v787
    %956 = vmatpush.bf16.msra.mxu0 %v784
    %957 = vmatpush.bf16.msra.mxu0 %v781
    %958 = vmatpush.bf16.msra.mxu0 %v778
    %959 = vmatmul.bf16.gmra.mxu0 %v924
    %v960 = vpop.f32.mrf.mxu0
    %v961 = vadd.f32 0.0, %v960
    %v962 = vpop.f32.mrf.mxu0
    %963 = vdwg.mxu0
    %v966 = vrot.slane %v948, 6
    %v967 = vsel %vm182, %v935, %v966
    %v969 = vadd.f32 %v923, %v967
    %v970 = vxor.u32 %v969, 2147483648
    %v971 = vmul.f32 %v970, 1.442695
    %v972 = vpow.pop %v971
    %v973 = vadd.f32 %v972, 1.0
    %v974 = vrcp.pop %v973
    %v975 = vmul.f32 %v973, %v974
    %v976 = vsub.f32 1.0, %v975
    %v977 = vmul.f32 %v974, %v976
    %v978 = vadd.f32 %v974, %v977
    %vm979 = vweird.f32 %v973
    %vm980 = vweird.f32 %v974
    %vm981 = vmor %vm979, %vm980
    %v982 = vsel %vm981, %v974, %v978
    %v983 = vand.u32 2147483647, %v973
    %vm984 = vcmp.eq.f32.partialorder %v983, 8.507059e+37
    %v985 = vand.u32 %v973, 2147483648
    %v986 = vor.u32 1.1754944e-38, %v985
    %v987 = vsel %vm984, %v986, %v982
    %v988 = vmul.f32 1.0, %v987
    %v989 = vadd.f32 %v961, %v693
    %v990 = vmul.f32 %v988, %v989
    %v992 = vrot.slane %v923, 4
    %v994 = vadd.f32 %v992, %v990
    %v995 = vtanh.pop %v994
    %v997 = vrot.slane %v988, 2
    %v999 = vsub.f32 1.0, %v997
    %v1000 = vmul.f32 %v999, %v995
    %v1001 = vmul.f32 %v997, %v901
    %v1002 = vadd.f32 %v1000, %v1001
    %v1004 = vrot.slane %v1002, 1
    %v1005 = vrot.slane %v1002, 2
    %v1006 = vrot.slane %v1002, 3
    %v1007 = vsel %vm906, %v1002, %v1004
    %v1008 = vsel %vm908, %v1005, %v1006
    %v1009 = vsel %vm182, %v1007, %v1008
    %v1010 = vsel %vm911, %v1002, %v1004
    %v1011 = vsel %vm913, %v1005, %v1006
    %v1012 = vsel %vm915, %v1010, %v1011
    %v1013 = vrot.slane %v1012, 1
    %1016 = vst [vmem:[#allocation3 + $0x1] sm:$0x1] %v1009
    %1017 = vst [vmem:[#allocation3 + $0x11] sm:$0x1] %v1013
    %s1018 = scalar_lea.vmem [#allocation2], 12
    %v1019 = vld [vmem:[%s1018] sm:$0x3f]
    %v1020 = vpack.c.bf16 %v1002, %v1002
    %1021 = vmatpush.bf16.msra.mxu0 %v797
    %1022 = vmatpush.bf16.msra.mxu0 %v794
    %1023 = vmatpush.bf16.msra.mxu0 %v791
    %1024 = vmatpush.bf16.msra.mxu0 %v788
    %1025 = vmatpush.bf16.msra.mxu0 %v785
    %1026 = vmatpush.bf16.msra.mxu0 %v782
    %1027 = vmatpush.bf16.msra.mxu0 %v779
    %1028 = vmatpush.bf16.msra.mxu0 %v776
    %1029 = vmatmul.bf16.gmra.mxu0 %v1020
    %v1030 = vpop.f32.mrf.mxu0
    %v1031 = vadd.f32 0.0, %v1030
    %v1032 = vpop.f32.mrf.mxu0
    %1033 = vdwg.mxu0
    %1034 = vmatpush.bf16.msra.mxu0 %v798
    %1035 = vmatpush.bf16.msra.mxu0 %v795
    %1036 = vmatpush.bf16.msra.mxu0 %v792
    %1037 = vmatpush.bf16.msra.mxu0 %v789
    %1038 = vmatpush.bf16.msra.mxu0 %v786
    %1039 = vmatpush.bf16.msra.mxu0 %v783
    %1040 = vmatpush.bf16.msra.mxu0 %v780
    %1041 = vmatpush.bf16.msra.mxu0 %v777
    %1042 = vmatmul.bf16.gmra.mxu0 %v1020
    %v1043 = vpop.f32.mrf.mxu0
    %v1044 = vadd.f32 0.0, %v1043
    %v1045 = vpop.f32.mrf.mxu0
    %1046 = vdwg.mxu0
    %1047 = vmatpush.bf16.msra.mxu0 %v799
    %1048 = vmatpush.bf16.msra.mxu0 %v796
    %1049 = vmatpush.bf16.msra.mxu0 %v793
    %1050 = vmatpush.bf16.msra.mxu0 %v790
    %1051 = vmatpush.bf16.msra.mxu0 %v787
    %1052 = vmatpush.bf16.msra.mxu0 %v784
    %1053 = vmatpush.bf16.msra.mxu0 %v781
    %1054 = vmatpush.bf16.msra.mxu0 %v778
    %1055 = vmatmul.bf16.gmra.mxu0 %v1020
    %v1056 = vpop.f32.mrf.mxu0
    %v1057 = vadd.f32 0.0, %v1056
    %v1058 = vpop.f32.mrf.mxu0
    %1059 = vdwg.mxu0
    %v1062 = vrot.slane %v1044, 6
    %v1063 = vsel %vm182, %v1031, %v1062
    %v1065 = vadd.f32 %v1019, %v1063
    %v1066 = vxor.u32 %v1065, 2147483648
    %v1067 = vmul.f32 %v1066, 1.442695
    %v1068 = vpow.pop %v1067
    %v1069 = vadd.f32 %v1068, 1.0
    %v1070 = vrcp.pop %v1069
    %v1071 = vmul.f32 %v1069, %v1070
    %v1072 = vsub.f32 1.0, %v1071
    %v1073 = vmul.f32 %v1070, %v1072
    %v1074 = vadd.f32 %v1070, %v1073
    %vm1075 = vweird.f32 %v1069
    %vm1076 = vweird.f32 %v1070
    %vm1077 = vmor %vm1075, %vm1076
    %v1078 = vsel %vm1077, %v1070, %v1074
    %v1079 = vand.u32 2147483647, %v1069
    %vm1080 = vcmp.eq.f32.partialorder %v1079, 8.507059e+37
    %v1081 = vand.u32 %v1069, 2147483648
    %v1082 = vor.u32 1.1754944e-38, %v1081
    %v1083 = vsel %vm1080, %v1082, %v1078
    %v1084 = vmul.f32 1.0, %v1083
    %v1085 = vadd.f32 %v1057, %v693
    %v1086 = vmul.f32 %v1084, %v1085
    %v1088 = vrot.slane %v1019, 4
    %v1090 = vadd.f32 %v1088, %v1086
    %v1091 = vtanh.pop %v1090
    %v1093 = vrot.slane %v1084, 2
    %v1095 = vsub.f32 1.0, %v1093
    %v1096 = vmul.f32 %v1095, %v1091
    %v1097 = vmul.f32 %v1093, %v1002
    %v1098 = vadd.f32 %v1096, %v1097
    %v1100 = vrot.slane %v1098, 1
    %v1101 = vrot.slane %v1098, 2
    %v1102 = vrot.slane %v1098, 3
    %v1103 = vsel %vm906, %v1098, %v1100
    %v1104 = vsel %vm908, %v1101, %v1102
    %v1105 = vsel %vm182, %v1103, %v1104
    %v1106 = vsel %vm911, %v1098, %v1100
    %v1107 = vsel %vm913, %v1101, %v1102
    %v1108 = vsel %vm915, %v1106, %v1107
    %v1109 = vrot.slane %v1108, 1
    %1112 = vst [vmem:[#allocation3 + $0x2] sm:$0x1] %v1105
    %1113 = vst [vmem:[#allocation3 + $0x12] sm:$0x1] %v1109
    %s1114 = scalar_lea.vmem [#allocation2], 18
    %v1115 = vld [vmem:[%s1114] sm:$0x3f]
    %v1116 = vpack.c.bf16 %v1098, %v1098
    %1117 = vmatpush.bf16.msra.mxu0 %v797
    %1118 = vmatpush.bf16.msra.mxu0 %v794
    %1119 = vmatpush.bf16.msra.mxu0 %v791
    %1120 = vmatpush.bf16.msra.mxu0 %v788
    %1121 = vmatpush.bf16.msra.mxu0 %v785
    %1122 = vmatpush.bf16.msra.mxu0 %v782
    %1123 = vmatpush.bf16.msra.mxu0 %v779
    %1124 = vmatpush.bf16.msra.mxu0 %v776
    %1125 = vmatmul.bf16.gmra.mxu0 %v1116
    %v1126 = vpop.f32.mrf.mxu0
    %v1127 = vadd.f32 0.0, %v1126
    %v1128 = vpop.f32.mrf.mxu0
    %1129 = vdwg.mxu0
    %1130 = vmatpush.bf16.msra.mxu0 %v798
    %1131 = vmatpush.bf16.msra.mxu0 %v795
    %1132 = vmatpush.bf16.msra.mxu0 %v792
    %1133 = vmatpush.bf16.msra.mxu0 %v789
    %1134 = vmatpush.bf16.msra.mxu0 %v786
    %1135 = vmatpush.bf16.msra.mxu0 %v783
    %1136 = vmatpush.bf16.msra.mxu0 %v780
    %1137 = vmatpush.bf16.msra.mxu0 %v777
    %1138 = vmatmul.bf16.gmra.mxu0 %v1116
    %v1139 = vpop.f32.mrf.mxu0
    %v1140 = vadd.f32 0.0, %v1139
    %v1141 = vpop.f32.mrf.mxu0
    %1142 = vdwg.mxu0
    %1143 = vmatpush.bf16.msra.mxu0 %v799
    %1144 = vmatpush.bf16.msra.mxu0 %v796
    %1145 = vmatpush.bf16.msra.mxu0 %v793
    %1146 = vmatpush.bf16.msra.mxu0 %v790
    %1147 = vmatpush.bf16.msra.mxu0 %v787
    %1148 = vmatpush.bf16.msra.mxu0 %v784
    %1149 = vmatpush.bf16.msra.mxu0 %v781
    %1150 = vmatpush.bf16.msra.mxu0 %v778
    %1151 = vmatmul.bf16.gmra.mxu0 %v1116
    %v1152 = vpop.f32.mrf.mxu0
    %v1153 = vadd.f32 0.0, %v1152
    %v1154 = vpop.f32.mrf.mxu0
    %1155 = vdwg.mxu0
    %v1158 = vrot.slane %v1140, 6
    %v1159 = vsel %vm182, %v1127, %v1158
    %v1161 = vadd.f32 %v1115, %v1159
    %v1162 = vxor.u32 %v1161, 2147483648
    %v1163 = vmul.f32 %v1162, 1.442695
    %v1164 = vpow.pop %v1163
    %v1165 = vadd.f32 %v1164, 1.0
    %v1166 = vrcp.pop %v1165
    %v1167 = vmul.f32 %v1165, %v1166
    %v1168 = vsub.f32 1.0, %v1167
    %v1169 = vmul.f32 %v1166, %v1168
    %v1170 = vadd.f32 %v1166, %v1169
    %vm1171 = vweird.f32 %v1165
    %vm1172 = vweird.f32 %v1166
    %vm1173 = vmor %vm1171, %vm1172
    %v1174 = vsel %vm1173, %v1166, %v1170
    %v1175 = vand.u32 2147483647, %v1165
    %vm1176 = vcmp.eq.f32.partialorder %v1175, 8.507059e+37
    %v1177 = vand.u32 %v1165, 2147483648
    %v1178 = vor.u32 1.1754944e-38, %v1177
    %v1179 = vsel %vm1176, %v1178, %v1174
    %v1180 = vmul.f32 1.0, %v1179
    %v1181 = vadd.f32 %v1153, %v693
    %v1182 = vmul.f32 %v1180, %v1181
    %v1184 = vrot.slane %v1115, 4
    %v1186 = vadd.f32 %v1184, %v1182
    %v1187 = vtanh.pop %v1186
    %v1189 = vrot.slane %v1180, 2
    %v1191 = vsub.f32 1.0, %v1189
    %v1192 = vmul.f32 %v1191, %v1187
    %v1193 = vmul.f32 %v1189, %v1098
    %v1194 = vadd.f32 %v1192, %v1193
    %v1196 = vrot.slane %v1194, 1
    %v1197 = vrot.slane %v1194, 2
    %v1198 = vrot.slane %v1194, 3
    %v1199 = vsel %vm906, %v1194, %v1196
    %v1200 = vsel %vm908, %v1197, %v1198
    %v1201 = vsel %vm182, %v1199, %v1200
    %v1202 = vsel %vm911, %v1194, %v1196
    %v1203 = vsel %vm913, %v1197, %v1198
    %v1204 = vsel %vm915, %v1202, %v1203
    %v1205 = vrot.slane %v1204, 1
    %1208 = vst [vmem:[#allocation3 + $0x3] sm:$0x1] %v1201
    %1209 = vst [vmem:[#allocation3 + $0x13] sm:$0x1] %v1205
    %s1210 = scalar_lea.vmem [#allocation2], 24
    %v1211 = vld [vmem:[%s1210] sm:$0x3f]
    %v1212 = vpack.c.bf16 %v1194, %v1194
    %1213 = vmatpush.bf16.msra.mxu0 %v797
    %1214 = vmatpush.bf16.msra.mxu0 %v794
    %1215 = vmatpush.bf16.msra.mxu0 %v791
    %1216 = vmatpush.bf16.msra.mxu0 %v788
    %1217 = vmatpush.bf16.msra.mxu0 %v785
    %1218 = vmatpush.bf16.msra.mxu0 %v782
    %1219 = vmatpush.bf16.msra.mxu0 %v779
    %1220 = vmatpush.bf16.msra.mxu0 %v776
    %1221 = vmatmul.bf16.gmra.mxu0 %v1212
    %v1222 = vpop.f32.mrf.mxu0
    %v1223 = vadd.f32 0.0, %v1222
    %v1224 = vpop.f32.mrf.mxu0
    %1225 = vdwg.mxu0
    %1226 = vmatpush.bf16.msra.mxu0 %v798
    %1227 = vmatpush.bf16.msra.mxu0 %v795
    %1228 = vmatpush.bf16.msra.mxu0 %v792
    %1229 = vmatpush.bf16.msra.mxu0 %v789
    %1230 = vmatpush.bf16.msra.mxu0 %v786
    %1231 = vmatpush.bf16.msra.mxu0 %v783
    %1232 = vmatpush.bf16.msra.mxu0 %v780
    %1233 = vmatpush.bf16.msra.mxu0 %v777
    %1234 = vmatmul.bf16.gmra.mxu0 %v1212
    %v1235 = vpop.f32.mrf.mxu0
    %v1236 = vadd.f32 0.0, %v1235
    %v1237 = vpop.f32.mrf.mxu0
    %1238 = vdwg.mxu0
    %1239 = vmatpush.bf16.msra.mxu0 %v799
    %1240 = vmatpush.bf16.msra.mxu0 %v796
    %1241 = vmatpush.bf16.msra.mxu0 %v793
    %1242 = vmatpush.bf16.msra.mxu0 %v790
    %1243 = vmatpush.bf16.msra.mxu0 %v787
    %1244 = vmatpush.bf16.msra.mxu0 %v784
    %1245 = vmatpush.bf16.msra.mxu0 %v781
    %1246 = vmatpush.bf16.msra.mxu0 %v778
    %1247 = vmatmul.bf16.gmra.mxu0 %v1212
    %v1248 = vpop.f32.mrf.mxu0
    %v1249 = vadd.f32 0.0, %v1248
    %v1250 = vpop.f32.mrf.mxu0
    %1251 = vdwg.mxu0
    %v1254 = vrot.slane %v1236, 6
    %v1255 = vsel %vm182, %v1223, %v1254
    %v1257 = vadd.f32 %v1211, %v1255
    %v1258 = vxor.u32 %v1257, 2147483648
    %v1259 = vmul.f32 %v1258, 1.442695
    %v1260 = vpow.pop %v1259
    %v1261 = vadd.f32 %v1260, 1.0
    %v1262 = vrcp.pop %v1261
    %v1263 = vmul.f32 %v1261, %v1262
    %v1264 = vsub.f32 1.0, %v1263
    %v1265 = vmul.f32 %v1262, %v1264
    %v1266 = vadd.f32 %v1262, %v1265
    %vm1267 = vweird.f32 %v1261
    %vm1268 = vweird.f32 %v1262
    %vm1269 = vmor %vm1267, %vm1268
    %v1270 = vsel %vm1269, %v1262, %v1266
    %v1271 = vand.u32 2147483647, %v1261
    %vm1272 = vcmp.eq.f32.partialorder %v1271, 8.507059e+37
    %v1273 = vand.u32 %v1261, 2147483648
    %v1274 = vor.u32 1.1754944e-38, %v1273
    %v1275 = vsel %vm1272, %v1274, %v1270
    %v1276 = vmul.f32 1.0, %v1275
    %v1277 = vadd.f32 %v1249, %v693
    %v1278 = vmul.f32 %v1276, %v1277
    %v1280 = vrot.slane %v1211, 4
    %v1282 = vadd.f32 %v1280, %v1278
    %v1283 = vtanh.pop %v1282
    %v1285 = vrot.slane %v1276, 2
    %v1287 = vsub.f32 1.0, %v1285
    %v1288 = vmul.f32 %v1287, %v1283
    %v1289 = vmul.f32 %v1285, %v1194
    %v1290 = vadd.f32 %v1288, %v1289
    %v1292 = vrot.slane %v1290, 1
    %v1293 = vrot.slane %v1290, 2
    %v1294 = vrot.slane %v1290, 3
    %v1295 = vsel %vm906, %v1290, %v1292
    %v1296 = vsel %vm908, %v1293, %v1294
    %v1297 = vsel %vm182, %v1295, %v1296
    %v1298 = vsel %vm911, %v1290, %v1292
    %v1299 = vsel %vm913, %v1293, %v1294
    %v1300 = vsel %vm915, %v1298, %v1299
    %v1301 = vrot.slane %v1300, 1
    %1304 = vst [vmem:[#allocation3 + $0x4] sm:$0x1] %v1297
    %1305 = vst [vmem:[#allocation3 + $0x14] sm:$0x1] %v1301
    %s1306 = scalar_lea.vmem [#allocation2], 30
    %v1307 = vld [vmem:[%s1306] sm:$0x3f]
    %v1308 = vpack.c.bf16 %v1290, %v1290
    %1309 = vmatpush.bf16.msra.mxu0 %v797
    %1310 = vmatpush.bf16.msra.mxu0 %v794
    %1311 = vmatpush.bf16.msra.mxu0 %v791
    %1312 = vmatpush.bf16.msra.mxu0 %v788
    %1313 = vmatpush.bf16.msra.mxu0 %v785
    %1314 = vmatpush.bf16.msra.mxu0 %v782
    %1315 = vmatpush.bf16.msra.mxu0 %v779
    %1316 = vmatpush.bf16.msra.mxu0 %v776
    %1317 = vmatmul.bf16.gmra.mxu0 %v1308
    %v1318 = vpop.f32.mrf.mxu0
    %v1319 = vadd.f32 0.0, %v1318
    %v1320 = vpop.f32.mrf.mxu0
    %1321 = vdwg.mxu0
    %1322 = vmatpush.bf16.msra.mxu0 %v798
    %1323 = vmatpush.bf16.msra.mxu0 %v795
    %1324 = vmatpush.bf16.msra.mxu0 %v792
    %1325 = vmatpush.bf16.msra.mxu0 %v789
    %1326 = vmatpush.bf16.msra.mxu0 %v786
    %1327 = vmatpush.bf16.msra.mxu0 %v783
    %1328 = vmatpush.bf16.msra.mxu0 %v780
    %1329 = vmatpush.bf16.msra.mxu0 %v777
    %1330 = vmatmul.bf16.gmra.mxu0 %v1308
    %v1331 = vpop.f32.mrf.mxu0
    %v1332 = vadd.f32 0.0, %v1331
    %v1333 = vpop.f32.mrf.mxu0
    %1334 = vdwg.mxu0
    %1335 = vmatpush.bf16.msra.mxu0 %v799
    %1336 = vmatpush.bf16.msra.mxu0 %v796
    %1337 = vmatpush.bf16.msra.mxu0 %v793
    %1338 = vmatpush.bf16.msra.mxu0 %v790
    %1339 = vmatpush.bf16.msra.mxu0 %v787
    %1340 = vmatpush.bf16.msra.mxu0 %v784
    %1341 = vmatpush.bf16.msra.mxu0 %v781
    %1342 = vmatpush.bf16.msra.mxu0 %v778
    %1343 = vmatmul.bf16.gmra.mxu0 %v1308
    %v1344 = vpop.f32.mrf.mxu0
    %v1345 = vadd.f32 0.0, %v1344
    %v1346 = vpop.f32.mrf.mxu0
    %1347 = vdwg.mxu0
    %v1350 = vrot.slane %v1332, 6
    %v1351 = vsel %vm182, %v1319, %v1350
    %v1353 = vadd.f32 %v1307, %v1351
    %v1354 = vxor.u32 %v1353, 2147483648
    %v1355 = vmul.f32 %v1354, 1.442695
    %v1356 = vpow.pop %v1355
    %v1357 = vadd.f32 %v1356, 1.0
    %v1358 = vrcp.pop %v1357
    %v1359 = vmul.f32 %v1357, %v1358
    %v1360 = vsub.f32 1.0, %v1359
    %v1361 = vmul.f32 %v1358, %v1360
    %v1362 = vadd.f32 %v1358, %v1361
    %vm1363 = vweird.f32 %v1357
    %vm1364 = vweird.f32 %v1358
    %vm1365 = vmor %vm1363, %vm1364
    %v1366 = vsel %vm1365, %v1358, %v1362
    %v1367 = vand.u32 2147483647, %v1357
    %vm1368 = vcmp.eq.f32.partialorder %v1367, 8.507059e+37
    %v1369 = vand.u32 %v1357, 2147483648
    %v1370 = vor.u32 1.1754944e-38, %v1369
    %v1371 = vsel %vm1368, %v1370, %v1366
    %v1372 = vmul.f32 1.0, %v1371
    %v1373 = vadd.f32 %v1345, %v693
    %v1374 = vmul.f32 %v1372, %v1373
    %v1376 = vrot.slane %v1307, 4
    %v1378 = vadd.f32 %v1376, %v1374
    %v1379 = vtanh.pop %v1378
    %v1381 = vrot.slane %v1372, 2
    %v1383 = vsub.f32 1.0, %v1381
    %v1384 = vmul.f32 %v1383, %v1379
    %v1385 = vmul.f32 %v1381, %v1290
    %v1386 = vadd.f32 %v1384, %v1385
    %v1388 = vrot.slane %v1386, 1
    %v1389 = vrot.slane %v1386, 2
    %v1390 = vrot.slane %v1386, 3
    %v1391 = vsel %vm906, %v1386, %v1388
    %v1392 = vsel %vm908, %v1389, %v1390
    %v1393 = vsel %vm182, %v1391, %v1392
    %v1394 = vsel %vm911, %v1386, %v1388
    %v1395 = vsel %vm913, %v1389, %v1390
    %v1396 = vsel %vm915, %v1394, %v1395
    %v1397 = vrot.slane %v1396, 1
    %1400 = vst [vmem:[#allocation3 + $0x5] sm:$0x1] %v1393
    %1401 = vst [vmem:[#allocation3 + $0x15] sm:$0x1] %v1397
    %s1402 = scalar_lea.vmem [#allocation2], 36
    %v1403 = vld [vmem:[%s1402] sm:$0x3f]
    %v1404 = vpack.c.bf16 %v1386, %v1386
    %1405 = vmatpush.bf16.msra.mxu0 %v797
    %1406 = vmatpush.bf16.msra.mxu0 %v794
    %1407 = vmatpush.bf16.msra.mxu0 %v791
    %1408 = vmatpush.bf16.msra.mxu0 %v788
    %1409 = vmatpush.bf16.msra.mxu0 %v785
    %1410 = vmatpush.bf16.msra.mxu0 %v782
    %1411 = vmatpush.bf16.msra.mxu0 %v779
    %1412 = vmatpush.bf16.msra.mxu0 %v776
    %1413 = vmatmul.bf16.gmra.mxu0 %v1404
    %v1414 = vpop.f32.mrf.mxu0
    %v1415 = vadd.f32 0.0, %v1414
    %v1416 = vpop.f32.mrf.mxu0
    %1417 = vdwg.mxu0
    %1418 = vmatpush.bf16.msra.mxu0 %v798
    %1419 = vmatpush.bf16.msra.mxu0 %v795
    %1420 = vmatpush.bf16.msra.mxu0 %v792
    %1421 = vmatpush.bf16.msra.mxu0 %v789
    %1422 = vmatpush.bf16.msra.mxu0 %v786
    %1423 = vmatpush.bf16.msra.mxu0 %v783
    %1424 = vmatpush.bf16.msra.mxu0 %v780
    %1425 = vmatpush.bf16.msra.mxu0 %v777
    %1426 = vmatmul.bf16.gmra.mxu0 %v1404
    %v1427 = vpop.f32.mrf.mxu0
    %v1428 = vadd.f32 0.0, %v1427
    %v1429 = vpop.f32.mrf.mxu0
    %1430 = vdwg.mxu0
    %1431 = vmatpush.bf16.msra.mxu0 %v799
    %1432 = vmatpush.bf16.msra.mxu0 %v796
    %1433 = vmatpush.bf16.msra.mxu0 %v793
    %1434 = vmatpush.bf16.msra.mxu0 %v790
    %1435 = vmatpush.bf16.msra.mxu0 %v787
    %1436 = vmatpush.bf16.msra.mxu0 %v784
    %1437 = vmatpush.bf16.msra.mxu0 %v781
    %1438 = vmatpush.bf16.msra.mxu0 %v778
    %1439 = vmatmul.bf16.gmra.mxu0 %v1404
    %v1440 = vpop.f32.mrf.mxu0
    %v1441 = vadd.f32 0.0, %v1440
    %v1442 = vpop.f32.mrf.mxu0
    %1443 = vdwg.mxu0
    %v1446 = vrot.slane %v1428, 6
    %v1447 = vsel %vm182, %v1415, %v1446
    %v1449 = vadd.f32 %v1403, %v1447
    %v1450 = vxor.u32 %v1449, 2147483648
    %v1451 = vmul.f32 %v1450, 1.442695
    %v1452 = vpow.pop %v1451
    %v1453 = vadd.f32 %v1452, 1.0
    %v1454 = vrcp.pop %v1453
    %v1455 = vmul.f32 %v1453, %v1454
    %v1456 = vsub.f32 1.0, %v1455
    %v1457 = vmul.f32 %v1454, %v1456
    %v1458 = vadd.f32 %v1454, %v1457
    %vm1459 = vweird.f32 %v1453
    %vm1460 = vweird.f32 %v1454
    %vm1461 = vmor %vm1459, %vm1460
    %v1462 = vsel %vm1461, %v1454, %v1458
    %v1463 = vand.u32 2147483647, %v1453
    %vm1464 = vcmp.eq.f32.partialorder %v1463, 8.507059e+37
    %v1465 = vand.u32 %v1453, 2147483648
    %v1466 = vor.u32 1.1754944e-38, %v1465
    %v1467 = vsel %vm1464, %v1466, %v1462
    %v1468 = vmul.f32 1.0, %v1467
    %v1469 = vadd.f32 %v1441, %v693
    %v1470 = vmul.f32 %v1468, %v1469
    %v1472 = vrot.slane %v1403, 4
    %v1474 = vadd.f32 %v1472, %v1470
    %v1475 = vtanh.pop %v1474
    %v1477 = vrot.slane %v1468, 2
    %v1479 = vsub.f32 1.0, %v1477
    %v1480 = vmul.f32 %v1479, %v1475
    %v1481 = vmul.f32 %v1477, %v1386
    %v1482 = vadd.f32 %v1480, %v1481
    %v1484 = vrot.slane %v1482, 1
    %v1485 = vrot.slane %v1482, 2
    %v1486 = vrot.slane %v1482, 3
    %v1487 = vsel %vm906, %v1482, %v1484
    %v1488 = vsel %vm908, %v1485, %v1486
    %v1489 = vsel %vm182, %v1487, %v1488
    %v1490 = vsel %vm911, %v1482, %v1484
    %v1491 = vsel %vm913, %v1485, %v1486
    %v1492 = vsel %vm915, %v1490, %v1491
    %v1493 = vrot.slane %v1492, 1
    %1496 = vst [vmem:[#allocation3 + $0x6] sm:$0x1] %v1489
    %1497 = vst [vmem:[#allocation3 + $0x16] sm:$0x1] %v1493
    %s1498 = scalar_lea.vmem [#allocation2], 42
    %v1499 = vld [vmem:[%s1498] sm:$0x3f]
    %v1500 = vpack.c.bf16 %v1482, %v1482
    %1501 = vmatpush.bf16.msra.mxu0 %v797
    %1502 = vmatpush.bf16.msra.mxu0 %v794
    %1503 = vmatpush.bf16.msra.mxu0 %v791
    %1504 = vmatpush.bf16.msra.mxu0 %v788
    %1505 = vmatpush.bf16.msra.mxu0 %v785
    %1506 = vmatpush.bf16.msra.mxu0 %v782
    %1507 = vmatpush.bf16.msra.mxu0 %v779
    %1508 = vmatpush.bf16.msra.mxu0 %v776
    %1509 = vmatmul.bf16.gmra.mxu0 %v1500
    %v1510 = vpop.f32.mrf.mxu0
    %v1511 = vadd.f32 0.0, %v1510
    %v1512 = vpop.f32.mrf.mxu0
    %1513 = vdwg.mxu0
    %1514 = vmatpush.bf16.msra.mxu0 %v798
    %1515 = vmatpush.bf16.msra.mxu0 %v795
    %1516 = vmatpush.bf16.msra.mxu0 %v792
    %1517 = vmatpush.bf16.msra.mxu0 %v789
    %1518 = vmatpush.bf16.msra.mxu0 %v786
    %1519 = vmatpush.bf16.msra.mxu0 %v783
    %1520 = vmatpush.bf16.msra.mxu0 %v780
    %1521 = vmatpush.bf16.msra.mxu0 %v777
    %1522 = vmatmul.bf16.gmra.mxu0 %v1500
    %v1523 = vpop.f32.mrf.mxu0
    %v1524 = vadd.f32 0.0, %v1523
    %v1525 = vpop.f32.mrf.mxu0
    %1526 = vdwg.mxu0
    %1527 = vmatpush.bf16.msra.mxu0 %v799
    %1528 = vmatpush.bf16.msra.mxu0 %v796
    %1529 = vmatpush.bf16.msra.mxu0 %v793
    %1530 = vmatpush.bf16.msra.mxu0 %v790
    %1531 = vmatpush.bf16.msra.mxu0 %v787
    %1532 = vmatpush.bf16.msra.mxu0 %v784
    %1533 = vmatpush.bf16.msra.mxu0 %v781
    %1534 = vmatpush.bf16.msra.mxu0 %v778
    %1535 = vmatmul.bf16.gmra.mxu0 %v1500
    %v1536 = vpop.f32.mrf.mxu0
    %v1537 = vadd.f32 0.0, %v1536
    %v1538 = vpop.f32.mrf.mxu0
    %1539 = vdwg.mxu0
    %v1542 = vrot.slane %v1524, 6
    %v1543 = vsel %vm182, %v1511, %v1542
    %v1545 = vadd.f32 %v1499, %v1543
    %v1546 = vxor.u32 %v1545, 2147483648
    %v1547 = vmul.f32 %v1546, 1.442695
    %v1548 = vpow.pop %v1547
    %v1549 = vadd.f32 %v1548, 1.0
    %v1550 = vrcp.pop %v1549
    %v1551 = vmul.f32 %v1549, %v1550
    %v1552 = vsub.f32 1.0, %v1551
    %v1553 = vmul.f32 %v1550, %v1552
    %v1554 = vadd.f32 %v1550, %v1553
    %vm1555 = vweird.f32 %v1549
    %vm1556 = vweird.f32 %v1550
    %vm1557 = vmor %vm1555, %vm1556
    %v1558 = vsel %vm1557, %v1550, %v1554
    %v1559 = vand.u32 2147483647, %v1549
    %vm1560 = vcmp.eq.f32.partialorder %v1559, 8.507059e+37
    %v1561 = vand.u32 %v1549, 2147483648
    %v1562 = vor.u32 1.1754944e-38, %v1561
    %v1563 = vsel %vm1560, %v1562, %v1558
    %v1564 = vmul.f32 1.0, %v1563
    %v1565 = vadd.f32 %v1537, %v693
    %v1566 = vmul.f32 %v1564, %v1565
    %v1568 = vrot.slane %v1499, 4
    %v1570 = vadd.f32 %v1568, %v1566
    %v1571 = vtanh.pop %v1570
    %v1573 = vrot.slane %v1564, 2
    %v1575 = vsub.f32 1.0, %v1573
    %v1576 = vmul.f32 %v1575, %v1571
    %v1577 = vmul.f32 %v1573, %v1482
    %v1578 = vadd.f32 %v1576, %v1577
    %v1580 = vrot.slane %v1578, 1
    %v1581 = vrot.slane %v1578, 2
    %v1582 = vrot.slane %v1578, 3
    %v1583 = vsel %vm906, %v1578, %v1580
    %v1584 = vsel %vm908, %v1581, %v1582
    %v1585 = vsel %vm182, %v1583, %v1584
    %v1586 = vsel %vm911, %v1578, %v1580
    %v1587 = vsel %vm913, %v1581, %v1582
    %v1588 = vsel %vm915, %v1586, %v1587
    %v1589 = vrot.slane %v1588, 1
    %1592 = vst [vmem:[#allocation3 + $0x7] sm:$0x1] %v1585
    %1593 = vst [vmem:[#allocation3 + $0x17] sm:$0x1] %v1589
    %s1594 = scalar_lea.vmem [#allocation2], 48
    %v1595 = vld [vmem:[%s1594] sm:$0x3f]
    %v1596 = vpack.c.bf16 %v1578, %v1578
    %1597 = vmatpush.bf16.msra.mxu0 %v797
    %1598 = vmatpush.bf16.msra.mxu0 %v794
    %1599 = vmatpush.bf16.msra.mxu0 %v791
    %1600 = vmatpush.bf16.msra.mxu0 %v788
    %1601 = vmatpush.bf16.msra.mxu0 %v785
    %1602 = vmatpush.bf16.msra.mxu0 %v782
    %1603 = vmatpush.bf16.msra.mxu0 %v779
    %1604 = vmatpush.bf16.msra.mxu0 %v776
    %1605 = vmatmul.bf16.gmra.mxu0 %v1596
    %v1606 = vpop.f32.mrf.mxu0
    %v1607 = vadd.f32 0.0, %v1606
    %v1608 = vpop.f32.mrf.mxu0
    %1609 = vdwg.mxu0
    %1610 = vmatpush.bf16.msra.mxu0 %v798
    %1611 = vmatpush.bf16.msra.mxu0 %v795
    %1612 = vmatpush.bf16.msra.mxu0 %v792
    %1613 = vmatpush.bf16.msra.mxu0 %v789
    %1614 = vmatpush.bf16.msra.mxu0 %v786
    %1615 = vmatpush.bf16.msra.mxu0 %v783
    %1616 = vmatpush.bf16.msra.mxu0 %v780
    %1617 = vmatpush.bf16.msra.mxu0 %v777
    %1618 = vmatmul.bf16.gmra.mxu0 %v1596
    %v1619 = vpop.f32.mrf.mxu0
    %v1620 = vadd.f32 0.0, %v1619
    %v1621 = vpop.f32.mrf.mxu0
    %1622 = vdwg.mxu0
    %1623 = vmatpush.bf16.msra.mxu0 %v799
    %1624 = vmatpush.bf16.msra.mxu0 %v796
    %1625 = vmatpush.bf16.msra.mxu0 %v793
    %1626 = vmatpush.bf16.msra.mxu0 %v790
    %1627 = vmatpush.bf16.msra.mxu0 %v787
    %1628 = vmatpush.bf16.msra.mxu0 %v784
    %1629 = vmatpush.bf16.msra.mxu0 %v781
    %1630 = vmatpush.bf16.msra.mxu0 %v778
    %1631 = vmatmul.bf16.gmra.mxu0 %v1596
    %v1632 = vpop.f32.mrf.mxu0
    %v1633 = vadd.f32 0.0, %v1632
    %v1634 = vpop.f32.mrf.mxu0
    %1635 = vdwg.mxu0
    %v1638 = vrot.slane %v1620, 6
    %v1639 = vsel %vm182, %v1607, %v1638
    %v1641 = vadd.f32 %v1595, %v1639
    %v1642 = vxor.u32 %v1641, 2147483648
    %v1643 = vmul.f32 %v1642, 1.442695
    %v1644 = vpow.pop %v1643
    %v1645 = vadd.f32 %v1644, 1.0
    %v1646 = vrcp.pop %v1645
    %v1647 = vmul.f32 %v1645, %v1646
    %v1648 = vsub.f32 1.0, %v1647
    %v1649 = vmul.f32 %v1646, %v1648
    %v1650 = vadd.f32 %v1646, %v1649
    %vm1651 = vweird.f32 %v1645
    %vm1652 = vweird.f32 %v1646
    %vm1653 = vmor %vm1651, %vm1652
    %v1654 = vsel %vm1653, %v1646, %v1650
    %v1655 = vand.u32 2147483647, %v1645
    %vm1656 = vcmp.eq.f32.partialorder %v1655, 8.507059e+37
    %v1657 = vand.u32 %v1645, 2147483648
    %v1658 = vor.u32 1.1754944e-38, %v1657
    %v1659 = vsel %vm1656, %v1658, %v1654
    %v1660 = vmul.f32 1.0, %v1659
    %v1661 = vadd.f32 %v1633, %v693
    %v1662 = vmul.f32 %v1660, %v1661
    %v1664 = vrot.slane %v1595, 4
    %v1666 = vadd.f32 %v1664, %v1662
    %v1667 = vtanh.pop %v1666
    %v1669 = vrot.slane %v1660, 2
    %v1671 = vsub.f32 1.0, %v1669
    %v1672 = vmul.f32 %v1671, %v1667
    %v1673 = vmul.f32 %v1669, %v1578
    %v1674 = vadd.f32 %v1672, %v1673
    %v1676 = vrot.slane %v1674, 1
    %v1677 = vrot.slane %v1674, 2
    %v1678 = vrot.slane %v1674, 3
    %v1679 = vsel %vm906, %v1674, %v1676
    %v1680 = vsel %vm908, %v1677, %v1678
    %v1681 = vsel %vm182, %v1679, %v1680
    %v1682 = vsel %vm911, %v1674, %v1676
    %v1683 = vsel %vm913, %v1677, %v1678
    %v1684 = vsel %vm915, %v1682, %v1683
    %v1685 = vrot.slane %v1684, 1
    %1688 = vst [vmem:[#allocation3 + $0x8] sm:$0x1] %v1681
    %1689 = vst [vmem:[#allocation3 + $0x18] sm:$0x1] %v1685
    %s1690 = scalar_lea.vmem [#allocation2], 54
    %v1691 = vld [vmem:[%s1690] sm:$0x3f]
    %v1692 = vpack.c.bf16 %v1674, %v1674
    %1693 = vmatpush.bf16.msra.mxu0 %v797
    %1694 = vmatpush.bf16.msra.mxu0 %v794
    %1695 = vmatpush.bf16.msra.mxu0 %v791
    %1696 = vmatpush.bf16.msra.mxu0 %v788
    %1697 = vmatpush.bf16.msra.mxu0 %v785
    %1698 = vmatpush.bf16.msra.mxu0 %v782
    %1699 = vmatpush.bf16.msra.mxu0 %v779
    %1700 = vmatpush.bf16.msra.mxu0 %v776
    %1701 = vmatmul.bf16.gmra.mxu0 %v1692
    %v1702 = vpop.f32.mrf.mxu0
    %v1703 = vadd.f32 0.0, %v1702
    %v1704 = vpop.f32.mrf.mxu0
    %1705 = vdwg.mxu0
    %1706 = vmatpush.bf16.msra.mxu0 %v798
    %1707 = vmatpush.bf16.msra.mxu0 %v795
    %1708 = vmatpush.bf16.msra.mxu0 %v792
    %1709 = vmatpush.bf16.msra.mxu0 %v789
    %1710 = vmatpush.bf16.msra.mxu0 %v786
    %1711 = vmatpush.bf16.msra.mxu0 %v783
    %1712 = vmatpush.bf16.msra.mxu0 %v780
    %1713 = vmatpush.bf16.msra.mxu0 %v777
    %1714 = vmatmul.bf16.gmra.mxu0 %v1692
    %v1715 = vpop.f32.mrf.mxu0
    %v1716 = vadd.f32 0.0, %v1715
    %v1717 = vpop.f32.mrf.mxu0
    %1718 = vdwg.mxu0
    %1719 = vmatpush.bf16.msra.mxu0 %v799
    %1720 = vmatpush.bf16.msra.mxu0 %v796
    %1721 = vmatpush.bf16.msra.mxu0 %v793
    %1722 = vmatpush.bf16.msra.mxu0 %v790
    %1723 = vmatpush.bf16.msra.mxu0 %v787
    %1724 = vmatpush.bf16.msra.mxu0 %v784
    %1725 = vmatpush.bf16.msra.mxu0 %v781
    %1726 = vmatpush.bf16.msra.mxu0 %v778
    %1727 = vmatmul.bf16.gmra.mxu0 %v1692
    %v1728 = vpop.f32.mrf.mxu0
    %v1729 = vadd.f32 0.0, %v1728
    %v1730 = vpop.f32.mrf.mxu0
    %1731 = vdwg.mxu0
    %v1734 = vrot.slane %v1716, 6
    %v1735 = vsel %vm182, %v1703, %v1734
    %v1737 = vadd.f32 %v1691, %v1735
    %v1738 = vxor.u32 %v1737, 2147483648
    %v1739 = vmul.f32 %v1738, 1.442695
    %v1740 = vpow.pop %v1739
    %v1741 = vadd.f32 %v1740, 1.0
    %v1742 = vrcp.pop %v1741
    %v1743 = vmul.f32 %v1741, %v1742
    %v1744 = vsub.f32 1.0, %v1743
    %v1745 = vmul.f32 %v1742, %v1744
    %v1746 = vadd.f32 %v1742, %v1745
    %vm1747 = vweird.f32 %v1741
    %vm1748 = vweird.f32 %v1742
    %vm1749 = vmor %vm1747, %vm1748
    %v1750 = vsel %vm1749, %v1742, %v1746
    %v1751 = vand.u32 2147483647, %v1741
    %vm1752 = vcmp.eq.f32.partialorder %v1751, 8.507059e+37
    %v1753 = vand.u32 %v1741, 2147483648
    %v1754 = vor.u32 1.1754944e-38, %v1753
    %v1755 = vsel %vm1752, %v1754, %v1750
    %v1756 = vmul.f32 1.0, %v1755
    %v1757 = vadd.f32 %v1729, %v693
    %v1758 = vmul.f32 %v1756, %v1757
    %v1760 = vrot.slane %v1691, 4
    %v1762 = vadd.f32 %v1760, %v1758
    %v1763 = vtanh.pop %v1762
    %v1765 = vrot.slane %v1756, 2
    %v1767 = vsub.f32 1.0, %v1765
    %v1768 = vmul.f32 %v1767, %v1763
    %v1769 = vmul.f32 %v1765, %v1674
    %v1770 = vadd.f32 %v1768, %v1769
    %v1772 = vrot.slane %v1770, 1
    %v1773 = vrot.slane %v1770, 2
    %v1774 = vrot.slane %v1770, 3
    %v1775 = vsel %vm906, %v1770, %v1772
    %v1776 = vsel %vm908, %v1773, %v1774
    %v1777 = vsel %vm182, %v1775, %v1776
    %v1778 = vsel %vm911, %v1770, %v1772
    %v1779 = vsel %vm913, %v1773, %v1774
    %v1780 = vsel %vm915, %v1778, %v1779
    %v1781 = vrot.slane %v1780, 1
    %1784 = vst [vmem:[#allocation3 + $0x9] sm:$0x1] %v1777
    %1785 = vst [vmem:[#allocation3 + $0x19] sm:$0x1] %v1781
    %s1786 = scalar_lea.vmem [#allocation2], 60
    %v1787 = vld [vmem:[%s1786] sm:$0x3f]
    %v1788 = vpack.c.bf16 %v1770, %v1770
    %1789 = vmatpush.bf16.msra.mxu0 %v797
    %1790 = vmatpush.bf16.msra.mxu0 %v794
    %1791 = vmatpush.bf16.msra.mxu0 %v791
    %1792 = vmatpush.bf16.msra.mxu0 %v788
    %1793 = vmatpush.bf16.msra.mxu0 %v785
    %1794 = vmatpush.bf16.msra.mxu0 %v782
    %1795 = vmatpush.bf16.msra.mxu0 %v779
    %1796 = vmatpush.bf16.msra.mxu0 %v776
    %1797 = vmatmul.bf16.gmra.mxu0 %v1788
    %v1798 = vpop.f32.mrf.mxu0
    %v1799 = vadd.f32 0.0, %v1798
    %v1800 = vpop.f32.mrf.mxu0
    %1801 = vdwg.mxu0
    %1802 = vmatpush.bf16.msra.mxu0 %v798
    %1803 = vmatpush.bf16.msra.mxu0 %v795
    %1804 = vmatpush.bf16.msra.mxu0 %v792
    %1805 = vmatpush.bf16.msra.mxu0 %v789
    %1806 = vmatpush.bf16.msra.mxu0 %v786
    %1807 = vmatpush.bf16.msra.mxu0 %v783
    %1808 = vmatpush.bf16.msra.mxu0 %v780
    %1809 = vmatpush.bf16.msra.mxu0 %v777
    %1810 = vmatmul.bf16.gmra.mxu0 %v1788
    %v1811 = vpop.f32.mrf.mxu0
    %v1812 = vadd.f32 0.0, %v1811
    %v1813 = vpop.f32.mrf.mxu0
    %1814 = vdwg.mxu0
    %1815 = vmatpush.bf16.msra.mxu0 %v799
    %1816 = vmatpush.bf16.msra.mxu0 %v796
    %1817 = vmatpush.bf16.msra.mxu0 %v793
    %1818 = vmatpush.bf16.msra.mxu0 %v790
    %1819 = vmatpush.bf16.msra.mxu0 %v787
    %1820 = vmatpush.bf16.msra.mxu0 %v784
    %1821 = vmatpush.bf16.msra.mxu0 %v781
    %1822 = vmatpush.bf16.msra.mxu0 %v778
    %1823 = vmatmul.bf16.gmra.mxu0 %v1788
    %v1824 = vpop.f32.mrf.mxu0
    %v1825 = vadd.f32 0.0, %v1824
    %v1826 = vpop.f32.mrf.mxu0
    %1827 = vdwg.mxu0
    %v1830 = vrot.slane %v1812, 6
    %v1831 = vsel %vm182, %v1799, %v1830
    %v1833 = vadd.f32 %v1787, %v1831
    %v1834 = vxor.u32 %v1833, 2147483648
    %v1835 = vmul.f32 %v1834, 1.442695
    %v1836 = vpow.pop %v1835
    %v1837 = vadd.f32 %v1836, 1.0
    %v1838 = vrcp.pop %v1837
    %v1839 = vmul.f32 %v1837, %v1838
    %v1840 = vsub.f32 1.0, %v1839
    %v1841 = vmul.f32 %v1838, %v1840
    %v1842 = vadd.f32 %v1838, %v1841
    %vm1843 = vweird.f32 %v1837
    %vm1844 = vweird.f32 %v1838
    %vm1845 = vmor %vm1843, %vm1844
    %v1846 = vsel %vm1845, %v1838, %v1842
    %v1847 = vand.u32 2147483647, %v1837
    %vm1848 = vcmp.eq.f32.partialorder %v1847, 8.507059e+37
    %v1849 = vand.u32 %v1837, 2147483648
    %v1850 = vor.u32 1.1754944e-38, %v1849
    %v1851 = vsel %vm1848, %v1850, %v1846
    %v1852 = vmul.f32 1.0, %v1851
    %v1853 = vadd.f32 %v1825, %v693
    %v1854 = vmul.f32 %v1852, %v1853
    %v1856 = vrot.slane %v1787, 4
    %v1858 = vadd.f32 %v1856, %v1854
    %v1859 = vtanh.pop %v1858
    %v1861 = vrot.slane %v1852, 2
    %v1863 = vsub.f32 1.0, %v1861
    %v1864 = vmul.f32 %v1863, %v1859
    %v1865 = vmul.f32 %v1861, %v1770
    %v1866 = vadd.f32 %v1864, %v1865
    %v1868 = vrot.slane %v1866, 1
    %v1869 = vrot.slane %v1866, 2
    %v1870 = vrot.slane %v1866, 3
    %v1871 = vsel %vm906, %v1866, %v1868
    %v1872 = vsel %vm908, %v1869, %v1870
    %v1873 = vsel %vm182, %v1871, %v1872
    %v1874 = vsel %vm911, %v1866, %v1868
    %v1875 = vsel %vm913, %v1869, %v1870
    %v1876 = vsel %vm915, %v1874, %v1875
    %v1877 = vrot.slane %v1876, 1
    %1880 = vst [vmem:[#allocation3 + $0xa] sm:$0x1] %v1873
    %1881 = vst [vmem:[#allocation3 + $0x1a] sm:$0x1] %v1877
    %s1882 = scalar_lea.vmem [#allocation2], 66
    %v1883 = vld [vmem:[%s1882] sm:$0x3f]
    %v1884 = vpack.c.bf16 %v1866, %v1866
    %1885 = vmatpush.bf16.msra.mxu0 %v797
    %1886 = vmatpush.bf16.msra.mxu0 %v794
    %1887 = vmatpush.bf16.msra.mxu0 %v791
    %1888 = vmatpush.bf16.msra.mxu0 %v788
    %1889 = vmatpush.bf16.msra.mxu0 %v785
    %1890 = vmatpush.bf16.msra.mxu0 %v782
    %1891 = vmatpush.bf16.msra.mxu0 %v779
    %1892 = vmatpush.bf16.msra.mxu0 %v776
    %1893 = vmatmul.bf16.gmra.mxu0 %v1884
    %v1894 = vpop.f32.mrf.mxu0
    %v1895 = vadd.f32 0.0, %v1894
    %v1896 = vpop.f32.mrf.mxu0
    %1897 = vdwg.mxu0
    %1898 = vmatpush.bf16.msra.mxu0 %v798
    %1899 = vmatpush.bf16.msra.mxu0 %v795
    %1900 = vmatpush.bf16.msra.mxu0 %v792
    %1901 = vmatpush.bf16.msra.mxu0 %v789
    %1902 = vmatpush.bf16.msra.mxu0 %v786
    %1903 = vmatpush.bf16.msra.mxu0 %v783
    %1904 = vmatpush.bf16.msra.mxu0 %v780
    %1905 = vmatpush.bf16.msra.mxu0 %v777
    %1906 = vmatmul.bf16.gmra.mxu0 %v1884
    %v1907 = vpop.f32.mrf.mxu0
    %v1908 = vadd.f32 0.0, %v1907
    %v1909 = vpop.f32.mrf.mxu0
    %1910 = vdwg.mxu0
    %1911 = vmatpush.bf16.msra.mxu0 %v799
    %1912 = vmatpush.bf16.msra.mxu0 %v796
    %1913 = vmatpush.bf16.msra.mxu0 %v793
    %1914 = vmatpush.bf16.msra.mxu0 %v790
    %1915 = vmatpush.bf16.msra.mxu0 %v787
    %1916 = vmatpush.bf16.msra.mxu0 %v784
    %1917 = vmatpush.bf16.msra.mxu0 %v781
    %1918 = vmatpush.bf16.msra.mxu0 %v778
    %1919 = vmatmul.bf16.gmra.mxu0 %v1884
    %v1920 = vpop.f32.mrf.mxu0
    %v1921 = vadd.f32 0.0, %v1920
    %v1922 = vpop.f32.mrf.mxu0
    %1923 = vdwg.mxu0
    %v1926 = vrot.slane %v1908, 6
    %v1927 = vsel %vm182, %v1895, %v1926
    %v1929 = vadd.f32 %v1883, %v1927
    %v1930 = vxor.u32 %v1929, 2147483648
    %v1931 = vmul.f32 %v1930, 1.442695
    %v1932 = vpow.pop %v1931
    %v1933 = vadd.f32 %v1932, 1.0
    %v1934 = vrcp.pop %v1933
    %v1935 = vmul.f32 %v1933, %v1934
    %v1936 = vsub.f32 1.0, %v1935
    %v1937 = vmul.f32 %v1934, %v1936
    %v1938 = vadd.f32 %v1934, %v1937
    %vm1939 = vweird.f32 %v1933
    %vm1940 = vweird.f32 %v1934
    %vm1941 = vmor %vm1939, %vm1940
    %v1942 = vsel %vm1941, %v1934, %v1938
    %v1943 = vand.u32 2147483647, %v1933
    %vm1944 = vcmp.eq.f32.partialorder %v1943, 8.507059e+37
    %v1945 = vand.u32 %v1933, 2147483648
    %v1946 = vor.u32 1.1754944e-38, %v1945
    %v1947 = vsel %vm1944, %v1946, %v1942
    %v1948 = vmul.f32 1.0, %v1947
    %v1949 = vadd.f32 %v1921, %v693
    %v1950 = vmul.f32 %v1948, %v1949
    %v1952 = vrot.slane %v1883, 4
    %v1954 = vadd.f32 %v1952, %v1950
    %v1955 = vtanh.pop %v1954
    %v1957 = vrot.slane %v1948, 2
    %v1959 = vsub.f32 1.0, %v1957
    %v1960 = vmul.f32 %v1959, %v1955
    %v1961 = vmul.f32 %v1957, %v1866
    %v1962 = vadd.f32 %v1960, %v1961
    %v1964 = vrot.slane %v1962, 1
    %v1965 = vrot.slane %v1962, 2
    %v1966 = vrot.slane %v1962, 3
    %v1967 = vsel %vm906, %v1962, %v1964
    %v1968 = vsel %vm908, %v1965, %v1966
    %v1969 = vsel %vm182, %v1967, %v1968
    %v1970 = vsel %vm911, %v1962, %v1964
    %v1971 = vsel %vm913, %v1965, %v1966
    %v1972 = vsel %vm915, %v1970, %v1971
    %v1973 = vrot.slane %v1972, 1
    %1976 = vst [vmem:[#allocation3 + $0xb] sm:$0x1] %v1969
    %1977 = vst [vmem:[#allocation3 + $0x1b] sm:$0x1] %v1973
    %s1978 = scalar_lea.vmem [#allocation2], 72
    %v1979 = vld [vmem:[%s1978] sm:$0x3f]
    %v1980 = vpack.c.bf16 %v1962, %v1962
    %1981 = vmatpush.bf16.msra.mxu0 %v797
    %1982 = vmatpush.bf16.msra.mxu0 %v794
    %1983 = vmatpush.bf16.msra.mxu0 %v791
    %1984 = vmatpush.bf16.msra.mxu0 %v788
    %1985 = vmatpush.bf16.msra.mxu0 %v785
    %1986 = vmatpush.bf16.msra.mxu0 %v782
    %1987 = vmatpush.bf16.msra.mxu0 %v779
    %1988 = vmatpush.bf16.msra.mxu0 %v776
    %1989 = vmatmul.bf16.gmra.mxu0 %v1980
    %v1990 = vpop.f32.mrf.mxu0
    %v1991 = vadd.f32 0.0, %v1990
    %v1992 = vpop.f32.mrf.mxu0
    %1993 = vdwg.mxu0
    %1994 = vmatpush.bf16.msra.mxu0 %v798
    %1995 = vmatpush.bf16.msra.mxu0 %v795
    %1996 = vmatpush.bf16.msra.mxu0 %v792
    %1997 = vmatpush.bf16.msra.mxu0 %v789
    %1998 = vmatpush.bf16.msra.mxu0 %v786
    %1999 = vmatpush.bf16.msra.mxu0 %v783
    %2000 = vmatpush.bf16.msra.mxu0 %v780
    %2001 = vmatpush.bf16.msra.mxu0 %v777
    %2002 = vmatmul.bf16.gmra.mxu0 %v1980
    %v2003 = vpop.f32.mrf.mxu0
    %v2004 = vadd.f32 0.0, %v2003
    %v2005 = vpop.f32.mrf.mxu0
    %2006 = vdwg.mxu0
    %2007 = vmatpush.bf16.msra.mxu0 %v799
    %2008 = vmatpush.bf16.msra.mxu0 %v796
    %2009 = vmatpush.bf16.msra.mxu0 %v793
    %2010 = vmatpush.bf16.msra.mxu0 %v790
    %2011 = vmatpush.bf16.msra.mxu0 %v787
    %2012 = vmatpush.bf16.msra.mxu0 %v784
    %2013 = vmatpush.bf16.msra.mxu0 %v781
    %2014 = vmatpush.bf16.msra.mxu0 %v778
    %2015 = vmatmul.bf16.gmra.mxu0 %v1980
    %v2016 = vpop.f32.mrf.mxu0
    %v2017 = vadd.f32 0.0, %v2016
    %v2018 = vpop.f32.mrf.mxu0
    %2019 = vdwg.mxu0
    %v2022 = vrot.slane %v2004, 6
    %v2023 = vsel %vm182, %v1991, %v2022
    %v2025 = vadd.f32 %v1979, %v2023
    %v2026 = vxor.u32 %v2025, 2147483648
    %v2027 = vmul.f32 %v2026, 1.442695
    %v2028 = vpow.pop %v2027
    %v2029 = vadd.f32 %v2028, 1.0
    %v2030 = vrcp.pop %v2029
    %v2031 = vmul.f32 %v2029, %v2030
    %v2032 = vsub.f32 1.0, %v2031
    %v2033 = vmul.f32 %v2030, %v2032
    %v2034 = vadd.f32 %v2030, %v2033
    %vm2035 = vweird.f32 %v2029
    %vm2036 = vweird.f32 %v2030
    %vm2037 = vmor %vm2035, %vm2036
    %v2038 = vsel %vm2037, %v2030, %v2034
    %v2039 = vand.u32 2147483647, %v2029
    %vm2040 = vcmp.eq.f32.partialorder %v2039, 8.507059e+37
    %v2041 = vand.u32 %v2029, 2147483648
    %v2042 = vor.u32 1.1754944e-38, %v2041
    %v2043 = vsel %vm2040, %v2042, %v2038
    %v2044 = vmul.f32 1.0, %v2043
    %v2045 = vadd.f32 %v2017, %v693
    %v2046 = vmul.f32 %v2044, %v2045
    %v2048 = vrot.slane %v1979, 4
    %v2050 = vadd.f32 %v2048, %v2046
    %v2051 = vtanh.pop %v2050
    %v2053 = vrot.slane %v2044, 2
    %v2055 = vsub.f32 1.0, %v2053
    %v2056 = vmul.f32 %v2055, %v2051
    %v2057 = vmul.f32 %v2053, %v1962
    %v2058 = vadd.f32 %v2056, %v2057
    %v2060 = vrot.slane %v2058, 1
    %v2061 = vrot.slane %v2058, 2
    %v2062 = vrot.slane %v2058, 3
    %v2063 = vsel %vm906, %v2058, %v2060
    %v2064 = vsel %vm908, %v2061, %v2062
    %v2065 = vsel %vm182, %v2063, %v2064
    %v2066 = vsel %vm911, %v2058, %v2060
    %v2067 = vsel %vm913, %v2061, %v2062
    %v2068 = vsel %vm915, %v2066, %v2067
    %v2069 = vrot.slane %v2068, 1
    %2072 = vst [vmem:[#allocation3 + $0xc] sm:$0x1] %v2065
    %2073 = vst [vmem:[#allocation3 + $0x1c] sm:$0x1] %v2069
    %s2074 = scalar_lea.vmem [#allocation2], 78
    %v2075 = vld [vmem:[%s2074] sm:$0x3f]
    %v2076 = vpack.c.bf16 %v2058, %v2058
    %2077 = vmatpush.bf16.msra.mxu0 %v797
    %2078 = vmatpush.bf16.msra.mxu0 %v794
    %2079 = vmatpush.bf16.msra.mxu0 %v791
    %2080 = vmatpush.bf16.msra.mxu0 %v788
    %2081 = vmatpush.bf16.msra.mxu0 %v785
    %2082 = vmatpush.bf16.msra.mxu0 %v782
    %2083 = vmatpush.bf16.msra.mxu0 %v779
    %2084 = vmatpush.bf16.msra.mxu0 %v776
    %2085 = vmatmul.bf16.gmra.mxu0 %v2076
    %v2086 = vpop.f32.mrf.mxu0
    %v2087 = vadd.f32 0.0, %v2086
    %v2088 = vpop.f32.mrf.mxu0
    %2089 = vdwg.mxu0
    %2090 = vmatpush.bf16.msra.mxu0 %v798
    %2091 = vmatpush.bf16.msra.mxu0 %v795
    %2092 = vmatpush.bf16.msra.mxu0 %v792
    %2093 = vmatpush.bf16.msra.mxu0 %v789
    %2094 = vmatpush.bf16.msra.mxu0 %v786
    %2095 = vmatpush.bf16.msra.mxu0 %v783
    %2096 = vmatpush.bf16.msra.mxu0 %v780
    %2097 = vmatpush.bf16.msra.mxu0 %v777
    %2098 = vmatmul.bf16.gmra.mxu0 %v2076
    %v2099 = vpop.f32.mrf.mxu0
    %v2100 = vadd.f32 0.0, %v2099
    %v2101 = vpop.f32.mrf.mxu0
    %2102 = vdwg.mxu0
    %2103 = vmatpush.bf16.msra.mxu0 %v799
    %2104 = vmatpush.bf16.msra.mxu0 %v796
    %2105 = vmatpush.bf16.msra.mxu0 %v793
    %2106 = vmatpush.bf16.msra.mxu0 %v790
    %2107 = vmatpush.bf16.msra.mxu0 %v787
    %2108 = vmatpush.bf16.msra.mxu0 %v784
    %2109 = vmatpush.bf16.msra.mxu0 %v781
    %2110 = vmatpush.bf16.msra.mxu0 %v778
    %2111 = vmatmul.bf16.gmra.mxu0 %v2076
    %v2112 = vpop.f32.mrf.mxu0
    %v2113 = vadd.f32 0.0, %v2112
    %v2114 = vpop.f32.mrf.mxu0
    %2115 = vdwg.mxu0
    %v2118 = vrot.slane %v2100, 6
    %v2119 = vsel %vm182, %v2087, %v2118
    %v2121 = vadd.f32 %v2075, %v2119
    %v2122 = vxor.u32 %v2121, 2147483648
    %v2123 = vmul.f32 %v2122, 1.442695
    %v2124 = vpow.pop %v2123
    %v2125 = vadd.f32 %v2124, 1.0
    %v2126 = vrcp.pop %v2125
    %v2127 = vmul.f32 %v2125, %v2126
    %v2128 = vsub.f32 1.0, %v2127
    %v2129 = vmul.f32 %v2126, %v2128
    %v2130 = vadd.f32 %v2126, %v2129
    %vm2131 = vweird.f32 %v2125
    %vm2132 = vweird.f32 %v2126
    %vm2133 = vmor %vm2131, %vm2132
    %v2134 = vsel %vm2133, %v2126, %v2130
    %v2135 = vand.u32 2147483647, %v2125
    %vm2136 = vcmp.eq.f32.partialorder %v2135, 8.507059e+37
    %v2137 = vand.u32 %v2125, 2147483648
    %v2138 = vor.u32 1.1754944e-38, %v2137
    %v2139 = vsel %vm2136, %v2138, %v2134
    %v2140 = vmul.f32 1.0, %v2139
    %v2141 = vadd.f32 %v2113, %v693
    %v2142 = vmul.f32 %v2140, %v2141
    %v2144 = vrot.slane %v2075, 4
    %v2146 = vadd.f32 %v2144, %v2142
    %v2147 = vtanh.pop %v2146
    %v2149 = vrot.slane %v2140, 2
    %v2151 = vsub.f32 1.0, %v2149
    %v2152 = vmul.f32 %v2151, %v2147
    %v2153 = vmul.f32 %v2149, %v2058
    %v2154 = vadd.f32 %v2152, %v2153
    %v2156 = vrot.slane %v2154, 1
    %v2157 = vrot.slane %v2154, 2
    %v2158 = vrot.slane %v2154, 3
    %v2159 = vsel %vm906, %v2154, %v2156
    %v2160 = vsel %vm908, %v2157, %v2158
    %v2161 = vsel %vm182, %v2159, %v2160
    %v2162 = vsel %vm911, %v2154, %v2156
    %v2163 = vsel %vm913, %v2157, %v2158
    %v2164 = vsel %vm915, %v2162, %v2163
    %v2165 = vrot.slane %v2164, 1
    %2168 = vst [vmem:[#allocation3 + $0xd] sm:$0x1] %v2161
    %2169 = vst [vmem:[#allocation3 + $0x1d] sm:$0x1] %v2165
    %s2170 = scalar_lea.vmem [#allocation2], 84
    %v2171 = vld [vmem:[%s2170] sm:$0x3f]
    %v2172 = vpack.c.bf16 %v2154, %v2154
    %2173 = vmatpush.bf16.msra.mxu0 %v797
    %2174 = vmatpush.bf16.msra.mxu0 %v794
    %2175 = vmatpush.bf16.msra.mxu0 %v791
    %2176 = vmatpush.bf16.msra.mxu0 %v788
    %2177 = vmatpush.bf16.msra.mxu0 %v785
    %2178 = vmatpush.bf16.msra.mxu0 %v782
    %2179 = vmatpush.bf16.msra.mxu0 %v779
    %2180 = vmatpush.bf16.msra.mxu0 %v776
    %2181 = vmatmul.bf16.gmra.mxu0 %v2172
    %v2182 = vpop.f32.mrf.mxu0
    %v2183 = vadd.f32 0.0, %v2182
    %v2184 = vpop.f32.mrf.mxu0
    %2185 = vdwg.mxu0
    %2186 = vmatpush.bf16.msra.mxu0 %v798
    %2187 = vmatpush.bf16.msra.mxu0 %v795
    %2188 = vmatpush.bf16.msra.mxu0 %v792
    %2189 = vmatpush.bf16.msra.mxu0 %v789
    %2190 = vmatpush.bf16.msra.mxu0 %v786
    %2191 = vmatpush.bf16.msra.mxu0 %v783
    %2192 = vmatpush.bf16.msra.mxu0 %v780
    %2193 = vmatpush.bf16.msra.mxu0 %v777
    %2194 = vmatmul.bf16.gmra.mxu0 %v2172
    %v2195 = vpop.f32.mrf.mxu0
    %v2196 = vadd.f32 0.0, %v2195
    %v2197 = vpop.f32.mrf.mxu0
    %2198 = vdwg.mxu0
    %2199 = vmatpush.bf16.msra.mxu0 %v799
    %2200 = vmatpush.bf16.msra.mxu0 %v796
    %2201 = vmatpush.bf16.msra.mxu0 %v793
    %2202 = vmatpush.bf16.msra.mxu0 %v790
    %2203 = vmatpush.bf16.msra.mxu0 %v787
    %2204 = vmatpush.bf16.msra.mxu0 %v784
    %2205 = vmatpush.bf16.msra.mxu0 %v781
    %2206 = vmatpush.bf16.msra.mxu0 %v778
    %2207 = vmatmul.bf16.gmra.mxu0 %v2172
    %v2208 = vpop.f32.mrf.mxu0
    %v2209 = vadd.f32 0.0, %v2208
    %v2210 = vpop.f32.mrf.mxu0
    %2211 = vdwg.mxu0
    %v2214 = vrot.slane %v2196, 6
    %v2215 = vsel %vm182, %v2183, %v2214
    %v2217 = vadd.f32 %v2171, %v2215
    %v2218 = vxor.u32 %v2217, 2147483648
    %v2219 = vmul.f32 %v2218, 1.442695
    %v2220 = vpow.pop %v2219
    %v2221 = vadd.f32 %v2220, 1.0
    %v2222 = vrcp.pop %v2221
    %v2223 = vmul.f32 %v2221, %v2222
    %v2224 = vsub.f32 1.0, %v2223
    %v2225 = vmul.f32 %v2222, %v2224
    %v2226 = vadd.f32 %v2222, %v2225
    %vm2227 = vweird.f32 %v2221
    %vm2228 = vweird.f32 %v2222
    %vm2229 = vmor %vm2227, %vm2228
    %v2230 = vsel %vm2229, %v2222, %v2226
    %v2231 = vand.u32 2147483647, %v2221
    %vm2232 = vcmp.eq.f32.partialorder %v2231, 8.507059e+37
    %v2233 = vand.u32 %v2221, 2147483648
    %v2234 = vor.u32 1.1754944e-38, %v2233
    %v2235 = vsel %vm2232, %v2234, %v2230
    %v2236 = vmul.f32 1.0, %v2235
    %v2237 = vadd.f32 %v2209, %v693
    %v2238 = vmul.f32 %v2236, %v2237
    %v2240 = vrot.slane %v2171, 4
    %v2242 = vadd.f32 %v2240, %v2238
    %v2243 = vtanh.pop %v2242
    %v2245 = vrot.slane %v2236, 2
    %v2247 = vsub.f32 1.0, %v2245
    %v2248 = vmul.f32 %v2247, %v2243
    %v2249 = vmul.f32 %v2245, %v2154
    %v2250 = vadd.f32 %v2248, %v2249
    %v2252 = vrot.slane %v2250, 1
    %v2253 = vrot.slane %v2250, 2
    %v2254 = vrot.slane %v2250, 3
    %v2255 = vsel %vm906, %v2250, %v2252
    %v2256 = vsel %vm908, %v2253, %v2254
    %v2257 = vsel %vm182, %v2255, %v2256
    %v2258 = vsel %vm911, %v2250, %v2252
    %v2259 = vsel %vm913, %v2253, %v2254
    %v2260 = vsel %vm915, %v2258, %v2259
    %v2261 = vrot.slane %v2260, 1
    %2264 = vst [vmem:[#allocation3 + $0xe] sm:$0x1] %v2257
    %2265 = vst [vmem:[#allocation3 + $0x1e] sm:$0x1] %v2261
    %s2266 = scalar_lea.vmem [#allocation2], 90
    %v2267 = vld [vmem:[%s2266] sm:$0x3f]
    %v2268 = vpack.c.bf16 %v2250, %v2250
    %2269 = vmatpush.bf16.msra.mxu0 %v797
    %2270 = vmatpush.bf16.msra.mxu0 %v794
    %2271 = vmatpush.bf16.msra.mxu0 %v791
    %2272 = vmatpush.bf16.msra.mxu0 %v788
    %2273 = vmatpush.bf16.msra.mxu0 %v785
    %2274 = vmatpush.bf16.msra.mxu0 %v782
    %2275 = vmatpush.bf16.msra.mxu0 %v779
    %2276 = vmatpush.bf16.msra.mxu0 %v776
    %2277 = vmatmul.bf16.gmra.mxu0 %v2268
    %v2278 = vpop.f32.mrf.mxu0
    %v2279 = vadd.f32 0.0, %v2278
    %v2280 = vpop.f32.mrf.mxu0
    %2281 = vdwg.mxu0
    %2282 = vmatpush.bf16.msra.mxu0 %v798
    %2283 = vmatpush.bf16.msra.mxu0 %v795
    %2284 = vmatpush.bf16.msra.mxu0 %v792
    %2285 = vmatpush.bf16.msra.mxu0 %v789
    %2286 = vmatpush.bf16.msra.mxu0 %v786
    %2287 = vmatpush.bf16.msra.mxu0 %v783
    %2288 = vmatpush.bf16.msra.mxu0 %v780
    %2289 = vmatpush.bf16.msra.mxu0 %v777
    %2290 = vmatmul.bf16.gmra.mxu0 %v2268
    %v2291 = vpop.f32.mrf.mxu0
    %v2292 = vadd.f32 0.0, %v2291
    %v2293 = vpop.f32.mrf.mxu0
    %2294 = vdwg.mxu0
    %2295 = vmatpush.bf16.msra.mxu0 %v799
    %2296 = vmatpush.bf16.msra.mxu0 %v796
    %2297 = vmatpush.bf16.msra.mxu0 %v793
    %2298 = vmatpush.bf16.msra.mxu0 %v790
    %2299 = vmatpush.bf16.msra.mxu0 %v787
    %2300 = vmatpush.bf16.msra.mxu0 %v784
    %2301 = vmatpush.bf16.msra.mxu0 %v781
    %2302 = vmatpush.bf16.msra.mxu0 %v778
    %2303 = vmatmul.bf16.gmra.mxu0 %v2268
    %v2304 = vpop.f32.mrf.mxu0
    %v2305 = vadd.f32 0.0, %v2304
    %v2306 = vpop.f32.mrf.mxu0
    %2307 = vdwg.mxu0
    %v2310 = vrot.slane %v2292, 6
    %v2311 = vsel %vm182, %v2279, %v2310
    %v2313 = vadd.f32 %v2267, %v2311
    %v2314 = vxor.u32 %v2313, 2147483648
    %v2315 = vmul.f32 %v2314, 1.442695
    %v2316 = vpow.pop %v2315
    %v2317 = vadd.f32 %v2316, 1.0
    %v2318 = vrcp.pop %v2317
    %v2319 = vmul.f32 %v2317, %v2318
    %v2320 = vsub.f32 1.0, %v2319
    %v2321 = vmul.f32 %v2318, %v2320
    %v2322 = vadd.f32 %v2318, %v2321
    %vm2323 = vweird.f32 %v2317
    %vm2324 = vweird.f32 %v2318
    %vm2325 = vmor %vm2323, %vm2324
    %v2326 = vsel %vm2325, %v2318, %v2322
    %v2327 = vand.u32 2147483647, %v2317
    %vm2328 = vcmp.eq.f32.partialorder %v2327, 8.507059e+37
    %v2329 = vand.u32 %v2317, 2147483648
    %v2330 = vor.u32 1.1754944e-38, %v2329
    %v2331 = vsel %vm2328, %v2330, %v2326
    %v2332 = vmul.f32 1.0, %v2331
    %v2333 = vadd.f32 %v2305, %v693
    %v2334 = vmul.f32 %v2332, %v2333
    %v2336 = vrot.slane %v2267, 4
    %v2338 = vadd.f32 %v2336, %v2334
    %v2339 = vtanh.pop %v2338
    %v2341 = vrot.slane %v2332, 2
    %v2343 = vsub.f32 1.0, %v2341
    %v2344 = vmul.f32 %v2343, %v2339
    %v2345 = vmul.f32 %v2341, %v2250
    %v2346 = vadd.f32 %v2344, %v2345
    %v2348 = vrot.slane %v2346, 1
    %v2349 = vrot.slane %v2346, 2
    %v2350 = vrot.slane %v2346, 3
    %v2351 = vsel %vm906, %v2346, %v2348
    %v2352 = vsel %vm908, %v2349, %v2350
    %v2353 = vsel %vm182, %v2351, %v2352
    %v2354 = vsel %vm911, %v2346, %v2348
    %v2355 = vsel %vm913, %v2349, %v2350
    %v2356 = vsel %vm915, %v2354, %v2355
    %v2357 = vrot.slane %v2356, 1
    %2360 = vst [vmem:[#allocation3 + $0xf] sm:$0x1] %v2353
    %2361 = vst [vmem:[#allocation3 + $0x1f] sm:$0x1] %v2357
    %v2362 = vld [vmem:[#allocation3] sm:$0xff]
    %v2363 = vld [vmem:[#allocation3 + $0x8] sm:$0xff]
    %v2364 = vld [vmem:[#allocation3 + $0x10] sm:$0xff]
    %v2365 = vld [vmem:[#allocation3 + $0x18] sm:$0xff]
    %v2366 = vpack.c.bf16 %v2363, %v2362
    %v2367 = vpack.c.bf16 %v2365, %v2364
    %v2368 = vld [vmem:[#allocation10] sm:$0xf]
    %v2369 = vld [vmem:[#allocation10 + $0x4] sm:$0xf]
    %v2370 = vld [vmem:[#allocation10 + $0x8] sm:$0xf]
    %v2371 = vld [vmem:[#allocation10 + $0xc] sm:$0xf]
    %v2372 = vld [vmem:[#allocation10 + $0x10] sm:$0xf]
    %v2373 = vld [vmem:[#allocation10 + $0x14] sm:$0xf]
    %v2374 = vld [vmem:[#allocation10 + $0x18] sm:$0xf]
    %v2375 = vld [vmem:[#allocation10 + $0x1c] sm:$0xf]
    %v2376 = vld [vmem:[#allocation10 + $0x20] sm:$0xf]
    %v2377 = vld [vmem:[#allocation10 + $0x24] sm:$0xf]
    %v2378 = vld [vmem:[#allocation10 + $0x28] sm:$0xf]
    %v2379 = vld [vmem:[#allocation10 + $0x2c] sm:$0xf]
    %v2380 = vld [vmem:[#allocation10 + $0x30] sm:$0xf]
    %v2381 = vld [vmem:[#allocation10 + $0x34] sm:$0xf]
    %v2382 = vld [vmem:[#allocation10 + $0x38] sm:$0xf]
    %v2383 = vld [vmem:[#allocation10 + $0x3c] sm:$0xf]
    %v2384 = vld [vmem:[#allocation13 + $0x4] sm:$0x1]
    %v2386 = vperm.slane %v2384, 0
    %v2404 = vunpack.c.l.b16 %v2368
    %v2405 = vunpack.c.l.b16 %v2369
    %v2406 = vunpack.c.l.b16 %v2370
    %v2407 = vunpack.c.l.b16 %v2371
    %v2408 = vunpack.c.l.b16 %v2372
    %v2409 = vunpack.c.l.b16 %v2373
    %v2410 = vunpack.c.l.b16 %v2374
    %v2411 = vunpack.c.l.b16 %v2375
    %v2412 = vunpack.c.l.b16 %v2376
    %v2413 = vunpack.c.l.b16 %v2377
    %v2414 = vunpack.c.l.b16 %v2378
    %v2415 = vunpack.c.l.b16 %v2379
    %v2416 = vunpack.c.l.b16 %v2380
    %v2417 = vunpack.c.l.b16 %v2381
    %v2418 = vunpack.c.l.b16 %v2382
    %v2419 = vunpack.c.l.b16 %v2383
    %v2420 = vpack.c.b16 %v2405, %v2404
    %v2421 = vpack.c.b16 %v2407, %v2406
    %v2422 = vpack.c.b16 %v2409, %v2408
    %v2423 = vpack.c.b16 %v2411, %v2410
    %v2424 = vpack.c.b16 %v2413, %v2412
    %v2425 = vpack.c.b16 %v2415, %v2414
    %v2426 = vpack.c.b16 %v2417, %v2416
    %v2427 = vpack.c.b16 %v2419, %v2418
    %2436 = vmatpush.bf16.msra.mxu0 %v2427
    %2437 = vmatpush.bf16.msra.mxu0 %v2426
    %2438 = vmatpush.bf16.msra.mxu0 %v2425
    %2439 = vmatpush.bf16.msra.mxu0 %v2424
    %2440 = vmatpush.bf16.msra.mxu0 %v2423
    %2441 = vmatpush.bf16.msra.mxu0 %v2422
    %2442 = vmatpush.bf16.msra.mxu0 %v2421
    %2443 = vmatpush.bf16.msra.mxu0 %v2420
    %2444 = vmatmul.bf16.gmra.mxu0 %v2366
    %v2445 = vpop.f32.mrf.mxu0
    %v2446 = vadd.f32 %v2386, %v2445
    %v2447 = vpop.f32.mrf.mxu0
    %v2448 = vadd.f32 %v2386, %v2447
    %2449 = vmatmul.bf16.gmra.mxu0 %v2367
    %v2450 = vpop.f32.mrf.mxu0
    %v2451 = vadd.f32 %v2386, %v2450
    %v2452 = vpop.f32.mrf.mxu0
    %v2453 = vadd.f32 %v2386, %v2452
    %2454 = vdwg.mxu0
    %2457 = vrot.lane.b32.xlu0 %v2446, 96
    %v2458 = vpop.permute.xlu0 %2457
    %2459 = vrot.lane.b32.xlu0 %v2448, 96
    %v2460 = vpop.permute.xlu0 %2459
    %2461 = vrot.lane.b32.xlu0 %v2446, 64
    %v2462 = vpop.permute.xlu0 %2461
    %2463 = vrot.lane.b32.xlu0 %v2448, 64
    %v2464 = vpop.permute.xlu0 %2463
    %vm2465 = vcmask 261120
    %v2466 = vsel %vm2465, %v2458, 0
    %v2468 = vsel %vm2465, %v2460, 0
    %v2470 = vsel %vm2465, %v2462, 0
    %v2472 = vsel %vm2465, %v2464, 0
    %2474 = vmatpush.xpose.msra.mxu0 0.0
    %2475 = vmatpush.xpose.msra.mxu0 0.0
    %2476 = vmatpush.xpose.msra.mxu0 0.0
    %2477 = vmatpush.xpose.msra.mxu0 0.0
    %2478 = vmatpush.xpose.msra.mxu0 0.0
    %2479 = vmatpush.xpose.msra.mxu0 0.0
    %2480 = vmatpush.xpose.msra.mxu0 0.0
    %2481 = vmatpush.xpose.msra.mxu0 0.0
    %2482 = vmatpush.xpose.msra.mxu0 0.0
    %2483 = vmatpush.xpose.msra.mxu0 0.0
    %2484 = vmatpush.xpose.msra.mxu0 0.0
    %2485 = vmatpush.xpose.msra.mxu0 0.0
    %2486 = vmatpush.xpose.msra.mxu0 0.0
    %2487 = vmatpush.xpose.msra.mxu0 0.0
    %2488 = vmatpush.xpose.msra.mxu0 %v2472
    %2489 = vmatpush.xpose.msra.mxu0 %v2470
    %2490 = vmatmul.f32.gmra.mxu0 %v2466
    %v2491 = vpop.f32.mrf.mxu0
    %v2492 = vadd.f32 0.0, %v2491
    %2493 = vmatmul.f32.gmra.mxu0 %v2468
    %v2494 = vpop.f32.mrf.mxu0
    %v2495 = vadd.f32 0.0, %v2494
    %2496 = vdwg.mxu0
    %2499 = vrot.lane.b32.xlu0 %v2451, 96
    %v2500 = vpop.permute.xlu0 %2499
    %2501 = vrot.lane.b32.xlu0 %v2453, 96
    %v2502 = vpop.permute.xlu0 %2501
    %2503 = vrot.lane.b32.xlu0 %v2451, 64
    %v2504 = vpop.permute.xlu0 %2503
    %2505 = vrot.lane.b32.xlu0 %v2453, 64
    %v2506 = vpop.permute.xlu0 %2505
    %v2507 = vsel %vm2465, %v2500, 0
    %v2509 = vsel %vm2465, %v2502, 0
    %v2511 = vsel %vm2465, %v2504, 0
    %v2513 = vsel %vm2465, %v2506, 0
    %2515 = vmatpush.xpose.msra.mxu0 0.0
    %2516 = vmatpush.xpose.msra.mxu0 0.0
    %2517 = vmatpush.xpose.msra.mxu0 0.0
    %2518 = vmatpush.xpose.msra.mxu0 0.0
    %2519 = vmatpush.xpose.msra.mxu0 0.0
    %2520 = vmatpush.xpose.msra.mxu0 0.0
    %2521 = vmatpush.xpose.msra.mxu0 0.0
    %2522 = vmatpush.xpose.msra.mxu0 0.0
    %2523 = vmatpush.xpose.msra.mxu0 0.0
    %2524 = vmatpush.xpose.msra.mxu0 0.0
    %2525 = vmatpush.xpose.msra.mxu0 0.0
    %2526 = vmatpush.xpose.msra.mxu0 0.0
    %2527 = vmatpush.xpose.msra.mxu0 0.0
    %2528 = vmatpush.xpose.msra.mxu0 0.0
    %2529 = vmatpush.xpose.msra.mxu0 %v2513
    %2530 = vmatpush.xpose.msra.mxu0 %v2511
    %2531 = vmatmul.f32.gmra.mxu0 %v2507
    %v2532 = vpop.f32.mrf.mxu0
    %v2533 = vadd.f32 0.0, %v2532
    %2534 = vmatmul.f32.gmra.mxu0 %v2509
    %v2535 = vpop.f32.mrf.mxu0
    %v2536 = vadd.f32 0.0, %v2535
    %2537 = vdwg.mxu0
    %v2538 = vmul.f32 %v2492, 0.17677669
    %v2539 = vmul.f32 %v2495, 0.17677669
    %v2540 = vmul.f32 %v2533, 0.17677669
    %v2541 = vmul.f32 %v2536, 0.17677669
    %vm2542 = vcmask 130048
    %v2543 = vsel %vm2542, %v2538, -inf
    %2544 = vmax.xlane.f32.xlu0 %v2543
    %v2545 = vpop.xlane.xlu0 %2544
    %v2546 = vsel %vm2542, %v2539, -inf
    %2547 = vmax.xlane.f32.xlu0 %v2546
    %v2548 = vpop.xlane.xlu0 %2547
    %v2549 = vsel %vm2542, %v2540, -inf
    %2550 = vmax.xlane.f32.xlu0 %v2549
    %v2551 = vpop.xlane.xlu0 %2550
    %v2552 = vsel %vm2542, %v2541, -inf
    %2553 = vmax.xlane.f32.xlu0 %v2552
    %v2554 = vpop.xlane.xlu0 %2553
    %v2555 = vsub.f32 %v2538, %v2545
    %v2556 = vsub.f32 %v2539, %v2548
    %v2557 = vsub.f32 %v2540, %v2551
    %v2558 = vsub.f32 %v2541, %v2554
    %v2559 = vmul.f32 %v2555, 1.442695
    %v2560 = vpow.pop %v2559
    %v2561 = vmul.f32 %v2556, 1.442695
    %v2562 = vpow.pop %v2561
    %v2563 = vmul.f32 %v2557, 1.442695
    %v2564 = vpow.pop %v2563
    %v2565 = vmul.f32 %v2558, 1.442695
    %v2566 = vpow.pop %v2565
    %v2567 = vsel %vm2542, %v2560, 0.0
    %2568 = vadd.xlane.f32.xlu0 %v2567
    %v2569 = vpop.xlane.xlu0 %2568
    %v2570 = vsel %vm2542, %v2562, 0.0
    %2571 = vadd.xlane.f32.xlu0 %v2570
    %v2572 = vpop.xlane.xlu0 %2571
    %v2573 = vsel %vm2542, %v2564, 0.0
    %2574 = vadd.xlane.f32.xlu0 %v2573
    %v2575 = vpop.xlane.xlu0 %2574
    %v2576 = vsel %vm2542, %v2566, 0.0
    %2577 = vadd.xlane.f32.xlu0 %v2576
    %v2578 = vpop.xlane.xlu0 %2577
    %v2579 = vrcp.pop %v2569
    %v2580 = vrcp.pop %v2572
    %v2581 = vrcp.pop %v2575
    %v2582 = vrcp.pop %v2578
    %v2583 = vmul.f32 %v2560, %v2579
    %v2584 = vmul.f32 %v2562, %v2580
    %v2585 = vmul.f32 %v2564, %v2581
    %v2586 = vmul.f32 %v2566, %v2582
    %2587 = vrot.lane.b32.xlu0 %v2446, 32
    %v2588 = vpop.permute.xlu0 %2587
    %2589 = vrot.lane.b32.xlu0 %v2448, 32
    %v2590 = vpop.permute.xlu0 %2589
    %v2594 = vsel %vm2542, %v2583, 0
    %v2597 = vsel %vm2542, %v2584, 0
    %2599 = vmatpush.msra.mxu0 0.0
    %2600 = vmatpush.msra.mxu0 0.0
    %2601 = vmatpush.msra.mxu0 0.0
    %2602 = vmatpush.msra.mxu0 0.0
    %2603 = vmatpush.msra.mxu0 0.0
    %2604 = vmatpush.msra.mxu0 0.0
    %2605 = vmatpush.msra.mxu0 0.0
    %2606 = vmatpush.msra.mxu0 0.0
    %2607 = vmatpush.msra.mxu0 0.0
    %2608 = vmatpush.msra.mxu0 0.0
    %2609 = vmatpush.msra.mxu0 0.0
    %2610 = vmatpush.msra.mxu0 0.0
    %2611 = vmatpush.msra.mxu0 0.0
    %2612 = vmatpush.msra.mxu0 0.0
    %2613 = vmatpush.msra.mxu0 %v2590
    %2614 = vmatpush.msra.mxu0 %v2588
    %2615 = vmatmul.f32.gmra.mxu0 %v2594
    %v2616 = vpop.f32.mrf.mxu0
    %v2617 = vadd.f32 0.0, %v2616
    %2618 = vmatmul.f32.gmra.mxu0 %v2597
    %v2619 = vpop.f32.mrf.mxu0
    %v2620 = vadd.f32 0.0, %v2619
    %2621 = vdwg.mxu0
    %2622 = vrot.lane.b32.xlu0 %v2451, 32
    %v2623 = vpop.permute.xlu0 %2622
    %2624 = vrot.lane.b32.xlu0 %v2453, 32
    %v2625 = vpop.permute.xlu0 %2624
    %v2629 = vsel %vm2542, %v2585, 0
    %v2632 = vsel %vm2542, %v2586, 0
    %2634 = vmatpush.msra.mxu0 0.0
    %2635 = vmatpush.msra.mxu0 0.0
    %2636 = vmatpush.msra.mxu0 0.0
    %2637 = vmatpush.msra.mxu0 0.0
    %2638 = vmatpush.msra.mxu0 0.0
    %2639 = vmatpush.msra.mxu0 0.0
    %2640 = vmatpush.msra.mxu0 0.0
    %2641 = vmatpush.msra.mxu0 0.0
    %2642 = vmatpush.msra.mxu0 0.0
    %2643 = vmatpush.msra.mxu0 0.0
    %2644 = vmatpush.msra.mxu0 0.0
    %2645 = vmatpush.msra.mxu0 0.0
    %2646 = vmatpush.msra.mxu0 0.0
    %2647 = vmatpush.msra.mxu0 0.0
    %2648 = vmatpush.msra.mxu0 %v2625
    %2649 = vmatpush.msra.mxu0 %v2623
    %2650 = vmatmul.f32.gmra.mxu0 %v2629
    %v2651 = vpop.f32.mrf.mxu0
    %v2652 = vadd.f32 0.0, %v2651
    %2653 = vmatmul.f32.gmra.mxu0 %v2632
    %v2654 = vpop.f32.mrf.mxu0
    %v2655 = vadd.f32 0.0, %v2654
    %2656 = vdwg.mxu0
    %v2657 = vld [vmem:[#allocation12] sm:$0xf]
    %v2658 = vld [vmem:[#allocation12 + $0x8] sm:$0xf]
    %v2659 = vld [vmem:[#allocation12 + $0x10] sm:$0xf]
    %v2660 = vld [vmem:[#allocation12 + $0x18] sm:$0xf]
    %v2661 = vpack.c.bf16 %v2620, %v2617
    %v2662 = vpack.c.bf16 %v2655, %v2652
    %v2663 = vld [vmem:[#allocation13 + $0x5] sm:$0x1]
    %v2665 = vperm.slane %v2663, 0
    %v2671 = vunpack.c.l.b16 %v2657
    %v2672 = vunpack.c.l.b16 %v2658
    %v2673 = vunpack.c.l.b16 %v2659
    %v2674 = vunpack.c.l.b16 %v2660
    %v2675 = vpack.c.b16 %v2672, %v2671
    %v2676 = vpack.c.b16 %v2674, %v2673
    %v2680 = vsel %vm2465, %v2661, 0
    %v2683 = vsel %vm2465, %v2662, 0
    %2685 = vmatpush.bf16.msra.mxu0 0
    %2686 = vmatpush.bf16.msra.mxu0 0
    %2687 = vmatpush.bf16.msra.mxu0 0
    %2688 = vmatpush.bf16.msra.mxu0 0
    %2689 = vmatpush.bf16.msra.mxu0 0
    %2690 = vmatpush.bf16.msra.mxu0 0
    %2691 = vmatpush.bf16.msra.mxu0 %v2676
    %2692 = vmatpush.bf16.msra.mxu0 %v2675
    %2693 = vmatmul.bf16.gmra.mxu0 %v2680
    %v2694 = vpop.f32.mrf.mxu0
    %v2695 = vadd.f32 %v2665, %v2694
    %v2696 = vpop.f32.mrf.mxu0
    %v2697 = vadd.f32 %v2665, %v2696
    %2698 = vmatmul.bf16.gmra.mxu0 %v2683
    %v2699 = vpop.f32.mrf.mxu0
    %v2700 = vadd.f32 %v2665, %v2699
    %v2701 = vpop.f32.mrf.mxu0
    %v2702 = vadd.f32 %v2665, %v2701
    %2703 = vdwg.mxu0
    %v2704 = vadd.f32 %v2446, %v2695
    %v2705 = vadd.f32 %v2448, %v2697
    %v2706 = vadd.f32 %v2451, %v2700
    %v2707 = vadd.f32 %v2453, %v2702
    %v2708 = vld [vmem:[#allocation13 + $0x7] sm:$0x1]
    %v2710 = vperm.slane %v2708, 0
    %v2712 = vmul.f32 %v2704, %v2710
    %v2713 = vmul.f32 %v2705, %v2710
    %v2714 = vmul.f32 %v2706, %v2710
    %v2715 = vmul.f32 %v2707, %v2710
    %v2716 = vsel %vm2465, %v2712, 0.0
    %2717 = vadd.xlane.f32.xlu0 %v2716
    %v2718 = vpop.xlane.xlu0 %2717
    %v2719 = vsel %vm2465, %v2713, 0.0
    %2720 = vadd.xlane.f32.xlu0 %v2719
    %v2721 = vpop.xlane.xlu0 %2720
    %v2722 = vsel %vm2465, %v2714, 0.0
    %2723 = vadd.xlane.f32.xlu0 %v2722
    %v2724 = vpop.xlane.xlu0 %2723
    %v2725 = vsel %vm2465, %v2715, 0.0
    %2726 = vadd.xlane.f32.xlu0 %v2725
    %v2727 = vpop.xlane.xlu0 %2726
    %v2728 = vmax.f32 %v2718, %v2721
    %v2729 = vrot.slane %v2728, 4
    %v2730 = vmax.f32 %v2728, %v2729
    %v2731 = vrot.slane %v2730, 2
    %v2732 = vmax.f32 %v2730, %v2731
    %v2733 = vrot.slane %v2732, 1
    %v2734 = vmax.f32 %v2732, %v2733
    %v2735 = vmax.f32 %v2724, %v2727
    %v2736 = vrot.slane %v2735, 4
    %v2737 = vmax.f32 %v2735, %v2736
    %v2738 = vrot.slane %v2737, 2
    %v2739 = vmax.f32 %v2737, %v2738
    %v2740 = vrot.slane %v2739, 1
    %v2741 = vmax.f32 %v2739, %v2740
    %v2742 = vsub.f32 %v2718, %v2734
    %v2743 = vsub.f32 %v2721, %v2734
    %v2744 = vsub.f32 %v2724, %v2741
    %v2745 = vsub.f32 %v2727, %v2741
    %v2746 = vmul.f32 %v2742, 1.442695
    %v2747 = vpow.pop %v2746
    %v2748 = vmul.f32 %v2743, 1.442695
    %v2749 = vpow.pop %v2748
    %v2750 = vmul.f32 %v2744, 1.442695
    %v2751 = vpow.pop %v2750
    %v2752 = vmul.f32 %v2745, 1.442695
    %v2753 = vpow.pop %v2752
    %v2754 = vadd.f32 %v2747, %v2749
    %v2755 = vrot.slane %v2754, 4
    %v2756 = vadd.f32 %v2754, %v2755
    %v2757 = vrot.slane %v2756, 2
    %v2758 = vadd.f32 %v2756, %v2757
    %v2759 = vrot.slane %v2758, 1
    %v2760 = vadd.f32 %v2758, %v2759
    %v2761 = vadd.f32 %v2751, %v2753
    %v2762 = vrot.slane %v2761, 4
    %v2763 = vadd.f32 %v2761, %v2762
    %v2764 = vrot.slane %v2763, 2
    %v2765 = vadd.f32 %v2763, %v2764
    %v2766 = vrot.slane %v2765, 1
    %v2767 = vadd.f32 %v2765, %v2766
    %v2768 = vrcp.pop %v2760
    %v2769 = vrcp.pop %v2767
    %v2770 = vmul.f32 %v2747, %v2768
    %v2771 = vmul.f32 %v2749, %v2768
    %v2772 = vmul.f32 %v2751, %v2769
    %v2773 = vmul.f32 %v2753, %v2769
    %v2774 = vmul.f32 %v2704, %v2770
    %v2775 = vmul.f32 %v2705, %v2771
    %v2776 = vmul.f32 %v2706, %v2772
    %v2777 = vmul.f32 %v2707, %v2773
    %v2778 = vsel %vm2465, %v2774, 0.0
    %v2779 = vsel %vm2465, %v2775, 0.0
    %v2780 = vadd.f32 %v2778, %v2779
    %v2781 = vrot.slane %v2780, 4
    %v2782 = vadd.f32 %v2780, %v2781
    %v2783 = vrot.slane %v2782, 2
    %v2784 = vadd.f32 %v2782, %v2783
    %v2785 = vrot.slane %v2784, 1
    %v2786 = vadd.f32 %v2784, %v2785
    %v2787 = vsel %vm2465, %v2776, 0.0
    %v2788 = vsel %vm2465, %v2777, 0.0
    %v2789 = vadd.f32 %v2787, %v2788
    %v2790 = vrot.slane %v2789, 4
    %v2791 = vadd.f32 %v2789, %v2790
    %v2792 = vrot.slane %v2791, 2
    %v2793 = vadd.f32 %v2791, %v2792
    %v2794 = vrot.slane %v2793, 1
    %v2795 = vadd.f32 %v2793, %v2794
    %v2796 = vld [vmem:[#allocation12 + $0x4] sm:$0xf]
    %v2797 = vld [vmem:[#allocation12 + $0xc] sm:$0xf]
    %v2798 = vld [vmem:[#allocation12 + $0x14] sm:$0xf]
    %v2799 = vld [vmem:[#allocation12 + $0x1c] sm:$0xf]
    %v2800 = vpack.c.bf16 %v2786, %v2786
    %v2801 = vpack.c.bf16 %v2795, %v2795
    %v2802 = vld [vmem:[#allocation13 + $0x6] sm:$0x1]
    %v2804 = vperm.slane %v2802, 0
    %v2808 = vunpack.c.l.b16 %v2800
    %v2809 = vunpack.c.l.b16 %v2801
    %v2810 = vsel %vm911, %v2809, %v2808
    %v2811 = vpack.c.b16 %v2810, %v2810
    %v2816 = vunpack.c.l.b16 %v2796
    %v2817 = vunpack.c.l.b16 %v2797
    %v2818 = vunpack.c.l.b16 %v2798
    %v2819 = vunpack.c.l.b16 %v2799
    %v2820 = vpack.c.b16 %v2817, %v2816
    %v2821 = vpack.c.b16 %v2819, %v2818
    %v2825 = vsel %vm2465, %v2811, 0
    %2827 = vmatpush.bf16.msra.mxu0 0
    %2828 = vmatpush.bf16.msra.mxu0 0
    %2829 = vmatpush.bf16.msra.mxu0 0
    %2830 = vmatpush.bf16.msra.mxu0 0
    %2831 = vmatpush.bf16.msra.mxu0 0
    %2832 = vmatpush.bf16.msra.mxu0 0
    %2833 = vmatpush.bf16.msra.mxu0 %v2821
    %2834 = vmatpush.bf16.msra.mxu0 %v2820
    %2835 = vmatmul.bf16.gmra.mxu0 %v2825
    %v2836 = vpop.f32.mrf.mxu0
    %v2837 = vadd.f32 %v2804, %v2836
    %v2838 = vpop.f32.mrf.mxu0
    %2839 = vdwg.mxu0
    %vm2840 = vcmask 74752
    %2841 = vst.msk [vmem:[#allocation15] sm:$0x3] %vm2840, %v2837
    // Predicated region
    $region50: #{tpu_custom_call.1} parent=1 // pred_check
      _
    $region51: #{tpu_custom_call.1} parent=1 // pred_check_branch
      %2843 = sbr.rel (0) target = $region53
    $region52: #{tpu_custom_call.1} parent=1 // pred_region
      %2845 = vsyncadd [#allocation6], 0
      %s2847 = sshll.u32 [#allocation15], 4
      %s2848 = int_to_ptr.vmem [resolvable:$true] %s2847
      %s2849 = sshll.u32 %s6, 4
      %s2850 = int_to_ptr.hbm [resolvable:$true] %s2849
      %2852 = dma.vmem_to_hbm [thread:$0]  %s2848, 32, %s2850, [#allocation6]
    $region53: #{tpu_custom_call.1} parent=1 // pred_fallthru
      _
    // Predicated region
    $region54: #{tpu_custom_call.1} parent=1 // pred_check
      _
    $region55: #{tpu_custom_call.1} parent=1 // pred_check_branch
      %2854 = sbr.rel (0) target = $region57
    $region56: #{tpu_custom_call.1} parent=1 // pred_region
      %2856 = dma.done [#allocation6], 32
    $region57: #{tpu_custom_call.1} parent=1 // pred_fallthru
      _
    %2857 = vsyncpa [#allocation5], 1
    %2858 = vsyncpa [#allocation8], 1
    %2859 = vsyncpa [#allocation11], 1
    %2860 = vsyncpa [#allocation14], 1
    %2861 = vsyncpa [#allocation6], 1

</llo_original>
